<compile_context>
chip_gen: v7x
topology: tpu7x:2x2x1
jax: 0.10.0
libtpu: 0.0.40
codegen_flags: <defaults>
</compile_context>

<pallas_src>
import functools

import jax
import jax.numpy as jnp
from jax.experimental import pallas as pl
from jax.experimental.pallas import tpu as pltpu


# ------------------------- conv (+ fused input BN/ReLU) kernel -------------------------
def _conv_stage_kernel(x_ref, xtop_ref, xbot_ref, w_ref, b_ref, inact_ref,
                       z_ref, sum_ref, sq_ref, pad_ref, patch_ref, *,
                       TH, W, Cin, Cout, apply_input_act):
    """One row-tile of: [optional BN+ReLU of the input] -> 3x3 conv + bias.

    Also accumulates per-output-channel sum / sum-of-squares (training-mode
    BatchNorm batch statistics) across the row-tile ("arbitrary") grid axis.
    """
    t = pl.program_id(1)
    n_tiles = pl.num_programs(1)

    main = x_ref[0]            # (TH*W, Cin)  rows of this tile
    top = xtop_ref[0]          # (W,    Cin)  row above the tile (clamped index)
    bot = xbot_ref[0]          # (W,    Cin)  row below the tile (clamped index)

    if apply_input_act:
        # Previous stage's BatchNorm + ReLU fused into this conv's input path:
        #   a = max(scale * z + shift, 0), applied to the halo rows as well.
        scale = inact_ref[0:1, :]
        shift = inact_ref[1:2, :]
        main = jnp.maximum(main * scale + shift, 0.0)
        top = jnp.maximum(top * scale + shift, 0.0)
        bot = jnp.maximum(bot * scale + shift, 0.0)

    # Conv zero-padding at the top/bottom image border (post-activation zeros).
    top = jnp.where(t == 0, jnp.zeros_like(top), top)
    bot = jnp.where(t == n_tiles - 1, jnp.zeros_like(bot), bot)

    # Assemble the zero-padded (TH+2, W+2, Cin) input tile once in VMEM.
    pad_ref[...] = jnp.zeros_like(pad_ref)
    pad_ref[1:TH + 1, 1:W + 1, :] = main.reshape(TH, W, Cin).astype(pad_ref.dtype)
    pad_ref[0:1, 1:W + 1, :] = top.reshape(1, W, Cin).astype(pad_ref.dtype)
    pad_ref[TH + 1:TH + 2, 1:W + 1, :] = bot.reshape(1, W, Cin).astype(pad_ref.dtype)

    # im2col gather (once, into a VMEM scratch): the nine taps become the columns
    # of a (TH*W, 9*Cin) patch matrix -> a single MXU matmul with K = 9*Cin.
    for dy in range(3):
        for dx in range(3):
            tap = dy * 3 + dx
            col = pad_ref[dy:dy + TH, dx:dx + W, :].reshape(TH * W, Cin)
            patch_ref[:, tap * Cin:(tap + 1) * Cin] = col

    z = jnp.dot(patch_ref[...], w_ref[...], preferred_element_type=jnp.float32)
    z = z + b_ref[...]   # conv bias (could be folded into BN shift; kept for clarity)

    # One-pass BatchNorm statistics, accumulated across the row-tile grid axis.
    @pl.when(t == 0)
    def _init():
        sum_ref[...] = jnp.zeros_like(sum_ref)
        sq_ref[...] = jnp.zeros_like(sq_ref)

    sum_ref[0] += jnp.sum(z, axis=0, keepdims=True)
    sq_ref[0] += jnp.sum(z * z, axis=0, keepdims=True)

    z_ref[0] = z.astype(z_ref.dtype)


def _conv_stage(x_flat, w, b, inact, *, H, W, Cin, Cout, TH, apply_input_act):
    """One conv stage on a (N, H*W, Cin) activation.

    Returns (conv_out (N, H*W, Cout) f32, chan_sum (N,1,Cout), chan_sumsq (N,1,Cout)).
    """
    N = x_flat.shape[0]
    T = H // TH
    kern = functools.partial(_conv_stage_kernel, TH=TH, W=W, Cin=Cin, Cout=Cout,
                             apply_input_act=apply_input_act)
    return pl.pallas_call(
        kern,
        out_shape=(
            jax.ShapeDtypeStruct((N, H * W, Cout), jnp.float32),
            jax.ShapeDtypeStruct((N, 1, Cout), jnp.float32),
            jax.ShapeDtypeStruct((N, 1, Cout), jnp.float32),
        ),
        grid=(N, T),
        in_specs=[
            # this tile's rows
            pl.BlockSpec((1, TH * W, Cin), lambda n, t: (n, t, 0)),
            # halo rows above/below (index clamped at the border; kernel zeroes
            # them there) -- replaces the host-side jnp.pad HBM pass.
            pl.BlockSpec((1, W, Cin), lambda n, t: (n, jnp.maximum(t * TH - 1, 0), 0)),
            pl.BlockSpec((1, W, Cin), lambda n, t: (n, jnp.minimum(t * TH + TH, H - 1), 0)),
            pl.BlockSpec((9 * Cin, Cout), lambda n, t: (0, 0)),   # weights (9*Cin, Cout)
            pl.BlockSpec((1, Cout), lambda n, t: (0, 0)),         # conv bias
            pl.BlockSpec((2, Cin), lambda n, t: (0, 0)),          # fused input scale/shift
        ],
        out_specs=(
            pl.BlockSpec((1, TH * W, Cout), lambda n, t: (n, t, 0)),
            pl.BlockSpec((1, 1, Cout), lambda n, t: (n, 0, 0)),   # resident accumulators
            pl.BlockSpec((1, 1, Cout), lambda n, t: (n, 0, 0)),
        ),
        scratch_shapes=[
            pltpu.VMEM((TH + 2, W + 2, Cin), x_flat.dtype),   # zero-padded input tile
            pltpu.VMEM((TH * W, 9 * Cin), x_flat.dtype),      # im2col patch matrix
        ],
        compiler_params=pltpu.CompilerParams(
            # batch axis across TensorCores (v7x megacore); row-tile axis carries
            # the BN-stat accumulation so it must stay "arbitrary".
            dimension_semantics=("parallel", "arbitrary"),
            vmem_limit_bytes=32 * 1024 * 1024,
        ),
    )(x_flat, x_flat, x_flat, w,
      b.reshape(1, Cout).astype(jnp.float32), inact.astype(jnp.float32))


# ----------------------- final BN + ReLU (lane-dense elementwise) -----------------------
def _scale_shift_relu_kernel(z_ref, ss_ref, o_ref):
    y = z_ref[...] * ss_ref[0:1, :] + ss_ref[1:2, :]
    o_ref[...] = jnp.maximum(y, 0.0).astype(o_ref.dtype)


def _scale_shift_relu(z2d, ss, out_dtype):
    M, L = z2d.shape
    TR = _pick_row_tile(M)
    return pl.pallas_call(
        _scale_shift_relu_kernel,
        out_shape=jax.ShapeDtypeStruct((M, L), out_dtype),
        grid=(M // TR,),
        in_specs=[
            pl.BlockSpec((TR, L), lambda i: (i, 0)),
            pl.BlockSpec((2, L), lambda i: (0, 0)),
        ],
        out_specs=pl.BlockSpec((TR, L), lambda i: (i, 0)),
        compiler_params=pltpu.CompilerParams(
            dimension_semantics=("parallel",),
            vmem_limit_bytes=32 * 1024 * 1024,
        ),
    )(z2d, ss)


# ----------------------------------- helpers / wrapper ----------------------------------
def _pick_tile_rows(h, requested=None):
    if requested is not None:
        assert h % requested == 0, "tile_rows must divide H"
        return requested
    for th in (64, 32, 16, 8):   # halve for v7x-sized VMEM at very wide images
        if h % th == 0:
            return th
    return h


def _pick_row_tile(m):
    for tr in (512, 256, 128, 64, 32, 16, 8):
        if m % tr == 0:
            return tr
    return m


def _bn_scale_shift(chan_sum, chan_sq, count, gamma, beta, eps):
    # Training-mode BatchNorm over (N, H, W): one-pass E[x^2]-E[x]^2 (biased var),
    # folded with gamma/beta into a single per-channel scale/shift FMA.
    s = jnp.sum(chan_sum[:, 0, :], axis=0)
    ss = jnp.sum(chan_sq[:, 0, :], axis=0)
    mean = s / count
    var = ss / count - mean * mean
    scale = gamma * jax.lax.rsqrt(var + eps)
    shift = beta - scale * mean
    return scale, shift


def conv_block(x_nchw, params, eps=1e-5, tile_rows=None):
    """Forward of ConvBlock (Conv3x3 pad=1 -> BN(train) -> ReLU, twice); NCHW in/out."""
    N, Cin, H, W = x_nchw.shape
    Cout1 = params["w1"].shape[-1]
    Cout2 = params["w2"].shape[-1]
    assert W % 8 == 0, "row/halo blocking assumes W is a multiple of 8"
    TH = _pick_tile_rows(H, tile_rows)
    count = float(N * H * W)

    # NCHW -> flattened NHWC (N, H*W, C) working layout for the kernels.
    x = jnp.transpose(x_nchw, (0, 2, 3, 1)).reshape(N, H * W, Cin)

    # HWIO (3,3,Ci,Co) -> (9*Ci, Co), matching the kernel's (dy, dx, ci) tap order.
    w1 = params["w1"].reshape(9 * Cin, Cout1).astype(x.dtype)
    w2 = params["w2"].reshape(9 * Cout1, Cout2).astype(jnp.float32)

    # Stage 1: conv1 + bias, plus per-channel batch statistics.
    no_act = jnp.stack([jnp.ones((Cin,), jnp.float32), jnp.zeros((Cin,), jnp.float32)])
    z1, s1, q1 = _conv_stage(x, w1, params["b1"], no_act, H=H, W=W,
                             Cin=Cin, Cout=Cout1, TH=TH, apply_input_act=False)
    sc1, sh1 = _bn_scale_shift(s1, q1, count, params["g1"], params["be1"], eps)

    # Stage 2: BN1 + ReLU fused into conv2's input path (one HBM round trip for
    # the intermediate), plus stage-2 batch statistics.
    z2, s2, q2 = _conv_stage(z1, w2, params["b2"], jnp.stack([sc1, sh1]),
                             H=H, W=W, Cin=Cout1, Cout=Cout2, TH=TH,
                             apply_input_act=True)
    sc2, sh2 = _bn_scale_shift(s2, q2, count, params["g2"], params["be2"], eps)

    # BN2 + ReLU as a lane-dense elementwise pass over (N*H, W*Cout2).
    ss = jnp.stack([jnp.tile(sc2, W), jnp.tile(sh2, W)])
    y = _scale_shift_relu(z2.reshape(N * H, W * Cout2), ss, x_nchw.dtype)
    return jnp.transpose(y.reshape(N, H, W, Cout2), (0, 3, 1, 2))


# ----------------------------------- pure-JAX reference ---------------------------------
def _ref_stage(x, w, b, g, be, eps):
    y = jax.lax.conv_general_dilated(
        x, w, window_strides=(1, 1), padding="SAME",
        dimension_numbers=("NHWC", "HWIO", "NHWC")) + b
    mean = jnp.mean(y, axis=(0, 1, 2), keepdims=True)
    var = jnp.mean((y - mean) ** 2, axis=(0, 1, 2), keepdims=True)
    y = (y - mean) * jax.lax.rsqrt(var + eps) * g + be
    return jnp.maximum(y, 0.0)


def conv_block_ref(x_nchw, p, eps=1e-5):
    x = jnp.transpose(x_nchw, (0, 2, 3, 1))
    y = _ref_stage(x, p["w1"], p["b1"], p["g1"], p["be1"], eps)
    y = _ref_stage(y, p["w2"], p["b2"], p["g2"], p["be2"], eps)
    return jnp.transpose(y, (0, 3, 1, 2))


if __name__ == "__main__":
    key = jax.random.PRNGKey(0)
    N, Cin, Cout, H, W = 2, 4, 8, 16, 16

    ks = jax.random.split(key, 5)
    x = jax.random.normal(ks[0], (N, Cin, H, W), jnp.float32)

    # Deterministic parameter init (uniform, PyTorch-like fan-in bounds), HWIO weights.
    bound1 = 1.0 / (Cin * 9) ** 0.5
    bound2 = 1.0 / (Cout * 9) ** 0.5
    params = {
        "w1": jax.random.uniform(ks[1], (3, 3, Cin, Cout), jnp.float32, -bound1, bound1),
        "b1": jax.random.uniform(ks[2], (Cout,), jnp.float32, -bound1, bound1),
        "g1": jnp.ones((Cout,), jnp.float32),
        "be1": jnp.zeros((Cout,), jnp.float32),
        "w2": jax.random.uniform(ks[3], (3, 3, Cout, Cout), jnp.float32, -bound2, bound2),
        "b2": jax.random.uniform(ks[4], (Cout,), jnp.float32, -bound2, bound2),
        "g2": jnp.ones((Cout,), jnp.float32),
        "be2": jnp.zeros((Cout,), jnp.float32),
    }

    fwd = jax.jit(functools.partial(conv_block, tile_rows=8))  # 2 row-tiles per image
    out = jax.block_until_ready(fwd(x, params))
    ref = jax.block_until_ready(conv_block_ref(x, params))

    assert out.shape == (N, Cout, H, W), out.shape
    max_err = float(jnp.max(jnp.abs(out - ref)))
    assert jnp.allclose(out, ref, atol=2e-2, rtol=2e-2), max_err
    print("KERNEL_OK")
</pallas_src>

<mosaic_0001>
module attributes {stable_mosaic.version = 11 : i64} {
  func.func @_conv_stage_kernel(%arg0: i32, %arg1: i32, %arg2: memref<1x128x4xf32, #tpu.memory_space<vmem>>, %arg3: memref<1x16x4xf32, #tpu.memory_space<vmem>>, %arg4: memref<1x16x4xf32, #tpu.memory_space<vmem>>, %arg5: memref<36x8xf32, #tpu.memory_space<vmem>>, %arg6: memref<1x8xf32, #tpu.memory_space<vmem>>, %arg7: memref<2x4xf32, #tpu.memory_space<vmem>>, %arg8: memref<1x128x8xf32, #tpu.memory_space<vmem>>, %arg9: memref<1x1x8xf32, #tpu.memory_space<vmem>>, %arg10: memref<1x1x8xf32, #tpu.memory_space<vmem>>, %arg11: memref<10x18x4xf32, #tpu.memory_space<vmem>>, %arg12: memref<128x36xf32, #tpu.memory_space<vmem>>) attributes {dimension_semantics = [#tpu.dimension_semantics<parallel>, #tpu.dimension_semantics<arbitrary>], iteration_bounds = array<i64: 2, 2>, scalar_prefetch = 0 : i64, scratch_operands = 2 : i64, tpu.core_type = #tpu.core_type<tc>, window_params = [{transform_indices = @transform_0, window_bounds = array<i64: 1, 128, 4>}, {transform_indices = @transform_1, window_bounds = array<i64: 1, 16, 4>}, {transform_indices = @transform_2, window_bounds = array<i64: 1, 16, 4>}, {pipeline_mode = #tpu.pipeline_mode<synchronous>, transform_indices = @transform_3, window_bounds = array<i64: 36, 8>}, {pipeline_mode = #tpu.pipeline_mode<synchronous>, transform_indices = @transform_4, window_bounds = array<i64: 1, 8>}, {pipeline_mode = #tpu.pipeline_mode<synchronous>, transform_indices = @transform_5, window_bounds = array<i64: 2, 4>}, {transform_indices = @transform_6, window_bounds = array<i64: 1, 128, 8>}, {transform_indices = @transform_7, window_bounds = array<i64: 1, 1, 8>}, {transform_indices = @transform_8, window_bounds = array<i64: 1, 1, 8>}]} {
    %c0 = arith.constant 0 : index
    %c0_0 = arith.constant 0 : index
    %c0_1 = arith.constant 0 : index
    %0 = vector.load %arg2[%c0, %c0_0, %c0_1] : memref<1x128x4xf32, #tpu.memory_space<vmem>>, vector<1x128x4xf32>
    %1 = vector.shape_cast %0 : vector<1x128x4xf32> to vector<128x4xf32>
    %c0_2 = arith.constant 0 : index
    %c0_3 = arith.constant 0 : index
    %c0_4 = arith.constant 0 : index
    %2 = vector.load %arg3[%c0_2, %c0_3, %c0_4] : memref<1x16x4xf32, #tpu.memory_space<vmem>>, vector<1x16x4xf32>
    %3 = vector.shape_cast %2 : vector<1x16x4xf32> to vector<16x4xf32>
    %c0_5 = arith.constant 0 : index
    %c0_6 = arith.constant 0 : index
    %c0_7 = arith.constant 0 : index
    %4 = vector.load %arg4[%c0_5, %c0_6, %c0_7] : memref<1x16x4xf32, #tpu.memory_space<vmem>>, vector<1x16x4xf32>
    %5 = vector.shape_cast %4 : vector<1x16x4xf32> to vector<16x4xf32>
    %c0_i32 = arith.constant 0 : i32
    %6 = arith.cmpi eq, %arg1, %c0_i32 : i32
    %cst = arith.constant 0.000000e+00 : f32
    %7 = vector.broadcast %cst : f32 to vector<16x4xf32>
    %8 = arith.select %6, %7, %3 : vector<16x4xf32>
    %c1_i32 = arith.constant 1 : i32
    %9 = arith.cmpi eq, %arg1, %c1_i32 : i32
    %cst_8 = arith.constant 0.000000e+00 : f32
    %10 = vector.broadcast %cst_8 : f32 to vector<16x4xf32>
    %11 = arith.select %9, %10, %5 : vector<16x4xf32>
    %cst_9 = arith.constant 0.000000e+00 : f32
    %12 = vector.broadcast %cst_9 : f32 to vector<10x18x4xf32>
    %c0_10 = arith.constant 0 : index
    %c0_11 = arith.constant 0 : index
    %c0_12 = arith.constant 0 : index
    %13 = vector.load %arg11[%c0_10, %c0_11, %c0_12] : memref<10x18x4xf32, #tpu.memory_space<vmem>>, vector<10x18x4xf32>
    tpu.vector_store %arg11[%c0_10, %c0_11, %c0_12], %12 {strides = array<i32>} : memref<10x18x4xf32, #tpu.memory_space<vmem>>, vector<10x18x4xf32>,
    %14 = vector.shape_cast %1 : vector<128x4xf32> to vector<8x16x4xf32>
    %c1 = arith.constant 1 : index
    %c1_13 = arith.constant 1 : index
    %c0_14 = arith.constant 0 : index
    %15 = vector.load %arg11[%c1, %c1_13, %c0_14] : memref<10x18x4xf32, #tpu.memory_space<vmem>>, vector<8x16x4xf32>
    tpu.vector_store %arg11[%c1, %c1_13, %c0_14], %14 {strides = array<i32>} : memref<10x18x4xf32, #tpu.memory_space<vmem>>, vector<8x16x4xf32>,
    %16 = vector.shape_cast %8 : vector<16x4xf32> to vector<1x16x4xf32>
    %c0_15 = arith.constant 0 : index
    %c1_16 = arith.constant 1 : index
    %c0_17 = arith.constant 0 : index
    %17 = vector.load %arg11[%c0_15, %c1_16, %c0_17] : memref<10x18x4xf32, #tpu.memory_space<vmem>>, vector<1x16x4xf32>
    tpu.vector_store %arg11[%c0_15, %c1_16, %c0_17], %16 {strides = array<i32>} : memref<10x18x4xf32, #tpu.memory_space<vmem>>, vector<1x16x4xf32>,
    %18 = vector.shape_cast %11 : vector<16x4xf32> to vector<1x16x4xf32>
    %c9 = arith.constant 9 : index
    %c1_18 = arith.constant 1 : index
    %c0_19 = arith.constant 0 : index
    %19 = vector.load %arg11[%c9, %c1_18, %c0_19] : memref<10x18x4xf32, #tpu.memory_space<vmem>>, vector<1x16x4xf32>
    tpu.vector_store %arg11[%c9, %c1_18, %c0_19], %18 {strides = array<i32>} : memref<10x18x4xf32, #tpu.memory_space<vmem>>, vector<1x16x4xf32>,
    %c0_20 = arith.constant 0 : index
    %c0_21 = arith.constant 0 : index
    %c0_22 = arith.constant 0 : index
    %20 = vector.load %arg11[%c0_20, %c0_21, %c0_22] : memref<10x18x4xf32, #tpu.memory_space<vmem>>, vector<8x16x4xf32>
    %21 = vector.shape_cast %20 : vector<8x16x4xf32> to vector<128x4xf32>
    %c0_23 = arith.constant 0 : index
    %c0_24 = arith.constant 0 : index
    %22 = vector.load %arg12[%c0_23, %c0_24] : memref<128x36xf32, #tpu.memory_space<vmem>>, vector<128x4xf32>
    tpu.vector_store %arg12[%c0_23, %c0_24], %21 {strides = array<i32>} : memref<128x36xf32, #tpu.memory_space<vmem>>, vector<128x4xf32>,
    %c0_25 = arith.constant 0 : index
    %c1_26 = arith.constant 1 : index
    %c0_27 = arith.constant 0 : index
    %23 = vector.load %arg11[%c0_25, %c1_26, %c0_27] : memref<10x18x4xf32, #tpu.memory_space<vmem>>, vector<8x16x4xf32>
    %24 = vector.shape_cast %23 : vector<8x16x4xf32> to vector<128x4xf32>
    %c0_28 = arith.constant 0 : index
    %c4 = arith.constant 4 : index
    %25 = vector.load %arg12[%c0_28, %c4] : memref<128x36xf32, #tpu.memory_space<vmem>>, vector<128x4xf32>
    tpu.vector_store %arg12[%c0_28, %c4], %24 {strides = array<i32>} : memref<128x36xf32, #tpu.memory_space<vmem>>, vector<128x4xf32>,
    %c0_29 = arith.constant 0 : index
    %c2 = arith.constant 2 : index
    %c0_30 = arith.constant 0 : index
    %26 = vector.load %arg11[%c0_29, %c2, %c0_30] : memref<10x18x4xf32, #tpu.memory_space<vmem>>, vector<8x16x4xf32>
    %27 = vector.shape_cast %26 : vector<8x16x4xf32> to vector<128x4xf32>
    %c0_31 = arith.constant 0 : index
    %c8 = arith.constant 8 : index
    %28 = vector.load %arg12[%c0_31, %c8] : memref<128x36xf32, #tpu.memory_space<vmem>>, vector<128x4xf32>
    tpu.vector_store %arg12[%c0_31, %c8], %27 {strides = array<i32>} : memref<128x36xf32, #tpu.memory_space<vmem>>, vector<128x4xf32>,
    %c1_32 = arith.constant 1 : index
    %c0_33 = arith.constant 0 : index
    %c0_34 = arith.constant 0 : index
    %29 = vector.load %arg11[%c1_32, %c0_33, %c0_34] : memref<10x18x4xf32, #tpu.memory_space<vmem>>, vector<8x16x4xf32>
    %30 = vector.shape_cast %29 : vector<8x16x4xf32> to vector<128x4xf32>
    %c0_35 = arith.constant 0 : index
    %c12 = arith.constant 12 : index
    %31 = vector.load %arg12[%c0_35, %c12] : memref<128x36xf32, #tpu.memory_space<vmem>>, vector<128x4xf32>
    tpu.vector_store %arg12[%c0_35, %c12], %30 {strides = array<i32>} : memref<128x36xf32, #tpu.memory_space<vmem>>, vector<128x4xf32>,
    %c1_36 = arith.constant 1 : index
    %c1_37 = arith.constant 1 : index
    %c0_38 = arith.constant 0 : index
    %32 = vector.load %arg11[%c1_36, %c1_37, %c0_38] : memref<10x18x4xf32, #tpu.memory_space<vmem>>, vector<8x16x4xf32>
    %33 = vector.shape_cast %32 : vector<8x16x4xf32> to vector<128x4xf32>
    %c0_39 = arith.constant 0 : index
    %c16 = arith.constant 16 : index
    %34 = vector.load %arg12[%c0_39, %c16] : memref<128x36xf32, #tpu.memory_space<vmem>>, vector<128x4xf32>
    tpu.vector_store %arg12[%c0_39, %c16], %33 {strides = array<i32>} : memref<128x36xf32, #tpu.memory_space<vmem>>, vector<128x4xf32>,
    %c1_40 = arith.constant 1 : index
    %c2_41 = arith.constant 2 : index
    %c0_42 = arith.constant 0 : index
    %35 = vector.load %arg11[%c1_40, %c2_41, %c0_42] : memref<10x18x4xf32, #tpu.memory_space<vmem>>, vector<8x16x4xf32>
    %36 = vector.shape_cast %35 : vector<8x16x4xf32> to vector<128x4xf32>
    %c0_43 = arith.constant 0 : index
    %c20 = arith.constant 20 : index
    %37 = vector.load %arg12[%c0_43, %c20] : memref<128x36xf32, #tpu.memory_space<vmem>>, vector<128x4xf32>
    tpu.vector_store %arg12[%c0_43, %c20], %36 {strides = array<i32>} : memref<128x36xf32, #tpu.memory_space<vmem>>, vector<128x4xf32>,
    %c2_44 = arith.constant 2 : index
    %c0_45 = arith.constant 0 : index
    %c0_46 = arith.constant 0 : index
    %38 = vector.load %arg11[%c2_44, %c0_45, %c0_46] : memref<10x18x4xf32, #tpu.memory_space<vmem>>, vector<8x16x4xf32>
    %39 = vector.shape_cast %38 : vector<8x16x4xf32> to vector<128x4xf32>
    %c0_47 = arith.constant 0 : index
    %c24 = arith.constant 24 : index
    %40 = vector.load %arg12[%c0_47, %c24] : memref<128x36xf32, #tpu.memory_space<vmem>>, vector<128x4xf32>
    tpu.vector_store %arg12[%c0_47, %c24], %39 {strides = array<i32>} : memref<128x36xf32, #tpu.memory_space<vmem>>, vector<128x4xf32>,
    %c2_48 = arith.constant 2 : index
    %c1_49 = arith.constant 1 : index
    %c0_50 = arith.constant 0 : index
    %41 = vector.load %arg11[%c2_48, %c1_49, %c0_50] : memref<10x18x4xf32, #tpu.memory_space<vmem>>, vector<8x16x4xf32>
    %42 = vector.shape_cast %41 : vector<8x16x4xf32> to vector<128x4xf32>
    %c0_51 = arith.constant 0 : index
    %c28 = arith.constant 28 : index
    %43 = vector.load %arg12[%c0_51, %c28] : memref<128x36xf32, #tpu.memory_space<vmem>>, vector<128x4xf32>
    tpu.vector_store %arg12[%c0_51, %c28], %42 {strides = array<i32>} : memref<128x36xf32, #tpu.memory_space<vmem>>, vector<128x4xf32>,
    %c2_52 = arith.constant 2 : index
    %c2_53 = arith.constant 2 : index
    %c0_54 = arith.constant 0 : index
    %44 = vector.load %arg11[%c2_52, %c2_53, %c0_54] : memref<10x18x4xf32, #tpu.memory_space<vmem>>, vector<8x16x4xf32>
    %45 = vector.shape_cast %44 : vector<8x16x4xf32> to vector<128x4xf32>
    %c0_55 = arith.constant 0 : index
    %c32 = arith.constant 32 : index
    %46 = vector.load %arg12[%c0_55, %c32] : memref<128x36xf32, #tpu.memory_space<vmem>>, vector<128x4xf32>
    tpu.vector_store %arg12[%c0_55, %c32], %45 {strides = array<i32>} : memref<128x36xf32, #tpu.memory_space<vmem>>, vector<128x4xf32>,
    %c0_56 = arith.constant 0 : index
    %c0_57 = arith.constant 0 : index
    %47 = vector.load %arg12[%c0_56, %c0_57] : memref<128x36xf32, #tpu.memory_space<vmem>>, vector<128x36xf32>
    %c0_58 = arith.constant 0 : index
    %c0_59 = arith.constant 0 : index
    %48 = vector.load %arg5[%c0_58, %c0_59] : memref<36x8xf32, #tpu.memory_space<vmem>>, vector<36x8xf32>
    %cst_60 = arith.constant dense<0.000000e+00> : vector<128x8xf32>
    %49 = tpu.matmul %47, %48, %cst_60 {dimension_numbers = #tpu.dot_dimension_numbers<[1], [0], [0], [1], [0, 0, 1, 1], [], []>} : vector<128x36xf32>, vector<36x8xf32>, vector<128x8xf32> -> vector<128x8xf32>
    %c0_61 = arith.constant 0 : index
    %c0_62 = arith.constant 0 : index
    %50 = vector.load %arg6[%c0_61, %c0_62] : memref<1x8xf32, #tpu.memory_space<vmem>>, vector<1x8xf32>
    %51 = vector.broadcast %50 : vector<1x8xf32> to vector<128x8xf32>
    %52 = arith.addf %49, %51 : vector<128x8xf32>
    %c0_i32_63 = arith.constant 0 : i32
    %53 = arith.cmpi eq, %arg1, %c0_i32_63 : i32
    %54 = arith.extui %53 : i1 to i32
    %c0_i32_64 = arith.constant 0 : i32
    %55 = arith.cmpi ne, %54, %c0_i32_64 : i32
    scf.if %55 {
      %cst_82 = arith.constant 0.000000e+00 : f32
      %76 = vector.broadcast %cst_82 : f32 to vector<1x1x8xf32>
      %c0_83 = arith.constant 0 : index
      %c0_84 = arith.constant 0 : index
      %c0_85 = arith.constant 0 : index
      %77 = vector.load %arg9[%c0_83, %c0_84, %c0_85] : memref<1x1x8xf32, #tpu.memory_space<vmem>>, vector<1x1x8xf32>
      tpu.vector_store %arg9[%c0_83, %c0_84, %c0_85], %76 {strides = array<i32>} : memref<1x1x8xf32, #tpu.memory_space<vmem>>, vector<1x1x8xf32>,
      %cst_86 = arith.constant 0.000000e+00 : f32
      %78 = vector.broadcast %cst_86 : f32 to vector<1x1x8xf32>
      %c0_87 = arith.constant 0 : index
      %c0_88 = arith.constant 0 : index
      %c0_89 = arith.constant 0 : index
      %79 = vector.load %arg10[%c0_87, %c0_88, %c0_89] : memref<1x1x8xf32, #tpu.memory_space<vmem>>, vector<1x1x8xf32>
      tpu.vector_store %arg10[%c0_87, %c0_88, %c0_89], %78 {strides = array<i32>} : memref<1x1x8xf32, #tpu.memory_space<vmem>>, vector<1x1x8xf32>,
    } else {
    }
    %c0_65 = arith.constant 0 : index
    %c0_66 = arith.constant 0 : index
    %c0_67 = arith.constant 0 : index
    %56 = vector.load %arg9[%c0_65, %c0_66, %c0_67] : memref<1x1x8xf32, #tpu.memory_space<vmem>>, vector<1x1x8xf32>
    %57 = vector.shape_cast %56 : vector<1x1x8xf32> to vector<1x8xf32>
    %cst_68 = arith.constant dense<0.000000e+00> : vector<8xf32>
    %58 = vector.multi_reduction <add>, %52, %cst_68 [0] : vector<128x8xf32> to vector<8xf32>
    %59 = vector.shape_cast %58 : vector<8xf32> to vector<1x8xf32>
    %60 = arith.addf %57, %59 : vector<1x8xf32>
    %c0_69 = arith.constant 0 : index
    %c0_70 = arith.constant 0 : index
    %c0_71 = arith.constant 0 : index
    %61 = vector.load %arg9[%c0_69, %c0_70, %c0_71] : memref<1x1x8xf32, #tpu.memory_space<vmem>>, vector<1x1x8xf32>
    %62 = vector.shape_cast %61 : vector<1x1x8xf32> to vector<1x8xf32>
    %63 = vector.shape_cast %60 : vector<1x8xf32> to vector<1x1x8xf32>
    tpu.vector_store %arg9[%c0_69, %c0_70, %c0_71], %63 {strides = array<i32>} : memref<1x1x8xf32, #tpu.memory_space<vmem>>, vector<1x1x8xf32>,
    %c0_72 = arith.constant 0 : index
    %c0_73 = arith.constant 0 : index
    %c0_74 = arith.constant 0 : index
    %64 = vector.load %arg10[%c0_72, %c0_73, %c0_74] : memref<1x1x8xf32, #tpu.memory_space<vmem>>, vector<1x1x8xf32>
    %65 = vector.shape_cast %64 : vector<1x1x8xf32> to vector<1x8xf32>
    %66 = arith.mulf %52, %52 : vector<128x8xf32>
    %cst_75 = arith.constant dense<0.000000e+00> : vector<8xf32>
    %67 = vector.multi_reduction <add>, %66, %cst_75 [0] : vector<128x8xf32> to vector<8xf32>
    %68 = vector.shape_cast %67 : vector<8xf32> to vector<1x8xf32>
    %69 = arith.addf %65, %68 : vector<1x8xf32>
    %c0_76 = arith.constant 0 : index
    %c0_77 = arith.constant 0 : index
    %c0_78 = arith.constant 0 : index
    %70 = vector.load %arg10[%c0_76, %c0_77, %c0_78] : memref<1x1x8xf32, #tpu.memory_space<vmem>>, vector<1x1x8xf32>
    %71 = vector.shape_cast %70 : vector<1x1x8xf32> to vector<1x8xf32>
    %72 = vector.shape_cast %69 : vector<1x8xf32> to vector<1x1x8xf32>
    tpu.vector_store %arg10[%c0_76, %c0_77, %c0_78], %72 {strides = array<i32>} : memref<1x1x8xf32, #tpu.memory_space<vmem>>, vector<1x1x8xf32>,
    %c0_79 = arith.constant 0 : index
    %c0_80 = arith.constant 0 : index
    %c0_81 = arith.constant 0 : index
    %73 = vector.load %arg8[%c0_79, %c0_80, %c0_81] : memref<1x128x8xf32, #tpu.memory_space<vmem>>, vector<1x128x8xf32>
    %74 = vector.shape_cast %73 : vector<1x128x8xf32> to vector<128x8xf32>
    %75 = vector.shape_cast %52 : vector<128x8xf32> to vector<1x128x8xf32>
    tpu.vector_store %arg8[%c0_79, %c0_80, %c0_81], %75 {strides = array<i32>} : memref<1x128x8xf32, #tpu.memory_space<vmem>>, vector<1x128x8xf32>,
    return
  }
  func.func @transform_0(%arg0: i32, %arg1: i32) -> (i32, i32, i32) {
    %c0_i32 = arith.constant 0 : i32
    %c0_i32_0 = arith.constant 0 : i32
    return %arg0, %arg1, %c0_i32 : i32, i32, i32
  }
  func.func @transform_1(%arg0: i32, %arg1: i32) -> (i32, i32, i32) {
    %c8_i32 = arith.constant 8 : i32
    %0 = arith.muli %arg1, %c8_i32 : i32
    %c1_i32 = arith.constant 1 : i32
    %1 = arith.subi %0, %c1_i32 : i32
    %c0_i32 = arith.constant 0 : i32
    %2 = arith.maxsi %1, %c0_i32 : i32
    %c0_i32_0 = arith.constant 0 : i32
    %c0_i32_1 = arith.constant 0 : i32
    return %arg0, %2, %c0_i32_0 : i32, i32, i32
  }
  func.func @transform_2(%arg0: i32, %arg1: i32) -> (i32, i32, i32) {
    %c8_i32 = arith.constant 8 : i32
    %0 = arith.muli %arg1, %c8_i32 : i32
    %c8_i32_0 = arith.constant 8 : i32
    %1 = arith.addi %0, %c8_i32_0 : i32
    %c15_i32 = arith.constant 15 : i32
    %2 = arith.minsi %1, %c15_i32 : i32
    %c0_i32 = arith.constant 0 : i32
    %c0_i32_1 = arith.constant 0 : i32
    return %arg0, %2, %c0_i32 : i32, i32, i32
  }
  func.func @transform_3(%arg0: i32, %arg1: i32) -> (i32, i32) {
    %c0_i32 = arith.constant 0 : i32
    %c0_i32_0 = arith.constant 0 : i32
    %c0_i32_1 = arith.constant 0 : i32
    return %c0_i32, %c0_i32_0 : i32, i32
  }
  func.func @transform_4(%arg0: i32, %arg1: i32) -> (i32, i32) {
    %c0_i32 = arith.constant 0 : i32
    %c0_i32_0 = arith.constant 0 : i32
    %c0_i32_1 = arith.constant 0 : i32
    return %c0_i32, %c0_i32_0 : i32, i32
  }
  func.func @transform_5(%arg0: i32, %arg1: i32) -> (i32, i32) {
    %c0_i32 = arith.constant 0 : i32
    %c0_i32_0 = arith.constant 0 : i32
    %c0_i32_1 = arith.constant 0 : i32
    return %c0_i32, %c0_i32_0 : i32, i32
  }
  func.func @transform_6(%arg0: i32, %arg1: i32) -> (i32, i32, i32) {
    %c0_i32 = arith.constant 0 : i32
    %c0_i32_0 = arith.constant 0 : i32
    return %arg0, %arg1, %c0_i32 : i32, i32, i32
  }
  func.func @transform_7(%arg0: i32, %arg1: i32) -> (i32, i32, i32) {
    %c0_i32 = arith.constant 0 : i32
    %c0_i32_0 = arith.constant 0 : i32
    %c0_i32_1 = arith.constant 0 : i32
    return %arg0, %c0_i32, %c0_i32_0 : i32, i32, i32
  }
  func.func @transform_8(%arg0: i32, %arg1: i32) -> (i32, i32, i32) {
    %c0_i32 = arith.constant 0 : i32
    %c0_i32_0 = arith.constant 0 : i32
    %c0_i32_1 = arith.constant 0 : i32
    return %arg0, %c0_i32, %c0_i32_0 : i32, i32, i32
  }
}

module attributes {stable_mosaic.version = 11 : i64} {
  func.func @_conv_stage_kernel(%arg0: i32, %arg1: i32, %arg2: memref<1x128x8xf32, #tpu.memory_space<vmem>>, %arg3: memref<1x16x8xf32, #tpu.memory_space<vmem>>, %arg4: memref<1x16x8xf32, #tpu.memory_space<vmem>>, %arg5: memref<72x8xf32, #tpu.memory_space<vmem>>, %arg6: memref<1x8xf32, #tpu.memory_space<vmem>>, %arg7: memref<2x8xf32, #tpu.memory_space<vmem>>, %arg8: memref<1x128x8xf32, #tpu.memory_space<vmem>>, %arg9: memref<1x1x8xf32, #tpu.memory_space<vmem>>, %arg10: memref<1x1x8xf32, #tpu.memory_space<vmem>>, %arg11: memref<10x18x8xf32, #tpu.memory_space<vmem>>, %arg12: memref<128x72xf32, #tpu.memory_space<vmem>>) attributes {dimension_semantics = [#tpu.dimension_semantics<parallel>, #tpu.dimension_semantics<arbitrary>], iteration_bounds = array<i64: 2, 2>, scalar_prefetch = 0 : i64, scratch_operands = 2 : i64, tpu.core_type = #tpu.core_type<tc>, window_params = [{transform_indices = @transform_0, window_bounds = array<i64: 1, 128, 8>}, {transform_indices = @transform_1, window_bounds = array<i64: 1, 16, 8>}, {transform_indices = @transform_2, window_bounds = array<i64: 1, 16, 8>}, {pipeline_mode = #tpu.pipeline_mode<synchronous>, transform_indices = @transform_3, window_bounds = array<i64: 72, 8>}, {pipeline_mode = #tpu.pipeline_mode<synchronous>, transform_indices = @transform_4, window_bounds = array<i64: 1, 8>}, {pipeline_mode = #tpu.pipeline_mode<synchronous>, transform_indices = @transform_5, window_bounds = array<i64: 2, 8>}, {transform_indices = @transform_6, window_bounds = array<i64: 1, 128, 8>}, {transform_indices = @transform_7, window_bounds = array<i64: 1, 1, 8>}, {transform_indices = @transform_8, window_bounds = array<i64: 1, 1, 8>}]} {
    %c0 = arith.constant 0 : index
    %c0_0 = arith.constant 0 : index
    %c0_1 = arith.constant 0 : index
    %0 = vector.load %arg2[%c0, %c0_0, %c0_1] : memref<1x128x8xf32, #tpu.memory_space<vmem>>, vector<1x128x8xf32>
    %1 = vector.shape_cast %0 : vector<1x128x8xf32> to vector<128x8xf32>
    %c0_2 = arith.constant 0 : index
    %c0_3 = arith.constant 0 : index
    %c0_4 = arith.constant 0 : index
    %2 = vector.load %arg3[%c0_2, %c0_3, %c0_4] : memref<1x16x8xf32, #tpu.memory_space<vmem>>, vector<1x16x8xf32>
    %3 = vector.shape_cast %2 : vector<1x16x8xf32> to vector<16x8xf32>
    %c0_5 = arith.constant 0 : index
    %c0_6 = arith.constant 0 : index
    %c0_7 = arith.constant 0 : index
    %4 = vector.load %arg4[%c0_5, %c0_6, %c0_7] : memref<1x16x8xf32, #tpu.memory_space<vmem>>, vector<1x16x8xf32>
    %5 = vector.shape_cast %4 : vector<1x16x8xf32> to vector<16x8xf32>
    %c0_8 = arith.constant 0 : index
    %c0_9 = arith.constant 0 : index
    %6 = vector.load %arg7[%c0_8, %c0_9] : memref<2x8xf32, #tpu.memory_space<vmem>>, vector<1x8xf32>
    %c1 = arith.constant 1 : index
    %c0_10 = arith.constant 0 : index
    %7 = vector.load %arg7[%c1, %c0_10] : memref<2x8xf32, #tpu.memory_space<vmem>>, vector<1x8xf32>
    %8 = vector.broadcast %6 : vector<1x8xf32> to vector<128x8xf32>
    %9 = arith.mulf %1, %8 : vector<128x8xf32>
    %10 = vector.broadcast %7 : vector<1x8xf32> to vector<128x8xf32>
    %11 = arith.addf %9, %10 : vector<128x8xf32>
    %cst = arith.constant 0.000000e+00 : f32
    %12 = vector.broadcast %cst : f32 to vector<128x8xf32>
    %13 = arith.maximumf %11, %12 : vector<128x8xf32>
    %14 = vector.broadcast %6 : vector<1x8xf32> to vector<16x8xf32>
    %15 = arith.mulf %3, %14 : vector<16x8xf32>
    %16 = vector.broadcast %7 : vector<1x8xf32> to vector<16x8xf32>
    %17 = arith.addf %15, %16 : vector<16x8xf32>
    %cst_11 = arith.constant 0.000000e+00 : f32
    %18 = vector.broadcast %cst_11 : f32 to vector<16x8xf32>
    %19 = arith.maximumf %17, %18 : vector<16x8xf32>
    %20 = vector.broadcast %6 : vector<1x8xf32> to vector<16x8xf32>
    %21 = arith.mulf %5, %20 : vector<16x8xf32>
    %22 = vector.broadcast %7 : vector<1x8xf32> to vector<16x8xf32>
    %23 = arith.addf %21, %22 : vector<16x8xf32>
    %cst_12 = arith.constant 0.000000e+00 : f32
    %24 = vector.broadcast %cst_12 : f32 to vector<16x8xf32>
    %25 = arith.maximumf %23, %24 : vector<16x8xf32>
    %c0_i32 = arith.constant 0 : i32
    %26 = arith.cmpi eq, %arg1, %c0_i32 : i32
    %cst_13 = arith.constant 0.000000e+00 : f32
    %27 = vector.broadcast %cst_13 : f32 to vector<16x8xf32>
    %28 = arith.select %26, %27, %19 : vector<16x8xf32>
    %c1_i32 = arith.constant 1 : i32
    %29 = arith.cmpi eq, %arg1, %c1_i32 : i32
    %cst_14 = arith.constant 0.000000e+00 : f32
    %30 = vector.broadcast %cst_14 : f32 to vector<16x8xf32>
    %31 = arith.select %29, %30, %25 : vector<16x8xf32>
    %cst_15 = arith.constant 0.000000e+00 : f32
    %32 = vector.broadcast %cst_15 : f32 to vector<10x18x8xf32>
    %c0_16 = arith.constant 0 : index
    %c0_17 = arith.constant 0 : index
    %c0_18 = arith.constant 0 : index
    %33 = vector.load %arg11[%c0_16, %c0_17, %c0_18] : memref<10x18x8xf32, #tpu.memory_space<vmem>>, vector<10x18x8xf32>
    tpu.vector_store %arg11[%c0_16, %c0_17, %c0_18], %32 {strides = array<i32>} : memref<10x18x8xf32, #tpu.memory_space<vmem>>, vector<10x18x8xf32>,
    %34 = vector.shape_cast %13 : vector<128x8xf32> to vector<8x16x8xf32>
    %c1_19 = arith.constant 1 : index
    %c1_20 = arith.constant 1 : index
    %c0_21 = arith.constant 0 : index
    %35 = vector.load %arg11[%c1_19, %c1_20, %c0_21] : memref<10x18x8xf32, #tpu.memory_space<vmem>>, vector<8x16x8xf32>
    tpu.vector_store %arg11[%c1_19, %c1_20, %c0_21], %34 {strides = array<i32>} : memref<10x18x8xf32, #tpu.memory_space<vmem>>, vector<8x16x8xf32>,
    %36 = vector.shape_cast %28 : vector<16x8xf32> to vector<1x16x8xf32>
    %c0_22 = arith.constant 0 : index
    %c1_23 = arith.constant 1 : index
    %c0_24 = arith.constant 0 : index
    %37 = vector.load %arg11[%c0_22, %c1_23, %c0_24] : memref<10x18x8xf32, #tpu.memory_space<vmem>>, vector<1x16x8xf32>
    tpu.vector_store %arg11[%c0_22, %c1_23, %c0_24], %36 {strides = array<i32>} : memref<10x18x8xf32, #tpu.memory_space<vmem>>, vector<1x16x8xf32>,
    %38 = vector.shape_cast %31 : vector<16x8xf32> to vector<1x16x8xf32>
    %c9 = arith.constant 9 : index
    %c1_25 = arith.constant 1 : index
    %c0_26 = arith.constant 0 : index
    %39 = vector.load %arg11[%c9, %c1_25, %c0_26] : memref<10x18x8xf32, #tpu.memory_space<vmem>>, vector<1x16x8xf32>
    tpu.vector_store %arg11[%c9, %c1_25, %c0_26], %38 {strides = array<i32>} : memref<10x18x8xf32, #tpu.memory_space<vmem>>, vector<1x16x8xf32>,
    %c0_27 = arith.constant 0 : index
    %c0_28 = arith.constant 0 : index
    %c0_29 = arith.constant 0 : index
    %40 = vector.load %arg11[%c0_27, %c0_28, %c0_29] : memref<10x18x8xf32, #tpu.memory_space<vmem>>, vector<8x16x8xf32>
    %41 = vector.shape_cast %40 : vector<8x16x8xf32> to vector<128x8xf32>
    %c0_30 = arith.constant 0 : index
    %c0_31 = arith.constant 0 : index
    %42 = vector.load %arg12[%c0_30, %c0_31] : memref<128x72xf32, #tpu.memory_space<vmem>>, vector<128x8xf32>
    tpu.vector_store %arg12[%c0_30, %c0_31], %41 {strides = array<i32>} : memref<128x72xf32, #tpu.memory_space<vmem>>, vector<128x8xf32>,
    %c0_32 = arith.constant 0 : index
    %c1_33 = arith.constant 1 : index
    %c0_34 = arith.constant 0 : index
    %43 = vector.load %arg11[%c0_32, %c1_33, %c0_34] : memref<10x18x8xf32, #tpu.memory_space<vmem>>, vector<8x16x8xf32>
    %44 = vector.shape_cast %43 : vector<8x16x8xf32> to vector<128x8xf32>
    %c0_35 = arith.constant 0 : index
    %c8 = arith.constant 8 : index
    %45 = vector.load %arg12[%c0_35, %c8] : memref<128x72xf32, #tpu.memory_space<vmem>>, vector<128x8xf32>
    tpu.vector_store %arg12[%c0_35, %c8], %44 {strides = array<i32>} : memref<128x72xf32, #tpu.memory_space<vmem>>, vector<128x8xf32>,
    %c0_36 = arith.constant 0 : index
    %c2 = arith.constant 2 : index
    %c0_37 = arith.constant 0 : index
    %46 = vector.load %arg11[%c0_36, %c2, %c0_37] : memref<10x18x8xf32, #tpu.memory_space<vmem>>, vector<8x16x8xf32>
    %47 = vector.shape_cast %46 : vector<8x16x8xf32> to vector<128x8xf32>
    %c0_38 = arith.constant 0 : index
    %c16 = arith.constant 16 : index
    %48 = vector.load %arg12[%c0_38, %c16] : memref<128x72xf32, #tpu.memory_space<vmem>>, vector<128x8xf32>
    tpu.vector_store %arg12[%c0_38, %c16], %47 {strides = array<i32>} : memref<128x72xf32, #tpu.memory_space<vmem>>, vector<128x8xf32>,
    %c1_39 = arith.constant 1 : index
    %c0_40 = arith.constant 0 : index
    %c0_41 = arith.constant 0 : index
    %49 = vector.load %arg11[%c1_39, %c0_40, %c0_41] : memref<10x18x8xf32, #tpu.memory_space<vmem>>, vector<8x16x8xf32>
    %50 = vector.shape_cast %49 : vector<8x16x8xf32> to vector<128x8xf32>
    %c0_42 = arith.constant 0 : index
    %c24 = arith.constant 24 : index
    %51 = vector.load %arg12[%c0_42, %c24] : memref<128x72xf32, #tpu.memory_space<vmem>>, vector<128x8xf32>
    tpu.vector_store %arg12[%c0_42, %c24], %50 {strides = array<i32>} : memref<128x72xf32, #tpu.memory_space<vmem>>, vector<128x8xf32>,
    %c1_43 = arith.constant 1 : index
    %c1_44 = arith.constant 1 : index
    %c0_45 = arith.constant 0 : index
    %52 = vector.load %arg11[%c1_43, %c1_44, %c0_45] : memref<10x18x8xf32, #tpu.memory_space<vmem>>, vector<8x16x8xf32>
    %53 = vector.shape_cast %52 : vector<8x16x8xf32> to vector<128x8xf32>
    %c0_46 = arith.constant 0 : index
    %c32 = arith.constant 32 : index
    %54 = vector.load %arg12[%c0_46, %c32] : memref<128x72xf32, #tpu.memory_space<vmem>>, vector<128x8xf32>
    tpu.vector_store %arg12[%c0_46, %c32], %53 {strides = array<i32>} : memref<128x72xf32, #tpu.memory_space<vmem>>, vector<128x8xf32>,
    %c1_47 = arith.constant 1 : index
    %c2_48 = arith.constant 2 : index
    %c0_49 = arith.constant 0 : index
    %55 = vector.load %arg11[%c1_47, %c2_48, %c0_49] : memref<10x18x8xf32, #tpu.memory_space<vmem>>, vector<8x16x8xf32>
    %56 = vector.shape_cast %55 : vector<8x16x8xf32> to vector<128x8xf32>
    %c0_50 = arith.constant 0 : index
    %c40 = arith.constant 40 : index
    %57 = vector.load %arg12[%c0_50, %c40] : memref<128x72xf32, #tpu.memory_space<vmem>>, vector<128x8xf32>
    tpu.vector_store %arg12[%c0_50, %c40], %56 {strides = array<i32>} : memref<128x72xf32, #tpu.memory_space<vmem>>, vector<128x8xf32>,
    %c2_51 = arith.constant 2 : index
    %c0_52 = arith.constant 0 : index
    %c0_53 = arith.constant 0 : index
    %58 = vector.load %arg11[%c2_51, %c0_52, %c0_53] : memref<10x18x8xf32, #tpu.memory_space<vmem>>, vector<8x16x8xf32>
    %59 = vector.shape_cast %58 : vector<8x16x8xf32> to vector<128x8xf32>
    %c0_54 = arith.constant 0 : index
    %c48 = arith.constant 48 : index
    %60 = vector.load %arg12[%c0_54, %c48] : memref<128x72xf32, #tpu.memory_space<vmem>>, vector<128x8xf32>
    tpu.vector_store %arg12[%c0_54, %c48], %59 {strides = array<i32>} : memref<128x72xf32, #tpu.memory_space<vmem>>, vector<128x8xf32>,
    %c2_55 = arith.constant 2 : index
    %c1_56 = arith.constant 1 : index
    %c0_57 = arith.constant 0 : index
    %61 = vector.load %arg11[%c2_55, %c1_56, %c0_57] : memref<10x18x8xf32, #tpu.memory_space<vmem>>, vector<8x16x8xf32>
    %62 = vector.shape_cast %61 : vector<8x16x8xf32> to vector<128x8xf32>
    %c0_58 = arith.constant 0 : index
    %c56 = arith.constant 56 : index
    %63 = vector.load %arg12[%c0_58, %c56] : memref<128x72xf32, #tpu.memory_space<vmem>>, vector<128x8xf32>
    tpu.vector_store %arg12[%c0_58, %c56], %62 {strides = array<i32>} : memref<128x72xf32, #tpu.memory_space<vmem>>, vector<128x8xf32>,
    %c2_59 = arith.constant 2 : index
    %c2_60 = arith.constant 2 : index
    %c0_61 = arith.constant 0 : index
    %64 = vector.load %arg11[%c2_59, %c2_60, %c0_61] : memref<10x18x8xf32, #tpu.memory_space<vmem>>, vector<8x16x8xf32>
    %65 = vector.shape_cast %64 : vector<8x16x8xf32> to vector<128x8xf32>
    %c0_62 = arith.constant 0 : index
    %c64 = arith.constant 64 : index
    %66 = vector.load %arg12[%c0_62, %c64] : memref<128x72xf32, #tpu.memory_space<vmem>>, vector<128x8xf32>
    tpu.vector_store %arg12[%c0_62, %c64], %65 {strides = array<i32>} : memref<128x72xf32, #tpu.memory_space<vmem>>, vector<128x8xf32>,
    %c0_63 = arith.constant 0 : index
    %c0_64 = arith.constant 0 : index
    %67 = vector.load %arg12[%c0_63, %c0_64] : memref<128x72xf32, #tpu.memory_space<vmem>>, vector<128x72xf32>
    %c0_65 = arith.constant 0 : index
    %c0_66 = arith.constant 0 : index
    %68 = vector.load %arg5[%c0_65, %c0_66] : memref<72x8xf32, #tpu.memory_space<vmem>>, vector<72x8xf32>
    %cst_67 = arith.constant dense<0.000000e+00> : vector<128x8xf32>
    %69 = tpu.matmul %67, %68, %cst_67 {dimension_numbers = #tpu.dot_dimension_numbers<[1], [0], [0], [1], [0, 0, 1, 1], [], []>} : vector<128x72xf32>, vector<72x8xf32>, vector<128x8xf32> -> vector<128x8xf32>
    %c0_68 = arith.constant 0 : index
    %c0_69 = arith.constant 0 : index
    %70 = vector.load %arg6[%c0_68, %c0_69] : memref<1x8xf32, #tpu.memory_space<vmem>>, vector<1x8xf32>
    %71 = vector.broadcast %70 : vector<1x8xf32> to vector<128x8xf32>
    %72 = arith.addf %69, %71 : vector<128x8xf32>
    %c0_i32_70 = arith.constant 0 : i32
    %73 = arith.cmpi eq, %arg1, %c0_i32_70 : i32
    %74 = arith.extui %73 : i1 to i32
    %c0_i32_71 = arith.constant 0 : i32
    %75 = arith.cmpi ne, %74, %c0_i32_71 : i32
    scf.if %75 {
      %cst_89 = arith.constant 0.000000e+00 : f32
      %96 = vector.broadcast %cst_89 : f32 to vector<1x1x8xf32>
      %c0_90 = arith.constant 0 : index
      %c0_91 = arith.constant 0 : index
      %c0_92 = arith.constant 0 : index
      %97 = vector.load %arg9[%c0_90, %c0_91, %c0_92] : memref<1x1x8xf32, #tpu.memory_space<vmem>>, vector<1x1x8xf32>
      tpu.vector_store %arg9[%c0_90, %c0_91, %c0_92], %96 {strides = array<i32>} : memref<1x1x8xf32, #tpu.memory_space<vmem>>, vector<1x1x8xf32>,
      %cst_93 = arith.constant 0.000000e+00 : f32
      %98 = vector.broadcast %cst_93 : f32 to vector<1x1x8xf32>
      %c0_94 = arith.constant 0 : index
      %c0_95 = arith.constant 0 : index
      %c0_96 = arith.constant 0 : index
      %99 = vector.load %arg10[%c0_94, %c0_95, %c0_96] : memref<1x1x8xf32, #tpu.memory_space<vmem>>, vector<1x1x8xf32>
      tpu.vector_store %arg10[%c0_94, %c0_95, %c0_96], %98 {strides = array<i32>} : memref<1x1x8xf32, #tpu.memory_space<vmem>>, vector<1x1x8xf32>,
    } else {
    }
    %c0_72 = arith.constant 0 : index
    %c0_73 = arith.constant 0 : index
    %c0_74 = arith.constant 0 : index
    %76 = vector.load %arg9[%c0_72, %c0_73, %c0_74] : memref<1x1x8xf32, #tpu.memory_space<vmem>>, vector<1x1x8xf32>
    %77 = vector.shape_cast %76 : vector<1x1x8xf32> to vector<1x8xf32>
    %cst_75 = arith.constant dense<0.000000e+00> : vector<8xf32>
    %78 = vector.multi_reduction <add>, %72, %cst_75 [0] : vector<128x8xf32> to vector<8xf32>
    %79 = vector.shape_cast %78 : vector<8xf32> to vector<1x8xf32>
    %80 = arith.addf %77, %79 : vector<1x8xf32>
    %c0_76 = arith.constant 0 : index
    %c0_77 = arith.constant 0 : index
    %c0_78 = arith.constant 0 : index
    %81 = vector.load %arg9[%c0_76, %c0_77, %c0_78] : memref<1x1x8xf32, #tpu.memory_space<vmem>>, vector<1x1x8xf32>
    %82 = vector.shape_cast %81 : vector<1x1x8xf32> to vector<1x8xf32>
    %83 = vector.shape_cast %80 : vector<1x8xf32> to vector<1x1x8xf32>
    tpu.vector_store %arg9[%c0_76, %c0_77, %c0_78], %83 {strides = array<i32>} : memref<1x1x8xf32, #tpu.memory_space<vmem>>, vector<1x1x8xf32>,
    %c0_79 = arith.constant 0 : index
    %c0_80 = arith.constant 0 : index
    %c0_81 = arith.constant 0 : index
    %84 = vector.load %arg10[%c0_79, %c0_80, %c0_81] : memref<1x1x8xf32, #tpu.memory_space<vmem>>, vector<1x1x8xf32>
    %85 = vector.shape_cast %84 : vector<1x1x8xf32> to vector<1x8xf32>
    %86 = arith.mulf %72, %72 : vector<128x8xf32>
    %cst_82 = arith.constant dense<0.000000e+00> : vector<8xf32>
    %87 = vector.multi_reduction <add>, %86, %cst_82 [0] : vector<128x8xf32> to vector<8xf32>
    %88 = vector.shape_cast %87 : vector<8xf32> to vector<1x8xf32>
    %89 = arith.addf %85, %88 : vector<1x8xf32>
    %c0_83 = arith.constant 0 : index
    %c0_84 = arith.constant 0 : index
    %c0_85 = arith.constant 0 : index
    %90 = vector.load %arg10[%c0_83, %c0_84, %c0_85] : memref<1x1x8xf32, #tpu.memory_space<vmem>>, vector<1x1x8xf32>
    %91 = vector.shape_cast %90 : vector<1x1x8xf32> to vector<1x8xf32>
    %92 = vector.shape_cast %89 : vector<1x8xf32> to vector<1x1x8xf32>
    tpu.vector_store %arg10[%c0_83, %c0_84, %c0_85], %92 {strides = array<i32>} : memref<1x1x8xf32, #tpu.memory_space<vmem>>, vector<1x1x8xf32>,
    %c0_86 = arith.constant 0 : index
    %c0_87 = arith.constant 0 : index
    %c0_88 = arith.constant 0 : index
    %93 = vector.load %arg8[%c0_86, %c0_87, %c0_88] : memref<1x128x8xf32, #tpu.memory_space<vmem>>, vector<1x128x8xf32>
    %94 = vector.shape_cast %93 : vector<1x128x8xf32> to vector<128x8xf32>
    %95 = vector.shape_cast %72 : vector<128x8xf32> to vector<1x128x8xf32>
    tpu.vector_store %arg8[%c0_86, %c0_87, %c0_88], %95 {strides = array<i32>} : memref<1x128x8xf32, #tpu.memory_space<vmem>>, vector<1x128x8xf32>,
    return
  }
  func.func @transform_0(%arg0: i32, %arg1: i32) -> (i32, i32, i32) {
    %c0_i32 = arith.constant 0 : i32
    %c0_i32_0 = arith.constant 0 : i32
    return %arg0, %arg1, %c0_i32 : i32, i32, i32
  }
  func.func @transform_1(%arg0: i32, %arg1: i32) -> (i32, i32, i32) {
    %c8_i32 = arith.constant 8 : i32
    %0 = arith.muli %arg1, %c8_i32 : i32
    %c1_i32 = arith.constant 1 : i32
    %1 = arith.subi %0, %c1_i32 : i32
    %c0_i32 = arith.constant 0 : i32
    %2 = arith.maxsi %1, %c0_i32 : i32
    %c0_i32_0 = arith.constant 0 : i32
    %c0_i32_1 = arith.constant 0 : i32
    return %arg0, %2, %c0_i32_0 : i32, i32, i32
  }
  func.func @transform_2(%arg0: i32, %arg1: i32) -> (i32, i32, i32) {
    %c8_i32 = arith.constant 8 : i32
    %0 = arith.muli %arg1, %c8_i32 : i32
    %c8_i32_0 = arith.constant 8 : i32
    %1 = arith.addi %0, %c8_i32_0 : i32
    %c15_i32 = arith.constant 15 : i32
    %2 = arith.minsi %1, %c15_i32 : i32
    %c0_i32 = arith.constant 0 : i32
    %c0_i32_1 = arith.constant 0 : i32
    return %arg0, %2, %c0_i32 : i32, i32, i32
  }
  func.func @transform_3(%arg0: i32, %arg1: i32) -> (i32, i32) {
    %c0_i32 = arith.constant 0 : i32
    %c0_i32_0 = arith.constant 0 : i32
    %c0_i32_1 = arith.constant 0 : i32
    return %c0_i32, %c0_i32_0 : i32, i32
  }
  func.func @transform_4(%arg0: i32, %arg1: i32) -> (i32, i32) {
    %c0_i32 = arith.constant 0 : i32
    %c0_i32_0 = arith.constant 0 : i32
    %c0_i32_1 = arith.constant 0 : i32
    return %c0_i32, %c0_i32_0 : i32, i32
  }
  func.func @transform_5(%arg0: i32, %arg1: i32) -> (i32, i32) {
    %c0_i32 = arith.constant 0 : i32
    %c0_i32_0 = arith.constant 0 : i32
    %c0_i32_1 = arith.constant 0 : i32
    return %c0_i32, %c0_i32_0 : i32, i32
  }
  func.func @transform_6(%arg0: i32, %arg1: i32) -> (i32, i32, i32) {
    %c0_i32 = arith.constant 0 : i32
    %c0_i32_0 = arith.constant 0 : i32
    return %arg0, %arg1, %c0_i32 : i32, i32, i32
  }
  func.func @transform_7(%arg0: i32, %arg1: i32) -> (i32, i32, i32) {
    %c0_i32 = arith.constant 0 : i32
    %c0_i32_0 = arith.constant 0 : i32
    %c0_i32_1 = arith.constant 0 : i32
    return %arg0, %c0_i32, %c0_i32_0 : i32, i32, i32
  }
  func.func @transform_8(%arg0: i32, %arg1: i32) -> (i32, i32, i32) {
    %c0_i32 = arith.constant 0 : i32
    %c0_i32_0 = arith.constant 0 : i32
    %c0_i32_1 = arith.constant 0 : i32
    return %arg0, %c0_i32, %c0_i32_0 : i32, i32, i32
  }
}

module attributes {stable_mosaic.version = 11 : i64} {
  func.func @_scale_shift_relu_kernel(%arg0: i32, %arg1: memref<32x128xf32, #tpu.memory_space<vmem>>, %arg2: memref<2x128xf32, #tpu.memory_space<vmem>>, %arg3: memref<32x128xf32, #tpu.memory_space<vmem>>) attributes {dimension_semantics = [#tpu.dimension_semantics<parallel>], iteration_bounds = array<i64: 1>, scalar_prefetch = 0 : i64, scratch_operands = 0 : i64, tpu.core_type = #tpu.core_type<tc>, window_params = [{transform_indices = @transform_0, window_bounds = array<i64: 32, 128>}, {pipeline_mode = #tpu.pipeline_mode<synchronous>, transform_indices = @transform_1, window_bounds = array<i64: 2, 128>}, {transform_indices = @transform_2, window_bounds = array<i64: 32, 128>}]} {
    %c0 = arith.constant 0 : index
    %c0_0 = arith.constant 0 : index
    %0 = vector.load %arg1[%c0, %c0_0] : memref<32x128xf32, #tpu.memory_space<vmem>>, vector<32x128xf32>
    %c0_1 = arith.constant 0 : index
    %c0_2 = arith.constant 0 : index
    %1 = vector.load %arg2[%c0_1, %c0_2] : memref<2x128xf32, #tpu.memory_space<vmem>>, vector<1x128xf32>
    %2 = vector.broadcast %1 : vector<1x128xf32> to vector<32x128xf32>
    %3 = arith.mulf %0, %2 : vector<32x128xf32>
    %c1 = arith.constant 1 : index
    %c0_3 = arith.constant 0 : index
    %4 = vector.load %arg2[%c1, %c0_3] : memref<2x128xf32, #tpu.memory_space<vmem>>, vector<1x128xf32>
    %5 = vector.broadcast %4 : vector<1x128xf32> to vector<32x128xf32>
    %6 = arith.addf %3, %5 : vector<32x128xf32>
    %cst = arith.constant 0.000000e+00 : f32
    %7 = vector.broadcast %cst : f32 to vector<32x128xf32>
    %8 = arith.maximumf %6, %7 : vector<32x128xf32>
    %c0_4 = arith.constant 0 : index
    %c0_5 = arith.constant 0 : index
    %9 = vector.load %arg3[%c0_4, %c0_5] : memref<32x128xf32, #tpu.memory_space<vmem>>, vector<32x128xf32>
    tpu.vector_store %arg3[%c0_4, %c0_5], %8 {strides = array<i32>} : memref<32x128xf32, #tpu.memory_space<vmem>>, vector<32x128xf32>,
    return
  }
  func.func @transform_0(%arg0: i32) -> (i32, i32) {
    %c0_i32 = arith.constant 0 : i32
    %c0_i32_0 = arith.constant 0 : i32
    return %arg0, %c0_i32 : i32, i32
  }
  func.func @transform_1(%arg0: i32) -> (i32, i32) {
    %c0_i32 = arith.constant 0 : i32
    %c0_i32_0 = arith.constant 0 : i32
    %c0_i32_1 = arith.constant 0 : i32
    return %c0_i32, %c0_i32_0 : i32, i32
  }
  func.func @transform_2(%arg0: i32) -> (i32, i32) {
    %c0_i32 = arith.constant 0 : i32
    %c0_i32_0 = arith.constant 0 : i32
    return %arg0, %c0_i32 : i32, i32
  }
}

</mosaic_0001>

<llo_original>
// kernel: tile.17
$region0: #{tile.17}
  #allocation0 [shape = 's32[1]{0}', space=sflag, size = 0x4, scoped, tag = 'scoped memory for tile.17']
  %s0 = inlined_call_operand.vmem [shape: f32[8], index: 0, kind: input, shape index: {}]
  %s1 = inlined_call_operand.vmem [shape: f32[16,8], index: 1, kind: output, shape index: {}]
  // Predicated region
  $region2: #{tile.17} parent=0 // pred_check
    _
  $region3: #{tile.17} parent=0 // pred_check_branch
    %3 = sbr.rel (0) target = $region5
  $region4: #{tile.17} parent=0 // pred_region
    _
  $region5: #{tile.17} parent=0 // pred_fallthru
    _
  %v4 = vld [vmem:[%s0] ss:$0 sm:$0xff]
  %5 = vst [vmem:[%s1] sm:$0xff] %v4
  %s6 = scalar_lea.vmem %s1, 8
  %7 = vst [vmem:[%s6] sm:$0xff] %v4

// kernel: tile.19
$region0: #{tile.19}
  %s0 = inlined_call_operand.vmem [shape: f32[16,8], index: 0, kind: input, shape index: {}]
  %s1 = inlined_call_operand.vmem [shape: f32[1,128], index: 1, kind: output, shape index: {}]
  $region1: #{tile.19} parent=0
    #allocation0 [shape = 'u8[4096]{0}', space=vmem, size = 0x1000, scoped, tag = 'scoped mem for output reshape']
    %v2 = vld [vmem:[%s0] sm:$0x1]
    %vm3 = vcmask 64512
    %4 = vst.msk [vmem:[#allocation0] sm:$0x1] %vm3, %v2
    %s5 = scalar_lea.vmem %s0, 15
    %v6 = vld [vmem:[%s5] sm:$0x1]
    %7 = vrot.lane.b32.xlu0 %v6, 120
    %v8 = vpop.permute.xlu0 %7
    %vm9 = vcmask 1048512
    %10 = vst.msk [vmem:[#allocation0] sm:$0x1] %vm9, %v8
    %s11 = scalar_lea.vmem %s0, 14
    %v12 = vld [vmem:[%s11] sm:$0x1]
    %13 = vrot.lane.b32.xlu0 %v12, 112
    %v14 = vpop.permute.xlu0 %13
    %vm15 = vcmask 982912
    %16 = vst.msk [vmem:[#allocation0] sm:$0x1] %vm15, %v14
    %s17 = scalar_lea.vmem %s0, 13
    %v18 = vld [vmem:[%s17] sm:$0x1]
    %19 = vrot.lane.b32.xlu0 %v18, 104
    %v20 = vpop.permute.xlu0 %19
    %vm21 = vcmask 917312
    %22 = vst.msk [vmem:[#allocation0] sm:$0x1] %vm21, %v20
    %s23 = scalar_lea.vmem %s0, 12
    %v24 = vld [vmem:[%s23] sm:$0x1]
    %25 = vrot.lane.b32.xlu0 %v24, 96
    %v26 = vpop.permute.xlu0 %25
    %vm27 = vcmask 851712
    %28 = vst.msk [vmem:[#allocation0] sm:$0x1] %vm27, %v26
    %s29 = scalar_lea.vmem %s0, 11
    %v30 = vld [vmem:[%s29] sm:$0x1]
    %31 = vrot.lane.b32.xlu0 %v30, 88
    %v32 = vpop.permute.xlu0 %31
    %vm33 = vcmask 786112
    %34 = vst.msk [vmem:[#allocation0] sm:$0x1] %vm33, %v32
    %s35 = scalar_lea.vmem %s0, 10
    %v36 = vld [vmem:[%s35] sm:$0x1]
    %37 = vrot.lane.b32.xlu0 %v36, 80
    %v38 = vpop.permute.xlu0 %37
    %vm39 = vcmask 720512
    %40 = vst.msk [vmem:[#allocation0] sm:$0x1] %vm39, %v38
    %s41 = scalar_lea.vmem %s0, 9
    %v42 = vld [vmem:[%s41] sm:$0x1]
    %43 = vrot.lane.b32.xlu0 %v42, 72
    %v44 = vpop.permute.xlu0 %43
    %vm45 = vcmask 654912
    %46 = vst.msk [vmem:[#allocation0] sm:$0x1] %vm45, %v44
    %s47 = scalar_lea.vmem %s0, 8
    %v48 = vld [vmem:[%s47] sm:$0x1]
    %49 = vrot.lane.b32.xlu0 %v48, 64
    %v50 = vpop.permute.xlu0 %49
    %vm51 = vcmask 589312
    %52 = vst.msk [vmem:[#allocation0] sm:$0x1] %vm51, %v50
    %s53 = scalar_lea.vmem %s0, 7
    %v54 = vld [vmem:[%s53] sm:$0x1]
    %55 = vrot.lane.b32.xlu0 %v54, 56
    %v56 = vpop.permute.xlu0 %55
    %vm57 = vcmask 523712
    %58 = vst.msk [vmem:[#allocation0] sm:$0x1] %vm57, %v56
    %s59 = scalar_lea.vmem %s0, 6
    %v60 = vld [vmem:[%s59] sm:$0x1]
    %61 = vrot.lane.b32.xlu0 %v60, 48
    %v62 = vpop.permute.xlu0 %61
    %vm63 = vcmask 458112
    %64 = vst.msk [vmem:[#allocation0] sm:$0x1] %vm63, %v62
    %s65 = scalar_lea.vmem %s0, 5
    %v66 = vld [vmem:[%s65] sm:$0x1]
    %67 = vrot.lane.b32.xlu0 %v66, 40
    %v68 = vpop.permute.xlu0 %67
    %vm69 = vcmask 392512
    %70 = vst.msk [vmem:[#allocation0] sm:$0x1] %vm69, %v68
    %s71 = scalar_lea.vmem %s0, 4
    %v72 = vld [vmem:[%s71] sm:$0x1]
    %73 = vrot.lane.b32.xlu0 %v72, 32
    %v74 = vpop.permute.xlu0 %73
    %vm75 = vcmask 326912
    %76 = vst.msk [vmem:[#allocation0] sm:$0x1] %vm75, %v74
    %s77 = scalar_lea.vmem %s0, 3
    %v78 = vld [vmem:[%s77] sm:$0x1]
    %79 = vrot.lane.b32.xlu0 %v78, 24
    %v80 = vpop.permute.xlu0 %79
    %vm81 = vcmask 261312
    %82 = vst.msk [vmem:[#allocation0] sm:$0x1] %vm81, %v80
    %s83 = scalar_lea.vmem %s0, 2
    %v84 = vld [vmem:[%s83] sm:$0x1]
    %85 = vrot.lane.b32.xlu0 %v84, 16
    %v86 = vpop.permute.xlu0 %85
    %vm87 = vcmask 195712
    %88 = vst.msk [vmem:[#allocation0] sm:$0x1] %vm87, %v86
    %s89 = scalar_lea.vmem %s0, 1
    %v90 = vld [vmem:[%s89] sm:$0x1]
    %91 = vrot.lane.b32.xlu0 %v90, 8
    %v92 = vpop.permute.xlu0 %91
    %vm93 = vcmask 130112
    %94 = vst.msk [vmem:[#allocation0] sm:$0x1] %vm93, %v92
    %s96 = sshllo.u32 0, 1
    %v98 = vld [vmem:[#allocation0] sm:%s96]
    %s99 = sshllo.u32 0, 1
    %100 = vst [vmem:[%s1] sm:%s99] %v98

// kernel: conv_block.5
$region0: #{conv_block.5}
  #allocation0 [shape = 'u32[]', space=smem, size = 0x4, offset = 0x4, fixed_abs, tag = 'smem constant byte address 0x4 - core index']
  #allocation1 [shape = 'u32[144,128]{1,0:T(1,128)}', space=vmem, size = 0x12000, scoped, tag = 'internal scratch']
  %s0 = inlined_call_operand.vmem [shape: f32[32,128], index: 0, kind: input, shape index: {}]
  %s1 = inlined_call_operand.vmem [shape: f32[2,128], index: 1, kind: input, shape index: {}]
  %s2 = inlined_call_operand.vmem [shape: f32[32,128], index: 2, kind: output, shape index: {}]
  %s3 = sld [smem:[#allocation0]]
  $region18: #{conv_block.5} parent=0
    _
  %s5 = ssub.s32 1, %s3
  %s6 = scalar_select 0, %s5, %s3
  // Predicated region
  $region2: #{conv_block.5} parent=0 // pred_check
    _
  $region3: #{conv_block.5} parent=0 // pred_check_branch
    %8 = sbr.rel (0) target = $region5
  $region4: #{conv_block.5} parent=0 // pred_region
    _
  $region5: #{conv_block.5} parent=0 // pred_fallthru
    _
  // Predicated region
  $region6: #{conv_block.5} parent=0 // pred_check
    _
  $region7: #{conv_block.5} parent=0 // pred_check_branch
    %10 = sbr.rel (0) target = $region9
  $region8: #{conv_block.5} parent=0 // pred_region
    _
  $region9: #{conv_block.5} parent=0 // pred_fallthru
    _
  %v11 = vld [vmem:[%s0] sm:$0xff]
  %v12 = vld [vmem:[%s0 + $0x8] sm:$0xff]
  %v13 = vld [vmem:[%s0 + $0x10] sm:$0xff]
  %v14 = vld [vmem:[%s0 + $0x18] sm:$0xff]
  %v15 = vld [vmem:[%s1] sm:$0x1]
  %v16 = vlaneseq
  %v17 = vshrl.u32 %v16, 7
  %v18 = vsub.s32 0, %v17
  %v19 = vrot.slane %v15, %v18
  %v20 = vmul.f32 %v11, %v19
  %v21 = vmul.f32 %v12, %v19
  %v22 = vmul.f32 %v13, %v19
  %v23 = vmul.f32 %v14, %v19
  %v24 = vld [vmem:[%s1 + $0x1] sm:$0x1]
  %v25 = vlaneseq
  %v26 = vshrl.u32 %v25, 7
  %v27 = vsub.s32 0, %v26
  %v28 = vrot.slane %v24, %v27
  %v29 = vadd.f32 %v20, %v28
  %v30 = vadd.f32 %v21, %v28
  %v31 = vadd.f32 %v22, %v28
  %v32 = vadd.f32 %v23, %v28
  %v33 = vmax.f32 %v29, 0.0
  %v34 = vmax.f32 %v30, 0.0
  %v35 = vmax.f32 %v31, 0.0
  %v36 = vmax.f32 %v32, 0.0
  %37 = vst [vmem:[%s2] sm:$0xff] %v33
  %38 = vst [vmem:[%s2 + $0x8] sm:$0xff] %v34
  %39 = vst [vmem:[%s2 + $0x10] sm:$0xff] %v35
  %40 = vst [vmem:[%s2 + $0x18] sm:$0xff] %v36
  // Predicated region
  $region10: #{conv_block.5} parent=0 // pred_check
    _
  $region11: #{conv_block.5} parent=0 // pred_check_branch
    %42 = sbr.rel (0) target = $region13
  $region12: #{conv_block.5} parent=0 // pred_region
    _
  $region13: #{conv_block.5} parent=0 // pred_fallthru
    _
  // Predicated region
  $region14: #{conv_block.5} parent=0 // pred_check
    _
  $region15: #{conv_block.5} parent=0 // pred_check_branch
    %44 = sbr.rel (0) target = $region17
  $region16: #{conv_block.5} parent=0 // pred_region
    _
  $region17: #{conv_block.5} parent=0 // pred_fallthru
    _

// kernel: conv_block.3
$region0: #{conv_block.3}
  #allocation0 [shape = 'u32[]', space=smem, size = 0x4, offset = 0x4, fixed_abs, tag = 'smem constant byte address 0x4 - core index']
  #allocation1 [shape = 'u32[144,128]{1,0:T(1,128)}', space=vmem, size = 0x12000, scoped, tag = 'internal scratch']
  #allocation2 [shape = 'f32[10,18,4]{2,1,0:T(8,128)}', space=vmem, size = 0x1e000, scoped, tag = 'scratch operand']
  #allocation3 [shape = 'f32[128,36]{1,0:T(8,128)}', space=vmem, size = 0x10000, scoped, tag = 'scratch operand']
  %s0 = inlined_call_operand.vmem [shape: f32[2,256,4], index: 0, kind: input, shape index: {}, may-alias: {0,1,2}]
  %s1 = inlined_call_operand.vmem [shape: f32[2,256,4], index: 1, kind: input, shape index: {}, may-alias: {0,1,2}]
  %s2 = inlined_call_operand.vmem [shape: f32[2,256,4], index: 2, kind: input, shape index: {}, may-alias: {0,1,2}]
  %s3 = inlined_call_operand.vmem [shape: f32[36,8], index: 3, kind: input, shape index: {}]
  %s4 = inlined_call_operand.vmem [shape: f32[1,8], index: 4, kind: input, shape index: {}]
  %s5 = inlined_call_operand.vmem [shape: f32[2,4], index: 5, kind: input, shape index: {}]
  %s6 = inlined_call_operand.vmem [shape: f32[2,256,8], index: 6, kind: output, shape index: {0}]
  %s7 = inlined_call_operand.vmem [shape: f32[2,1,8], index: 7, kind: output, shape index: {1}]
  %s8 = inlined_call_operand.vmem [shape: f32[2,1,8], index: 8, kind: output, shape index: {2}]
  %9 = xla_tuple %s6, %s7, %s8
  %s10 = sld [smem:[#allocation0]]
  $region77: #{conv_block.3} parent=0
    _
  %s12 = ssub.s32 1, %s10
  %s13 = scalar_select 0, %s12, %s10
  loop: start=0, step=1, limit=6
  $region2: #{conv_block.3} parent=0 // loop_pre_header
    _
  $region3: #{conv_block.3} parent=0 // loop_header
    %s15 = sphi 0, %s19
    %p16 = scmp.ge.s32.totalorder %s15, 6
    %s22 = sphi 0, %s34
    %s23 = sphi 0, %s30
    %s24 = sphi 0, %s22
    %s25 = sphi 0, %s23
    %s26 = sphi 0, %s24
    %s27 = sphi 0, %s25
    %s39 = sphi 0, %s41
    %s42 = sphi 0, %s39
    %s43 = sphi 0, %s42
    %s59 = sphi 0, %s43
    %s75 = sphi 0, %s77
    %s78 = sphi 0, %s75
    %s79 = sphi 0, %s78
    %s95 = sphi 0, %s79
    %s111 = sphi 0, %s113
    %s114 = sphi 0, %s111
    %s115 = sphi 0, %s114
    %s131 = sphi 0, %s115
    %s135 = sphi 0, %s135
    %s137 = sphi 0, %s135
    %s138 = sphi 0, %s137
    %s152 = sphi 0, %s138
    %s156 = sphi 0, %s156
    %s158 = sphi 0, %s156
    %s159 = sphi 0, %s158
    %s173 = sphi 0, %s159
    %s177 = sphi 0, %s177
    %s179 = sphi 0, %s177
    %s180 = sphi 0, %s179
    %s194 = sphi 0, %s180
    %s202 = sphi 0, %s204
    %s205 = sphi 0, %s202
    %s206 = sphi 0, %s205
    %s222 = sphi 0, %s206
    %s228 = sphi 0, %s230
    %s231 = sphi 0, %s228
    %s232 = sphi 0, %s231
    %s248 = sphi 0, %s232
    %s254 = sphi 0, %s256
    %s257 = sphi 0, %s254
    %s258 = sphi 0, %s257
    %s274 = sphi 0, %s258
  $region4: #{conv_block.3} parent=0 // loop_header_branch
    %18 = sbr.rel (%p16) target = $region8
  $region5: #{conv_block.3} parent=0 // loop_body
    %s20 = ssub.s32 %s15, 1
    %s21 = ssub.s32 %s15, 2
    %s28 = sadd.s32 1, %s23
    %p29 = scmp.ge.s32.totalorder %s28, 2
    %s30 = scalar_select %p29, 0, %s28
    %s31 = sadd.s32 1, %s22
    %s32 = scalar_select %p29, %s31, %s22
    %p33 = scmp.ge.s32.totalorder %s32, 2
    %s34 = scalar_select %p33, 0, %s32
    %s35 = ssub.s32 %s22, %s34
    %s36 = ssub.s32 %s23, %s30
    %s37 = sor.u32 %s35, %s36
    %p38 = scmp.eq.s32.totalorder %s37, 0
    %s40 = sadd.s32 %s39, 1
    %s41 = scalar_select %p38, %s39, %s40
    %p44 = pneg %p38
    %p45 = scmp.eq.s32.totalorder %s15, 3
    %p46 = por %p44, %p45
    %p47 = scmp.ne.s32.totalorder %s39, %s42
    %p48 = scmp.eq.s32.totalorder %s15, 0
    %p49 = por %p47, %p48
    %p50 = scmp.ne.s32.totalorder %s39, %s42
    %p51 = scmp.eq.s32.totalorder %s20, 3
    %p52 = por %p50, %p51
    %p53 = scmp.ne.s32.totalorder %s42, %s43
    %p54 = scmp.eq.s32.totalorder %s20, 0
    %p55 = por %p53, %p54
    %p56 = scmp.ne.s32.totalorder %s42, %s43
    %p57 = scmp.eq.s32.totalorder %s21, 3
    %p58 = por %p56, %p57
    %p60 = scmp.ne.s32.totalorder %s43, %s59
    %p61 = scmp.eq.s32.totalorder %s21, 0
    %p62 = por %p60, %p61
    %s63 = smul.u32 %s23, 8
    %s64 = ssub.s32 %s63, 1
    %p65 = scmp.gt.s32.totalorder %s64, 0
    %s66 = scalar_select %p65, %s64, 0
    %s67 = smul.u32 %s30, 8
    %s68 = ssub.s32 %s67, 1
    %p69 = scmp.gt.s32.totalorder %s68, 0
    %s70 = scalar_select %p69, %s68, 0
    %s71 = ssub.s32 %s22, %s34
    %s72 = ssub.s32 %s66, %s70
    %s73 = sor.u32 %s71, %s72
    %p74 = scmp.eq.s32.totalorder %s73, 0
    %s76 = sadd.s32 %s75, 1
    %s77 = scalar_select %p74, %s75, %s76
    %p80 = pneg %p74
    %p81 = scmp.eq.s32.totalorder %s15, 3
    %p82 = por %p80, %p81
    %p83 = scmp.ne.s32.totalorder %s75, %s78
    %p84 = scmp.eq.s32.totalorder %s15, 0
    %p85 = por %p83, %p84
    %p86 = scmp.ne.s32.totalorder %s75, %s78
    %p87 = scmp.eq.s32.totalorder %s20, 3
    %p88 = por %p86, %p87
    %p89 = scmp.ne.s32.totalorder %s78, %s79
    %p90 = scmp.eq.s32.totalorder %s20, 0
    %p91 = por %p89, %p90
    %p92 = scmp.ne.s32.totalorder %s78, %s79
    %p93 = scmp.eq.s32.totalorder %s21, 3
    %p94 = por %p92, %p93
    %p96 = scmp.ne.s32.totalorder %s79, %s95
    %p97 = scmp.eq.s32.totalorder %s21, 0
    %p98 = por %p96, %p97
    %s99 = smul.u32 %s23, 8
    %s100 = sadd.s32 %s99, 8
    %p101 = scmp.lt.s32.totalorder %s100, 15
    %s102 = scalar_select %p101, %s100, 15
    %s103 = smul.u32 %s30, 8
    %s104 = sadd.s32 %s103, 8
    %p105 = scmp.lt.s32.totalorder %s104, 15
    %s106 = scalar_select %p105, %s104, 15
    %s107 = ssub.s32 %s22, %s34
    %s108 = ssub.s32 %s102, %s106
    %s109 = sor.u32 %s107, %s108
    %p110 = scmp.eq.s32.totalorder %s109, 0
    %s112 = sadd.s32 %s111, 1
    %s113 = scalar_select %p110, %s111, %s112
    %p116 = pneg %p110
    %p117 = scmp.eq.s32.totalorder %s15, 3
    %p118 = por %p116, %p117
    %p119 = scmp.ne.s32.totalorder %s111, %s114
    %p120 = scmp.eq.s32.totalorder %s15, 0
    %p121 = por %p119, %p120
    %p122 = scmp.ne.s32.totalorder %s111, %s114
    %p123 = scmp.eq.s32.totalorder %s20, 3
    %p124 = por %p122, %p123
    %p125 = scmp.ne.s32.totalorder %s114, %s115
    %p126 = scmp.eq.s32.totalorder %s20, 0
    %p127 = por %p125, %p126
    %p128 = scmp.ne.s32.totalorder %s114, %s115
    %p129 = scmp.eq.s32.totalorder %s21, 3
    %p130 = por %p128, %p129
    %p132 = scmp.ne.s32.totalorder %s115, %s131
    %p133 = scmp.eq.s32.totalorder %s21, 0
    %p134 = por %p132, %p133
    %s136 = sadd.s32 %s135, 1
    %p139 = scmp.eq.s32.totalorder %s15, 3
    %p140 = scmp.ne.s32.totalorder %s135, %s137
    %p141 = scmp.eq.s32.totalorder %s15, 0
    %p142 = por %p140, %p141
    %p143 = scmp.ne.s32.totalorder %s135, %s137
    %p144 = scmp.eq.s32.totalorder %s20, 3
    %p145 = por %p143, %p144
    %p146 = scmp.ne.s32.totalorder %s137, %s138
    %p147 = scmp.eq.s32.totalorder %s20, 0
    %p148 = por %p146, %p147
    %p149 = scmp.ne.s32.totalorder %s137, %s138
    %p150 = scmp.eq.s32.totalorder %s21, 3
    %p151 = por %p149, %p150
    %p153 = scmp.ne.s32.totalorder %s138, %s152
    %p154 = scmp.eq.s32.totalorder %s21, 0
    %p155 = por %p153, %p154
    %s157 = sadd.s32 %s156, 1
    %p160 = scmp.eq.s32.totalorder %s15, 3
    %p161 = scmp.ne.s32.totalorder %s156, %s158
    %p162 = scmp.eq.s32.totalorder %s15, 0
    %p163 = por %p161, %p162
    %p164 = scmp.ne.s32.totalorder %s156, %s158
    %p165 = scmp.eq.s32.totalorder %s20, 3
    %p166 = por %p164, %p165
    %p167 = scmp.ne.s32.totalorder %s158, %s159
    %p168 = scmp.eq.s32.totalorder %s20, 0
    %p169 = por %p167, %p168
    %p170 = scmp.ne.s32.totalorder %s158, %s159
    %p171 = scmp.eq.s32.totalorder %s21, 3
    %p172 = por %p170, %p171
    %p174 = scmp.ne.s32.totalorder %s159, %s173
    %p175 = scmp.eq.s32.totalorder %s21, 0
    %p176 = por %p174, %p175
    %s178 = sadd.s32 %s177, 1
    %p181 = scmp.eq.s32.totalorder %s15, 3
    %p182 = scmp.ne.s32.totalorder %s177, %s179
    %p183 = scmp.eq.s32.totalorder %s15, 0
    %p184 = por %p182, %p183
    %p185 = scmp.ne.s32.totalorder %s177, %s179
    %p186 = scmp.eq.s32.totalorder %s20, 3
    %p187 = por %p185, %p186
    %p188 = scmp.ne.s32.totalorder %s179, %s180
    %p189 = scmp.eq.s32.totalorder %s20, 0
    %p190 = por %p188, %p189
    %p191 = scmp.ne.s32.totalorder %s179, %s180
    %p192 = scmp.eq.s32.totalorder %s21, 3
    %p193 = por %p191, %p192
    %p195 = scmp.ne.s32.totalorder %s180, %s194
    %p196 = scmp.eq.s32.totalorder %s21, 0
    %p197 = por %p195, %p196
    %s198 = ssub.s32 %s22, %s34
    %s199 = ssub.s32 %s23, %s30
    %s200 = sor.u32 %s198, %s199
    %p201 = scmp.eq.s32.totalorder %s200, 0
    %s203 = sadd.s32 %s202, 1
    %s204 = scalar_select %p201, %s202, %s203
    %p207 = pneg %p201
    %p208 = scmp.eq.s32.totalorder %s15, 3
    %p209 = por %p207, %p208
    %p210 = scmp.ne.s32.totalorder %s202, %s205
    %p211 = scmp.eq.s32.totalorder %s15, 0
    %p212 = por %p210, %p211
    %p213 = scmp.ne.s32.totalorder %s202, %s205
    %p214 = scmp.eq.s32.totalorder %s20, 3
    %p215 = por %p213, %p214
    %p216 = scmp.ne.s32.totalorder %s205, %s206
    %p217 = scmp.eq.s32.totalorder %s20, 0
    %p218 = por %p216, %p217
    %p219 = scmp.ne.s32.totalorder %s205, %s206
    %p220 = scmp.eq.s32.totalorder %s21, 3
    %p221 = por %p219, %p220
    %p223 = scmp.ne.s32.totalorder %s206, %s222
    %p224 = scmp.eq.s32.totalorder %s21, 0
    %p225 = por %p223, %p224
    %s226 = ssub.s32 %s22, %s34
    %p227 = scmp.eq.s32.totalorder %s226, 0
    %s229 = sadd.s32 %s228, 1
    %s230 = scalar_select %p227, %s228, %s229
    %p233 = pneg %p227
    %p234 = scmp.eq.s32.totalorder %s15, 3
    %p235 = por %p233, %p234
    %p236 = scmp.ne.s32.totalorder %s228, %s231
    %p237 = scmp.eq.s32.totalorder %s15, 0
    %p238 = por %p236, %p237
    %p239 = scmp.ne.s32.totalorder %s228, %s231
    %p240 = scmp.eq.s32.totalorder %s20, 3
    %p241 = por %p239, %p240
    %p242 = scmp.ne.s32.totalorder %s231, %s232
    %p243 = scmp.eq.s32.totalorder %s20, 0
    %p244 = por %p242, %p243
    %p245 = scmp.ne.s32.totalorder %s231, %s232
    %p246 = scmp.eq.s32.totalorder %s21, 3
    %p247 = por %p245, %p246
    %p249 = scmp.ne.s32.totalorder %s232, %s248
    %p250 = scmp.eq.s32.totalorder %s21, 0
    %p251 = por %p249, %p250
    %s252 = ssub.s32 %s22, %s34
    %p253 = scmp.eq.s32.totalorder %s252, 0
    %s255 = sadd.s32 %s254, 1
    %s256 = scalar_select %p253, %s254, %s255
    %p259 = pneg %p253
    %p260 = scmp.eq.s32.totalorder %s15, 3
    %p261 = por %p259, %p260
    %p262 = scmp.ne.s32.totalorder %s254, %s257
    %p263 = scmp.eq.s32.totalorder %s15, 0
    %p264 = por %p262, %p263
    %p265 = scmp.ne.s32.totalorder %s254, %s257
    %p266 = scmp.eq.s32.totalorder %s20, 3
    %p267 = por %p265, %p266
    %p268 = scmp.ne.s32.totalorder %s257, %s258
    %p269 = scmp.eq.s32.totalorder %s20, 0
    %p270 = por %p268, %p269
    %p271 = scmp.ne.s32.totalorder %s257, %s258
    %p272 = scmp.eq.s32.totalorder %s21, 3
    %p273 = por %p271, %p272
    %p275 = scmp.ne.s32.totalorder %s258, %s274
    %p276 = scmp.eq.s32.totalorder %s21, 0
    %p277 = por %p275, %p276
    %p278 = scmp.le.s32.totalorder 1, %s15
    %p279 = scmp.lt.s32.totalorder %s15, 5
    %p280 = pnand %p278, %p279
    %p281 = pneg %p280
    // Predicated region
    $region9: #{conv_block.3} parent=5 // pred_check
      _
    $region10: #{conv_block.3} parent=5 // pred_check_branch
      %283 = sbr.rel (%p280) target = $region12
    $region11: #{conv_block.3} parent=5 // pred_region
      %s284 = ssub.s32 %s15, 1
      // Predicated region
      $region13: #{conv_block.3} parent=11 // pred_check
        %p285 = pneg %p148
      $region14: #{conv_block.3} parent=11 // pred_check_branch
        %287 = sbr.rel (%p285) target = $region16
      $region15: #{conv_block.3} parent=11 // pred_region
        _
      $region16: #{conv_block.3} parent=11 // pred_fallthru
        _
      // Predicated region
      $region17: #{conv_block.3} parent=11 // pred_check
        %p288 = pneg %p169
      $region18: #{conv_block.3} parent=11 // pred_check_branch
        %290 = sbr.rel (%p288) target = $region20
      $region19: #{conv_block.3} parent=11 // pred_region
        _
      $region20: #{conv_block.3} parent=11 // pred_fallthru
        _
      // Predicated region
      $region21: #{conv_block.3} parent=11 // pred_check
        %p291 = pneg %p190
      $region22: #{conv_block.3} parent=11 // pred_check_branch
        %293 = sbr.rel (%p291) target = $region24
      $region23: #{conv_block.3} parent=11 // pred_region
        _
      $region24: #{conv_block.3} parent=11 // pred_fallthru
        _
    $region12: #{conv_block.3} parent=5 // pred_fallthru
      _
    %p294 = scmp.lt.s32.totalorder %s15, 4
    // Predicated region
    $region25: #{conv_block.3} parent=5 // pred_check
      %p295 = pneg %p294
    $region26: #{conv_block.3} parent=5 // pred_check_branch
      %297 = sbr.rel (%p295) target = $region28
    $region27: #{conv_block.3} parent=5 // pred_region
      // Predicated region
      $region29: #{conv_block.3} parent=27 // pred_check
        %p298 = pneg %p49
      $region30: #{conv_block.3} parent=27 // pred_check_branch
        %300 = sbr.rel (%p298) target = $region32
      $region31: #{conv_block.3} parent=27 // pred_region
        %s301 = smul.u32 16, %s23
        %p302 = scmp.lt.s32.totalorder %s22, 1
        %s303 = scalar_select %p302, %s22, 1
        %p304 = scmp.lt.s32.totalorder %s301, 31
        %s305 = scalar_select %p304, %s301, 31
        %s306 = smul.addr %s303, 32
        %s307 = sadd.s32 %s305, %s306
        %s308 = smul.addr %s307, 8
        %s309 = scalar_lea.vmem %s0, %s308
        %s310 = smul.u32 16, %s23
      $region32: #{conv_block.3} parent=27 // pred_fallthru
        _
      // Predicated region
      $region33: #{conv_block.3} parent=27 // pred_check
        %p311 = pneg %p85
      $region34: #{conv_block.3} parent=27 // pred_check_branch
        %313 = sbr.rel (%p311) target = $region36
      $region35: #{conv_block.3} parent=27 // pred_region
        %s314 = smul.u32 %s23, 8
        %s315 = ssub.s32 %s314, 1
        %p316 = scmp.gt.s32.totalorder %s315, 0
        %s317 = scalar_select %p316, %s315, 0
        %s318 = smul.u32 2, %s317
        %p319 = scmp.lt.s32.totalorder %s22, 1
        %s320 = scalar_select %p319, %s22, 1
        %p321 = scmp.lt.s32.totalorder %s318, 31
        %s322 = scalar_select %p321, %s318, 31
        %s323 = smul.addr %s320, 32
        %s324 = sadd.s32 %s322, %s323
        %s325 = smul.addr %s324, 8
        %s326 = scalar_lea.vmem %s1, %s325
        %s327 = smul.u32 %s23, 8
        %s328 = ssub.s32 %s327, 1
        %p329 = scmp.gt.s32.totalorder %s328, 0
        %s330 = scalar_select %p329, %s328, 0
        %s331 = smul.u32 2, %s330
      $region36: #{conv_block.3} parent=27 // pred_fallthru
        _
      // Predicated region
      $region37: #{conv_block.3} parent=27 // pred_check
        %p332 = pneg %p121
      $region38: #{conv_block.3} parent=27 // pred_check_branch
        %334 = sbr.rel (%p332) target = $region40
      $region39: #{conv_block.3} parent=27 // pred_region
        %s335 = smul.u32 %s23, 8
        %s336 = sadd.s32 %s335, 8
        %p337 = scmp.lt.s32.totalorder %s336, 15
        %s338 = scalar_select %p337, %s336, 15
        %s339 = smul.u32 2, %s338
        %p340 = scmp.lt.s32.totalorder %s22, 1
        %s341 = scalar_select %p340, %s22, 1
        %p342 = scmp.lt.s32.totalorder %s339, 31
        %s343 = scalar_select %p342, %s339, 31
        %s344 = smul.addr %s341, 32
        %s345 = sadd.s32 %s343, %s344
        %s346 = smul.addr %s345, 8
        %s347 = scalar_lea.vmem %s2, %s346
        %s348 = smul.u32 %s23, 8
        %s349 = sadd.s32 %s348, 8
        %p350 = scmp.lt.s32.totalorder %s349, 15
        %s351 = scalar_select %p350, %s349, 15
        %s352 = smul.u32 2, %s351
      $region40: #{conv_block.3} parent=27 // pred_fallthru
        _
    $region28: #{conv_block.3} parent=5 // pred_fallthru
      _
    %p353 = scmp.le.s32.totalorder 1, %s15
    %p354 = scmp.lt.s32.totalorder %s15, 5
    %p355 = pnand %p353, %p354
    %p356 = pneg %p355
    // Predicated region
    $region41: #{conv_block.3} parent=5 // pred_check
      _
    $region42: #{conv_block.3} parent=5 // pred_check_branch
      %358 = sbr.rel (%p355) target = $region44
    $region43: #{conv_block.3} parent=5 // pred_region
      %s359 = ssub.s32 %s15, 1
      %s360 = smul.u32 16, %s25
      %p361 = scmp.lt.s32.totalorder %s24, 1
      %s362 = scalar_select %p361, %s24, 1
      %p363 = scmp.lt.s32.totalorder %s360, 31
      %s364 = scalar_select %p363, %s360, 31
      %s365 = smul.addr %s362, 32
      %s366 = sadd.s32 %s364, %s365
      %s367 = smul.addr %s366, 8
      %s368 = scalar_lea.vmem %s0, %s367
      %p369 = pneg %p55
      %p370 = pneg %p52
      %s371 = smul.u32 %s25, 8
      %s372 = ssub.s32 %s371, 1
      %p373 = scmp.gt.s32.totalorder %s372, 0
      %s374 = scalar_select %p373, %s372, 0
      %s375 = smul.u32 2, %s374
      %p376 = scmp.lt.s32.totalorder %s24, 1
      %s377 = scalar_select %p376, %s24, 1
      %p378 = scmp.lt.s32.totalorder %s375, 31
      %s379 = scalar_select %p378, %s375, 31
      %s380 = smul.addr %s377, 32
      %s381 = sadd.s32 %s379, %s380
      %s382 = smul.addr %s381, 8
      %s383 = scalar_lea.vmem %s1, %s382
      %p384 = pneg %p91
      %p385 = pneg %p88
      %s386 = smul.u32 %s25, 8
      %s387 = sadd.s32 %s386, 8
      %p388 = scmp.lt.s32.totalorder %s387, 15
      %s389 = scalar_select %p388, %s387, 15
      %s390 = smul.u32 2, %s389
      %p391 = scmp.lt.s32.totalorder %s24, 1
      %s392 = scalar_select %p391, %s24, 1
      %p393 = scmp.lt.s32.totalorder %s390, 31
      %s394 = scalar_select %p393, %s390, 31
      %s395 = smul.addr %s392, 32
      %s396 = sadd.s32 %s394, %s395
      %s397 = smul.addr %s396, 8
      %s398 = scalar_lea.vmem %s2, %s397
      %p399 = pneg %p127
      %p400 = pneg %p124
      %p401 = pneg %p148
      %p402 = pneg %p145
      %p403 = pneg %p169
      %p404 = pneg %p166
      %p405 = pneg %p190
      %p406 = pneg %p187
      %p407 = pneg %p218
      %p408 = pneg %p215
      %s409 = smul.u32 16, %s25
      %p410 = scmp.lt.s32.totalorder %s24, 1
      %s411 = scalar_select %p410, %s24, 1
      %p412 = scmp.lt.s32.totalorder %s409, 31
      %s413 = scalar_select %p412, %s409, 31
      %s414 = smul.addr %s411, 32
      %s415 = sadd.s32 %s413, %s414
      %s416 = smul.addr %s415, 8
      %s417 = scalar_lea.vmem %s6, %s416
      %p418 = pneg %p244
      %p419 = pneg %p241
      %p420 = scmp.lt.s32.totalorder %s24, 1
      %s421 = scalar_select %p420, %s24, 1
      %s422 = scalar_lea.vmem %s7, %s421
      %p423 = pneg %p270
      %p424 = pneg %p267
      %p425 = scmp.lt.s32.totalorder %s24, 1
      %s426 = scalar_select %p425, %s24, 1
      %s427 = scalar_lea.vmem %s8, %s426
      %s428 = smul.u32 16, %s25
      %p429 = scmp.lt.s32.totalorder %s24, 1
      %s430 = scalar_select %p429, %s24, 1
      %p431 = scmp.lt.s32.totalorder %s428, 31
      %s432 = scalar_select %p431, %s428, 31
      %s433 = smul.addr %s430, 32
      %s434 = sadd.s32 %s432, %s433
      %s435 = smul.addr %s434, 8
      %s436 = scalar_lea.vmem %s0, %s435
      %s437 = smul.u32 16, %s25
      %s438 = smul.u32 %s25, 8
      %s439 = ssub.s32 %s438, 1
      %p440 = scmp.gt.s32.totalorder %s439, 0
      %s441 = scalar_select %p440, %s439, 0
      %s442 = smul.u32 2, %s441
      %p443 = scmp.lt.s32.totalorder %s24, 1
      %s444 = scalar_select %p443, %s24, 1
      %p445 = scmp.lt.s32.totalorder %s442, 31
      %s446 = scalar_select %p445, %s442, 31
      %s447 = smul.addr %s444, 32
      %s448 = sadd.s32 %s446, %s447
      %s449 = smul.addr %s448, 8
      %s450 = scalar_lea.vmem %s1, %s449
      %s451 = smul.u32 %s25, 8
      %s452 = ssub.s32 %s451, 1
      %p453 = scmp.gt.s32.totalorder %s452, 0
      %s454 = scalar_select %p453, %s452, 0
      %s455 = smul.u32 2, %s454
      %s456 = smul.u32 %s25, 8
      %s457 = sadd.s32 %s456, 8
      %p458 = scmp.lt.s32.totalorder %s457, 15
      %s459 = scalar_select %p458, %s457, 15
      %s460 = smul.u32 2, %s459
      %p461 = scmp.lt.s32.totalorder %s24, 1
      %s462 = scalar_select %p461, %s24, 1
      %p463 = scmp.lt.s32.totalorder %s460, 31
      %s464 = scalar_select %p463, %s460, 31
      %s465 = smul.addr %s462, 32
      %s466 = sadd.s32 %s464, %s465
      %s467 = smul.addr %s466, 8
      %s468 = scalar_lea.vmem %s2, %s467
      %s469 = smul.u32 %s25, 8
      %s470 = sadd.s32 %s469, 8
      %p471 = scmp.lt.s32.totalorder %s470, 15
      %s472 = scalar_select %p471, %s470, 15
      %s473 = smul.u32 2, %s472
      %s474 = smul.u32 16, %s25
      %p475 = scmp.lt.s32.totalorder %s24, 1
      %s476 = scalar_select %p475, %s24, 1
      %p477 = scmp.lt.s32.totalorder %s474, 31
      %s478 = scalar_select %p477, %s474, 31
      %s479 = smul.addr %s476, 32
      %s480 = sadd.s32 %s478, %s479
      %s481 = smul.addr %s480, 8
      %s482 = scalar_lea.vmem %s6, %s481
      %s483 = smul.u32 16, %s25
      %p484 = scmp.lt.s32.totalorder %s24, 1
      %s485 = scalar_select %p484, %s24, 1
      %s486 = scalar_lea.vmem %s7, %s485
      %p487 = scmp.lt.s32.totalorder %s24, 1
      %s488 = scalar_select %p487, %s24, 1
      %s489 = scalar_lea.vmem %s8, %s488
      %v490 = vld [vmem:[%s436] sm:$0xff]
      %v491 = vld [vmem:[%s436 + $0x8] sm:$0xff]
      %v492 = vld [vmem:[%s436 + $0x10] sm:$0xff]
      %v493 = vld [vmem:[%s436 + $0x18] sm:$0xff]
      %v494 = vld [vmem:[%s436 + $0x20] sm:$0xff]
      %v495 = vld [vmem:[%s436 + $0x28] sm:$0xff]
      %v496 = vld [vmem:[%s436 + $0x30] sm:$0xff]
      %v497 = vld [vmem:[%s436 + $0x38] sm:$0xff]
      %v498 = vld [vmem:[%s436 + $0x40] sm:$0xff]
      %v499 = vld [vmem:[%s436 + $0x48] sm:$0xff]
      %v500 = vld [vmem:[%s436 + $0x50] sm:$0xff]
      %v501 = vld [vmem:[%s436 + $0x58] sm:$0xff]
      %v502 = vld [vmem:[%s436 + $0x60] sm:$0xff]
      %v503 = vld [vmem:[%s436 + $0x68] sm:$0xff]
      %v504 = vld [vmem:[%s436 + $0x70] sm:$0xff]
      %v505 = vld [vmem:[%s436 + $0x78] sm:$0xff]
      %v506 = vld [vmem:[%s450] sm:$0xff]
      %v507 = vld [vmem:[%s450 + $0x8] sm:$0xff]
      %v508 = vld [vmem:[%s468] sm:$0xff]
      %v509 = vld [vmem:[%s468 + $0x8] sm:$0xff]
      %p510 = scmp.eq.s32.totalorder %s25, 0
      %s511 = scalar_select %p510, 1, 0
      %v512 = vstv %s511
      %vm513 = vcmp.eq.s32.totalorder %v512, 1
      %v514 = vsel %vm513, 0.0, %v506
      %v515 = vsel %vm513, 0.0, %v507
      %p516 = scmp.eq.s32.totalorder %s25, 1
      %s517 = scalar_select %p516, 1, 0
      %v518 = vstv %s517
      %vm519 = vcmp.eq.s32.totalorder %v518, 1
      %v520 = vsel %vm519, 0.0, %v508
      %v521 = vsel %vm519, 0.0, %v509
      %vm522 = vcmask 31744
      %523 = vst.msk [vmem:[#allocation2] sm:$0xff] %vm522, 0.0
      %524 = vst.msk [vmem:[#allocation2 + $0x8] sm:$0xff] %vm522, 0.0
      %vm525 = vcmask 25600
      %526 = vst.msk [vmem:[#allocation2 + $0x10] sm:$0x3] %vm525, 0.0
      %527 = vst.msk [vmem:[#allocation2 + $0x18] sm:$0xff] %vm522, 0.0
      %528 = vst.msk [vmem:[#allocation2 + $0x20] sm:$0xff] %vm522, 0.0
      %529 = vst.msk [vmem:[#allocation2 + $0x28] sm:$0x3] %vm525, 0.0
      %530 = vst.msk [vmem:[#allocation2 + $0x30] sm:$0xff] %vm522, 0.0
      %531 = vst.msk [vmem:[#allocation2 + $0x38] sm:$0xff] %vm522, 0.0
      %532 = vst.msk [vmem:[#allocation2 + $0x40] sm:$0x3] %vm525, 0.0
      %533 = vst.msk [vmem:[#allocation2 + $0x48] sm:$0xff] %vm522, 0.0
      %534 = vst.msk [vmem:[#allocation2 + $0x50] sm:$0xff] %vm522, 0.0
      %535 = vst.msk [vmem:[#allocation2 + $0x58] sm:$0x3] %vm525, 0.0
      %536 = vst.msk [vmem:[#allocation2 + $0x60] sm:$0xff] %vm522, 0.0
      %537 = vst.msk [vmem:[#allocation2 + $0x68] sm:$0xff] %vm522, 0.0
      %538 = vst.msk [vmem:[#allocation2 + $0x70] sm:$0x3] %vm525, 0.0
      %539 = vst.msk [vmem:[#allocation2 + $0x78] sm:$0xff] %vm522, 0.0
      %540 = vst.msk [vmem:[#allocation2 + $0x80] sm:$0xff] %vm522, 0.0
      %541 = vst.msk [vmem:[#allocation2 + $0x88] sm:$0x3] %vm525, 0.0
      %542 = vst.msk [vmem:[#allocation2 + $0x90] sm:$0xff] %vm522, 0.0
      %543 = vst.msk [vmem:[#allocation2 + $0x98] sm:$0xff] %vm522, 0.0
      %544 = vst.msk [vmem:[#allocation2 + $0xa0] sm:$0x3] %vm525, 0.0
      %545 = vst.msk [vmem:[#allocation2 + $0xa8] sm:$0xff] %vm522, 0.0
      %546 = vst.msk [vmem:[#allocation2 + $0xb0] sm:$0xff] %vm522, 0.0
      %547 = vst.msk [vmem:[#allocation2 + $0xb8] sm:$0x3] %vm525, 0.0
      %548 = vst.msk [vmem:[#allocation2 + $0xc0] sm:$0xff] %vm522, 0.0
      %549 = vst.msk [vmem:[#allocation2 + $0xc8] sm:$0xff] %vm522, 0.0
      %550 = vst.msk [vmem:[#allocation2 + $0xd0] sm:$0x3] %vm525, 0.0
      %551 = vst.msk [vmem:[#allocation2 + $0xd8] sm:$0xff] %vm522, 0.0
      %552 = vst.msk [vmem:[#allocation2 + $0xe0] sm:$0xff] %vm522, 0.0
      %553 = vst.msk [vmem:[#allocation2 + $0xe8] sm:$0x3] %vm525, 0.0
      %s554 = scalar_lea.vmem [#allocation2], 24
      %555 = vst.msk [vmem:[%s554 + $0x1] sm:$0xff] %vm522, %v490
      %556 = vst.msk [vmem:[%s554 + $0x9] sm:$0xff] %vm522, %v491
      %557 = vst.msk [vmem:[%s554 + $0x19] sm:$0xff] %vm522, %v492
      %558 = vst.msk [vmem:[%s554 + $0x21] sm:$0xff] %vm522, %v493
      %559 = vst.msk [vmem:[%s554 + $0x31] sm:$0xff] %vm522, %v494
      %560 = vst.msk [vmem:[%s554 + $0x39] sm:$0xff] %vm522, %v495
      %561 = vst.msk [vmem:[%s554 + $0x49] sm:$0xff] %vm522, %v496
      %562 = vst.msk [vmem:[%s554 + $0x51] sm:$0xff] %vm522, %v497
      %563 = vst.msk [vmem:[%s554 + $0x61] sm:$0xff] %vm522, %v498
      %564 = vst.msk [vmem:[%s554 + $0x69] sm:$0xff] %vm522, %v499
      %565 = vst.msk [vmem:[%s554 + $0x79] sm:$0xff] %vm522, %v500
      %566 = vst.msk [vmem:[%s554 + $0x81] sm:$0xff] %vm522, %v501
      %567 = vst.msk [vmem:[%s554 + $0x91] sm:$0xff] %vm522, %v502
      %568 = vst.msk [vmem:[%s554 + $0x99] sm:$0xff] %vm522, %v503
      %569 = vst.msk [vmem:[%s554 + $0xa9] sm:$0xff] %vm522, %v504
      %570 = vst.msk [vmem:[%s554 + $0xb1] sm:$0xff] %vm522, %v505
      %571 = vst.msk [vmem:[#allocation2 + $0x1] sm:$0xff] %vm522, %v514
      %572 = vst.msk [vmem:[#allocation2 + $0x9] sm:$0xff] %vm522, %v515
      %s573 = scalar_lea.vmem [#allocation2], 216
      %574 = vst.msk [vmem:[%s573 + $0x1] sm:$0xff] %vm522, %v520
      %575 = vst.msk [vmem:[%s573 + $0x9] sm:$0xff] %vm522, %v521
      %v576 = vld [vmem:[#allocation2] sm:$0xff]
      %v577 = vld [vmem:[#allocation2 + $0x8] sm:$0xff]
      %v578 = vld [vmem:[#allocation2 + $0x18] sm:$0xff]
      %v579 = vld [vmem:[#allocation2 + $0x20] sm:$0xff]
      %v580 = vld [vmem:[#allocation2 + $0x30] sm:$0xff]
      %v581 = vld [vmem:[#allocation2 + $0x38] sm:$0xff]
      %v582 = vld [vmem:[#allocation2 + $0x48] sm:$0xff]
      %v583 = vld [vmem:[#allocation2 + $0x50] sm:$0xff]
      %v584 = vld [vmem:[#allocation2 + $0x60] sm:$0xff]
      %v585 = vld [vmem:[#allocation2 + $0x68] sm:$0xff]
      %v586 = vld [vmem:[#allocation2 + $0x78] sm:$0xff]
      %v587 = vld [vmem:[#allocation2 + $0x80] sm:$0xff]
      %v588 = vld [vmem:[#allocation2 + $0x90] sm:$0xff]
      %v589 = vld [vmem:[#allocation2 + $0x98] sm:$0xff]
      %v590 = vld [vmem:[#allocation2 + $0xa8] sm:$0xff]
      %v591 = vld [vmem:[#allocation2 + $0xb0] sm:$0xff]
      %592 = vst.msk [vmem:[#allocation3] sm:$0xff] %vm522, %v576
      %593 = vst.msk [vmem:[#allocation3 + $0x8] sm:$0xff] %vm522, %v577
      %594 = vst.msk [vmem:[#allocation3 + $0x10] sm:$0xff] %vm522, %v578
      %595 = vst.msk [vmem:[#allocation3 + $0x18] sm:$0xff] %vm522, %v579
      %596 = vst.msk [vmem:[#allocation3 + $0x20] sm:$0xff] %vm522, %v580
      %597 = vst.msk [vmem:[#allocation3 + $0x28] sm:$0xff] %vm522, %v581
      %598 = vst.msk [vmem:[#allocation3 + $0x30] sm:$0xff] %vm522, %v582
      %599 = vst.msk [vmem:[#allocation3 + $0x38] sm:$0xff] %vm522, %v583
      %600 = vst.msk [vmem:[#allocation3 + $0x40] sm:$0xff] %vm522, %v584
      %601 = vst.msk [vmem:[#allocation3 + $0x48] sm:$0xff] %vm522, %v585
      %602 = vst.msk [vmem:[#allocation3 + $0x50] sm:$0xff] %vm522, %v586
      %603 = vst.msk [vmem:[#allocation3 + $0x58] sm:$0xff] %vm522, %v587
      %604 = vst.msk [vmem:[#allocation3 + $0x60] sm:$0xff] %vm522, %v588
      %605 = vst.msk [vmem:[#allocation3 + $0x68] sm:$0xff] %vm522, %v589
      %606 = vst.msk [vmem:[#allocation3 + $0x70] sm:$0xff] %vm522, %v590
      %607 = vst.msk [vmem:[#allocation3 + $0x78] sm:$0xff] %vm522, %v591
      %v608 = vld [vmem:[#allocation2 + $0x1] sm:$0xff]
      %v609 = vld [vmem:[#allocation2 + $0x9] sm:$0xff]
      %v610 = vld [vmem:[#allocation2 + $0x19] sm:$0xff]
      %v611 = vld [vmem:[#allocation2 + $0x21] sm:$0xff]
      %v612 = vld [vmem:[#allocation2 + $0x31] sm:$0xff]
      %v613 = vld [vmem:[#allocation2 + $0x39] sm:$0xff]
      %v614 = vld [vmem:[#allocation2 + $0x49] sm:$0xff]
      %v615 = vld [vmem:[#allocation2 + $0x51] sm:$0xff]
      %v616 = vld [vmem:[#allocation2 + $0x61] sm:$0xff]
      %v617 = vld [vmem:[#allocation2 + $0x69] sm:$0xff]
      %v618 = vld [vmem:[#allocation2 + $0x79] sm:$0xff]
      %v619 = vld [vmem:[#allocation2 + $0x81] sm:$0xff]
      %v620 = vld [vmem:[#allocation2 + $0x91] sm:$0xff]
      %v621 = vld [vmem:[#allocation2 + $0x99] sm:$0xff]
      %v622 = vld [vmem:[#allocation2 + $0xa9] sm:$0xff]
      %v623 = vld [vmem:[#allocation2 + $0xb1] sm:$0xff]
      %640 = vrot.lane.b32.xlu0 %v608, 4
      %v641 = vpop.permute.xlu0 %640
      %642 = vrot.lane.b32.xlu0 %v609, 4
      %v643 = vpop.permute.xlu0 %642
      %644 = vrot.lane.b32.xlu0 %v610, 4
      %v645 = vpop.permute.xlu0 %644
      %646 = vrot.lane.b32.xlu0 %v611, 4
      %v647 = vpop.permute.xlu0 %646
      %648 = vrot.lane.b32.xlu0 %v612, 4
      %v649 = vpop.permute.xlu0 %648
      %650 = vrot.lane.b32.xlu0 %v613, 4
      %v651 = vpop.permute.xlu0 %650
      %652 = vrot.lane.b32.xlu0 %v614, 4
      %v653 = vpop.permute.xlu0 %652
      %654 = vrot.lane.b32.xlu0 %v615, 4
      %v655 = vpop.permute.xlu0 %654
      %656 = vrot.lane.b32.xlu0 %v616, 4
      %v657 = vpop.permute.xlu0 %656
      %658 = vrot.lane.b32.xlu0 %v617, 4
      %v659 = vpop.permute.xlu0 %658
      %660 = vrot.lane.b32.xlu0 %v618, 4
      %v661 = vpop.permute.xlu0 %660
      %662 = vrot.lane.b32.xlu0 %v619, 4
      %v663 = vpop.permute.xlu0 %662
      %664 = vrot.lane.b32.xlu0 %v620, 4
      %v665 = vpop.permute.xlu0 %664
      %666 = vrot.lane.b32.xlu0 %v621, 4
      %v667 = vpop.permute.xlu0 %666
      %668 = vrot.lane.b32.xlu0 %v622, 4
      %v669 = vpop.permute.xlu0 %668
      %670 = vrot.lane.b32.xlu0 %v623, 4
      %v671 = vpop.permute.xlu0 %670
      %vm688 = vcmask 64544
      %689 = vst.msk [vmem:[#allocation3] sm:$0xff] %vm688, %v641
      %690 = vst.msk [vmem:[#allocation3 + $0x8] sm:$0xff] %vm688, %v643
      %691 = vst.msk [vmem:[#allocation3 + $0x10] sm:$0xff] %vm688, %v645
      %692 = vst.msk [vmem:[#allocation3 + $0x18] sm:$0xff] %vm688, %v647
      %693 = vst.msk [vmem:[#allocation3 + $0x20] sm:$0xff] %vm688, %v649
      %694 = vst.msk [vmem:[#allocation3 + $0x28] sm:$0xff] %vm688, %v651
      %695 = vst.msk [vmem:[#allocation3 + $0x30] sm:$0xff] %vm688, %v653
      %696 = vst.msk [vmem:[#allocation3 + $0x38] sm:$0xff] %vm688, %v655
      %697 = vst.msk [vmem:[#allocation3 + $0x40] sm:$0xff] %vm688, %v657
      %698 = vst.msk [vmem:[#allocation3 + $0x48] sm:$0xff] %vm688, %v659
      %699 = vst.msk [vmem:[#allocation3 + $0x50] sm:$0xff] %vm688, %v661
      %700 = vst.msk [vmem:[#allocation3 + $0x58] sm:$0xff] %vm688, %v663
      %701 = vst.msk [vmem:[#allocation3 + $0x60] sm:$0xff] %vm688, %v665
      %702 = vst.msk [vmem:[#allocation3 + $0x68] sm:$0xff] %vm688, %v667
      %703 = vst.msk [vmem:[#allocation3 + $0x70] sm:$0xff] %vm688, %v669
      %704 = vst.msk [vmem:[#allocation3 + $0x78] sm:$0xff] %vm688, %v671
      %v705 = vld [vmem:[#allocation2 + $0x2] sm:$0xff]
      %v706 = vld [vmem:[#allocation2 + $0xa] sm:$0xff]
      %v707 = vld [vmem:[#allocation2 + $0x1a] sm:$0xff]
      %v708 = vld [vmem:[#allocation2 + $0x22] sm:$0xff]
      %v709 = vld [vmem:[#allocation2 + $0x32] sm:$0xff]
      %v710 = vld [vmem:[#allocation2 + $0x3a] sm:$0xff]
      %v711 = vld [vmem:[#allocation2 + $0x4a] sm:$0xff]
      %v712 = vld [vmem:[#allocation2 + $0x52] sm:$0xff]
      %v713 = vld [vmem:[#allocation2 + $0x62] sm:$0xff]
      %v714 = vld [vmem:[#allocation2 + $0x6a] sm:$0xff]
      %v715 = vld [vmem:[#allocation2 + $0x7a] sm:$0xff]
      %v716 = vld [vmem:[#allocation2 + $0x82] sm:$0xff]
      %v717 = vld [vmem:[#allocation2 + $0x92] sm:$0xff]
      %v718 = vld [vmem:[#allocation2 + $0x9a] sm:$0xff]
      %v719 = vld [vmem:[#allocation2 + $0xaa] sm:$0xff]
      %v720 = vld [vmem:[#allocation2 + $0xb2] sm:$0xff]
      %737 = vrot.lane.b32.xlu0 %v705, 8
      %v738 = vpop.permute.xlu0 %737
      %739 = vrot.lane.b32.xlu0 %v706, 8
      %v740 = vpop.permute.xlu0 %739
      %741 = vrot.lane.b32.xlu0 %v707, 8
      %v742 = vpop.permute.xlu0 %741
      %743 = vrot.lane.b32.xlu0 %v708, 8
      %v744 = vpop.permute.xlu0 %743
      %745 = vrot.lane.b32.xlu0 %v709, 8
      %v746 = vpop.permute.xlu0 %745
      %747 = vrot.lane.b32.xlu0 %v710, 8
      %v748 = vpop.permute.xlu0 %747
      %749 = vrot.lane.b32.xlu0 %v711, 8
      %v750 = vpop.permute.xlu0 %749
      %751 = vrot.lane.b32.xlu0 %v712, 8
      %v752 = vpop.permute.xlu0 %751
      %753 = vrot.lane.b32.xlu0 %v713, 8
      %v754 = vpop.permute.xlu0 %753
      %755 = vrot.lane.b32.xlu0 %v714, 8
      %v756 = vpop.permute.xlu0 %755
      %757 = vrot.lane.b32.xlu0 %v715, 8
      %v758 = vpop.permute.xlu0 %757
      %759 = vrot.lane.b32.xlu0 %v716, 8
      %v760 = vpop.permute.xlu0 %759
      %761 = vrot.lane.b32.xlu0 %v717, 8
      %v762 = vpop.permute.xlu0 %761
      %763 = vrot.lane.b32.xlu0 %v718, 8
      %v764 = vpop.permute.xlu0 %763
      %765 = vrot.lane.b32.xlu0 %v719, 8
      %v766 = vpop.permute.xlu0 %765
      %767 = vrot.lane.b32.xlu0 %v720, 8
      %v768 = vpop.permute.xlu0 %767
      %vm785 = vcmask 97344
      %786 = vst.msk [vmem:[#allocation3] sm:$0xff] %vm785, %v738
      %787 = vst.msk [vmem:[#allocation3 + $0x8] sm:$0xff] %vm785, %v740
      %788 = vst.msk [vmem:[#allocation3 + $0x10] sm:$0xff] %vm785, %v742
      %789 = vst.msk [vmem:[#allocation3 + $0x18] sm:$0xff] %vm785, %v744
      %790 = vst.msk [vmem:[#allocation3 + $0x20] sm:$0xff] %vm785, %v746
      %791 = vst.msk [vmem:[#allocation3 + $0x28] sm:$0xff] %vm785, %v748
      %792 = vst.msk [vmem:[#allocation3 + $0x30] sm:$0xff] %vm785, %v750
      %793 = vst.msk [vmem:[#allocation3 + $0x38] sm:$0xff] %vm785, %v752
      %794 = vst.msk [vmem:[#allocation3 + $0x40] sm:$0xff] %vm785, %v754
      %795 = vst.msk [vmem:[#allocation3 + $0x48] sm:$0xff] %vm785, %v756
      %796 = vst.msk [vmem:[#allocation3 + $0x50] sm:$0xff] %vm785, %v758
      %797 = vst.msk [vmem:[#allocation3 + $0x58] sm:$0xff] %vm785, %v760
      %798 = vst.msk [vmem:[#allocation3 + $0x60] sm:$0xff] %vm785, %v762
      %799 = vst.msk [vmem:[#allocation3 + $0x68] sm:$0xff] %vm785, %v764
      %800 = vst.msk [vmem:[#allocation3 + $0x70] sm:$0xff] %vm785, %v766
      %801 = vst.msk [vmem:[#allocation3 + $0x78] sm:$0xff] %vm785, %v768
      %v802 = vld [vmem:[%s554] sm:$0xff]
      %v803 = vld [vmem:[%s554 + $0x8] sm:$0xff]
      %v804 = vld [vmem:[%s554 + $0x18] sm:$0xff]
      %v805 = vld [vmem:[%s554 + $0x20] sm:$0xff]
      %v806 = vld [vmem:[%s554 + $0x30] sm:$0xff]
      %v807 = vld [vmem:[%s554 + $0x38] sm:$0xff]
      %v808 = vld [vmem:[%s554 + $0x48] sm:$0xff]
      %v809 = vld [vmem:[%s554 + $0x50] sm:$0xff]
      %v810 = vld [vmem:[%s554 + $0x60] sm:$0xff]
      %v811 = vld [vmem:[%s554 + $0x68] sm:$0xff]
      %v812 = vld [vmem:[%s554 + $0x78] sm:$0xff]
      %v813 = vld [vmem:[%s554 + $0x80] sm:$0xff]
      %v814 = vld [vmem:[%s554 + $0x90] sm:$0xff]
      %v815 = vld [vmem:[%s554 + $0x98] sm:$0xff]
      %v816 = vld [vmem:[%s554 + $0xa8] sm:$0xff]
      %v817 = vld [vmem:[%s554 + $0xb0] sm:$0xff]
      %834 = vrot.lane.b32.xlu0 %v802, 12
      %v835 = vpop.permute.xlu0 %834
      %836 = vrot.lane.b32.xlu0 %v803, 12
      %v837 = vpop.permute.xlu0 %836
      %838 = vrot.lane.b32.xlu0 %v804, 12
      %v839 = vpop.permute.xlu0 %838
      %840 = vrot.lane.b32.xlu0 %v805, 12
      %v841 = vpop.permute.xlu0 %840
      %842 = vrot.lane.b32.xlu0 %v806, 12
      %v843 = vpop.permute.xlu0 %842
      %844 = vrot.lane.b32.xlu0 %v807, 12
      %v845 = vpop.permute.xlu0 %844
      %846 = vrot.lane.b32.xlu0 %v808, 12
      %v847 = vpop.permute.xlu0 %846
      %848 = vrot.lane.b32.xlu0 %v809, 12
      %v849 = vpop.permute.xlu0 %848
      %850 = vrot.lane.b32.xlu0 %v810, 12
      %v851 = vpop.permute.xlu0 %850
      %852 = vrot.lane.b32.xlu0 %v811, 12
      %v853 = vpop.permute.xlu0 %852
      %854 = vrot.lane.b32.xlu0 %v812, 12
      %v855 = vpop.permute.xlu0 %854
      %856 = vrot.lane.b32.xlu0 %v813, 12
      %v857 = vpop.permute.xlu0 %856
      %858 = vrot.lane.b32.xlu0 %v814, 12
      %v859 = vpop.permute.xlu0 %858
      %860 = vrot.lane.b32.xlu0 %v815, 12
      %v861 = vpop.permute.xlu0 %860
      %862 = vrot.lane.b32.xlu0 %v816, 12
      %v863 = vpop.permute.xlu0 %862
      %864 = vrot.lane.b32.xlu0 %v817, 12
      %v865 = vpop.permute.xlu0 %864
      %vm882 = vcmask 130144
      %883 = vst.msk [vmem:[#allocation3] sm:$0xff] %vm882, %v835
      %884 = vst.msk [vmem:[#allocation3 + $0x8] sm:$0xff] %vm882, %v837
      %885 = vst.msk [vmem:[#allocation3 + $0x10] sm:$0xff] %vm882, %v839
      %886 = vst.msk [vmem:[#allocation3 + $0x18] sm:$0xff] %vm882, %v841
      %887 = vst.msk [vmem:[#allocation3 + $0x20] sm:$0xff] %vm882, %v843
      %888 = vst.msk [vmem:[#allocation3 + $0x28] sm:$0xff] %vm882, %v845
      %889 = vst.msk [vmem:[#allocation3 + $0x30] sm:$0xff] %vm882, %v847
      %890 = vst.msk [vmem:[#allocation3 + $0x38] sm:$0xff] %vm882, %v849
      %891 = vst.msk [vmem:[#allocation3 + $0x40] sm:$0xff] %vm882, %v851
      %892 = vst.msk [vmem:[#allocation3 + $0x48] sm:$0xff] %vm882, %v853
      %893 = vst.msk [vmem:[#allocation3 + $0x50] sm:$0xff] %vm882, %v855
      %894 = vst.msk [vmem:[#allocation3 + $0x58] sm:$0xff] %vm882, %v857
      %895 = vst.msk [vmem:[#allocation3 + $0x60] sm:$0xff] %vm882, %v859
      %896 = vst.msk [vmem:[#allocation3 + $0x68] sm:$0xff] %vm882, %v861
      %897 = vst.msk [vmem:[#allocation3 + $0x70] sm:$0xff] %vm882, %v863
      %898 = vst.msk [vmem:[#allocation3 + $0x78] sm:$0xff] %vm882, %v865
      %v899 = vld [vmem:[%s554 + $0x1] sm:$0xff]
      %v900 = vld [vmem:[%s554 + $0x9] sm:$0xff]
      %v901 = vld [vmem:[%s554 + $0x19] sm:$0xff]
      %v902 = vld [vmem:[%s554 + $0x21] sm:$0xff]
      %v903 = vld [vmem:[%s554 + $0x31] sm:$0xff]
      %v904 = vld [vmem:[%s554 + $0x39] sm:$0xff]
      %v905 = vld [vmem:[%s554 + $0x49] sm:$0xff]
      %v906 = vld [vmem:[%s554 + $0x51] sm:$0xff]
      %v907 = vld [vmem:[%s554 + $0x61] sm:$0xff]
      %v908 = vld [vmem:[%s554 + $0x69] sm:$0xff]
      %v909 = vld [vmem:[%s554 + $0x79] sm:$0xff]
      %v910 = vld [vmem:[%s554 + $0x81] sm:$0xff]
      %v911 = vld [vmem:[%s554 + $0x91] sm:$0xff]
      %v912 = vld [vmem:[%s554 + $0x99] sm:$0xff]
      %v913 = vld [vmem:[%s554 + $0xa9] sm:$0xff]
      %v914 = vld [vmem:[%s554 + $0xb1] sm:$0xff]
      %931 = vrot.lane.b32.xlu0 %v899, 16
      %v932 = vpop.permute.xlu0 %931
      %933 = vrot.lane.b32.xlu0 %v900, 16
      %v934 = vpop.permute.xlu0 %933
      %935 = vrot.lane.b32.xlu0 %v901, 16
      %v936 = vpop.permute.xlu0 %935
      %937 = vrot.lane.b32.xlu0 %v902, 16
      %v938 = vpop.permute.xlu0 %937
      %939 = vrot.lane.b32.xlu0 %v903, 16
      %v940 = vpop.permute.xlu0 %939
      %941 = vrot.lane.b32.xlu0 %v904, 16
      %v942 = vpop.permute.xlu0 %941
      %943 = vrot.lane.b32.xlu0 %v905, 16
      %v944 = vpop.permute.xlu0 %943
      %945 = vrot.lane.b32.xlu0 %v906, 16
      %v946 = vpop.permute.xlu0 %945
      %947 = vrot.lane.b32.xlu0 %v907, 16
      %v948 = vpop.permute.xlu0 %947
      %949 = vrot.lane.b32.xlu0 %v908, 16
      %v950 = vpop.permute.xlu0 %949
      %951 = vrot.lane.b32.xlu0 %v909, 16
      %v952 = vpop.permute.xlu0 %951
      %953 = vrot.lane.b32.xlu0 %v910, 16
      %v954 = vpop.permute.xlu0 %953
      %955 = vrot.lane.b32.xlu0 %v911, 16
      %v956 = vpop.permute.xlu0 %955
      %957 = vrot.lane.b32.xlu0 %v912, 16
      %v958 = vpop.permute.xlu0 %957
      %959 = vrot.lane.b32.xlu0 %v913, 16
      %v960 = vpop.permute.xlu0 %959
      %961 = vrot.lane.b32.xlu0 %v914, 16
      %v962 = vpop.permute.xlu0 %961
      %vm979 = vcmask 162944
      %980 = vst.msk [vmem:[#allocation3] sm:$0xff] %vm979, %v932
      %981 = vst.msk [vmem:[#allocation3 + $0x8] sm:$0xff] %vm979, %v934
      %982 = vst.msk [vmem:[#allocation3 + $0x10] sm:$0xff] %vm979, %v936
      %983 = vst.msk [vmem:[#allocation3 + $0x18] sm:$0xff] %vm979, %v938
      %984 = vst.msk [vmem:[#allocation3 + $0x20] sm:$0xff] %vm979, %v940
      %985 = vst.msk [vmem:[#allocation3 + $0x28] sm:$0xff] %vm979, %v942
      %986 = vst.msk [vmem:[#allocation3 + $0x30] sm:$0xff] %vm979, %v944
      %987 = vst.msk [vmem:[#allocation3 + $0x38] sm:$0xff] %vm979, %v946
      %988 = vst.msk [vmem:[#allocation3 + $0x40] sm:$0xff] %vm979, %v948
      %989 = vst.msk [vmem:[#allocation3 + $0x48] sm:$0xff] %vm979, %v950
      %990 = vst.msk [vmem:[#allocation3 + $0x50] sm:$0xff] %vm979, %v952
      %991 = vst.msk [vmem:[#allocation3 + $0x58] sm:$0xff] %vm979, %v954
      %992 = vst.msk [vmem:[#allocation3 + $0x60] sm:$0xff] %vm979, %v956
      %993 = vst.msk [vmem:[#allocation3 + $0x68] sm:$0xff] %vm979, %v958
      %994 = vst.msk [vmem:[#allocation3 + $0x70] sm:$0xff] %vm979, %v960
      %995 = vst.msk [vmem:[#allocation3 + $0x78] sm:$0xff] %vm979, %v962
      %v996 = vld [vmem:[%s554 + $0x2] sm:$0xff]
      %v997 = vld [vmem:[%s554 + $0xa] sm:$0xff]
      %v998 = vld [vmem:[%s554 + $0x1a] sm:$0xff]
      %v999 = vld [vmem:[%s554 + $0x22] sm:$0xff]
      %v1000 = vld [vmem:[%s554 + $0x32] sm:$0xff]
      %v1001 = vld [vmem:[%s554 + $0x3a] sm:$0xff]
      %v1002 = vld [vmem:[%s554 + $0x4a] sm:$0xff]
      %v1003 = vld [vmem:[%s554 + $0x52] sm:$0xff]
      %v1004 = vld [vmem:[%s554 + $0x62] sm:$0xff]
      %v1005 = vld [vmem:[%s554 + $0x6a] sm:$0xff]
      %v1006 = vld [vmem:[%s554 + $0x7a] sm:$0xff]
      %v1007 = vld [vmem:[%s554 + $0x82] sm:$0xff]
      %v1008 = vld [vmem:[%s554 + $0x92] sm:$0xff]
      %v1009 = vld [vmem:[%s554 + $0x9a] sm:$0xff]
      %v1010 = vld [vmem:[%s554 + $0xaa] sm:$0xff]
      %v1011 = vld [vmem:[%s554 + $0xb2] sm:$0xff]
      %1028 = vrot.lane.b32.xlu0 %v996, 20
      %v1029 = vpop.permute.xlu0 %1028
      %1030 = vrot.lane.b32.xlu0 %v997, 20
      %v1031 = vpop.permute.xlu0 %1030
      %1032 = vrot.lane.b32.xlu0 %v998, 20
      %v1033 = vpop.permute.xlu0 %1032
      %1034 = vrot.lane.b32.xlu0 %v999, 20
      %v1035 = vpop.permute.xlu0 %1034
      %1036 = vrot.lane.b32.xlu0 %v1000, 20
      %v1037 = vpop.permute.xlu0 %1036
      %1038 = vrot.lane.b32.xlu0 %v1001, 20
      %v1039 = vpop.permute.xlu0 %1038
      %1040 = vrot.lane.b32.xlu0 %v1002, 20
      %v1041 = vpop.permute.xlu0 %1040
      %1042 = vrot.lane.b32.xlu0 %v1003, 20
      %v1043 = vpop.permute.xlu0 %1042
      %1044 = vrot.lane.b32.xlu0 %v1004, 20
      %v1045 = vpop.permute.xlu0 %1044
      %1046 = vrot.lane.b32.xlu0 %v1005, 20
      %v1047 = vpop.permute.xlu0 %1046
      %1048 = vrot.lane.b32.xlu0 %v1006, 20
      %v1049 = vpop.permute.xlu0 %1048
      %1050 = vrot.lane.b32.xlu0 %v1007, 20
      %v1051 = vpop.permute.xlu0 %1050
      %1052 = vrot.lane.b32.xlu0 %v1008, 20
      %v1053 = vpop.permute.xlu0 %1052
      %1054 = vrot.lane.b32.xlu0 %v1009, 20
      %v1055 = vpop.permute.xlu0 %1054
      %1056 = vrot.lane.b32.xlu0 %v1010, 20
      %v1057 = vpop.permute.xlu0 %1056
      %1058 = vrot.lane.b32.xlu0 %v1011, 20
      %v1059 = vpop.permute.xlu0 %1058
      %vm1076 = vcmask 195744
      %1077 = vst.msk [vmem:[#allocation3] sm:$0xff] %vm1076, %v1029
      %1078 = vst.msk [vmem:[#allocation3 + $0x8] sm:$0xff] %vm1076, %v1031
      %1079 = vst.msk [vmem:[#allocation3 + $0x10] sm:$0xff] %vm1076, %v1033
      %1080 = vst.msk [vmem:[#allocation3 + $0x18] sm:$0xff] %vm1076, %v1035
      %1081 = vst.msk [vmem:[#allocation3 + $0x20] sm:$0xff] %vm1076, %v1037
      %1082 = vst.msk [vmem:[#allocation3 + $0x28] sm:$0xff] %vm1076, %v1039
      %1083 = vst.msk [vmem:[#allocation3 + $0x30] sm:$0xff] %vm1076, %v1041
      %1084 = vst.msk [vmem:[#allocation3 + $0x38] sm:$0xff] %vm1076, %v1043
      %1085 = vst.msk [vmem:[#allocation3 + $0x40] sm:$0xff] %vm1076, %v1045
      %1086 = vst.msk [vmem:[#allocation3 + $0x48] sm:$0xff] %vm1076, %v1047
      %1087 = vst.msk [vmem:[#allocation3 + $0x50] sm:$0xff] %vm1076, %v1049
      %1088 = vst.msk [vmem:[#allocation3 + $0x58] sm:$0xff] %vm1076, %v1051
      %1089 = vst.msk [vmem:[#allocation3 + $0x60] sm:$0xff] %vm1076, %v1053
      %1090 = vst.msk [vmem:[#allocation3 + $0x68] sm:$0xff] %vm1076, %v1055
      %1091 = vst.msk [vmem:[#allocation3 + $0x70] sm:$0xff] %vm1076, %v1057
      %1092 = vst.msk [vmem:[#allocation3 + $0x78] sm:$0xff] %vm1076, %v1059
      %s1093 = scalar_lea.vmem [#allocation2], 48
      %v1094 = vld [vmem:[%s1093] sm:$0xff]
      %v1095 = vld [vmem:[%s1093 + $0x8] sm:$0xff]
      %v1096 = vld [vmem:[%s1093 + $0x18] sm:$0xff]
      %v1097 = vld [vmem:[%s1093 + $0x20] sm:$0xff]
      %v1098 = vld [vmem:[%s1093 + $0x30] sm:$0xff]
      %v1099 = vld [vmem:[%s1093 + $0x38] sm:$0xff]
      %v1100 = vld [vmem:[%s1093 + $0x48] sm:$0xff]
      %v1101 = vld [vmem:[%s1093 + $0x50] sm:$0xff]
      %v1102 = vld [vmem:[%s1093 + $0x60] sm:$0xff]
      %v1103 = vld [vmem:[%s1093 + $0x68] sm:$0xff]
      %v1104 = vld [vmem:[%s1093 + $0x78] sm:$0xff]
      %v1105 = vld [vmem:[%s1093 + $0x80] sm:$0xff]
      %v1106 = vld [vmem:[%s1093 + $0x90] sm:$0xff]
      %v1107 = vld [vmem:[%s1093 + $0x98] sm:$0xff]
      %v1108 = vld [vmem:[%s1093 + $0xa8] sm:$0xff]
      %v1109 = vld [vmem:[%s1093 + $0xb0] sm:$0xff]
      %1126 = vrot.lane.b32.xlu0 %v1094, 24
      %v1127 = vpop.permute.xlu0 %1126
      %1128 = vrot.lane.b32.xlu0 %v1095, 24
      %v1129 = vpop.permute.xlu0 %1128
      %1130 = vrot.lane.b32.xlu0 %v1096, 24
      %v1131 = vpop.permute.xlu0 %1130
      %1132 = vrot.lane.b32.xlu0 %v1097, 24
      %v1133 = vpop.permute.xlu0 %1132
      %1134 = vrot.lane.b32.xlu0 %v1098, 24
      %v1135 = vpop.permute.xlu0 %1134
      %1136 = vrot.lane.b32.xlu0 %v1099, 24
      %v1137 = vpop.permute.xlu0 %1136
      %1138 = vrot.lane.b32.xlu0 %v1100, 24
      %v1139 = vpop.permute.xlu0 %1138
      %1140 = vrot.lane.b32.xlu0 %v1101, 24
      %v1141 = vpop.permute.xlu0 %1140
      %1142 = vrot.lane.b32.xlu0 %v1102, 24
      %v1143 = vpop.permute.xlu0 %1142
      %1144 = vrot.lane.b32.xlu0 %v1103, 24
      %v1145 = vpop.permute.xlu0 %1144
      %1146 = vrot.lane.b32.xlu0 %v1104, 24
      %v1147 = vpop.permute.xlu0 %1146
      %1148 = vrot.lane.b32.xlu0 %v1105, 24
      %v1149 = vpop.permute.xlu0 %1148
      %1150 = vrot.lane.b32.xlu0 %v1106, 24
      %v1151 = vpop.permute.xlu0 %1150
      %1152 = vrot.lane.b32.xlu0 %v1107, 24
      %v1153 = vpop.permute.xlu0 %1152
      %1154 = vrot.lane.b32.xlu0 %v1108, 24
      %v1155 = vpop.permute.xlu0 %1154
      %1156 = vrot.lane.b32.xlu0 %v1109, 24
      %v1157 = vpop.permute.xlu0 %1156
      %vm1174 = vcmask 228544
      %1175 = vst.msk [vmem:[#allocation3] sm:$0xff] %vm1174, %v1127
      %1176 = vst.msk [vmem:[#allocation3 + $0x8] sm:$0xff] %vm1174, %v1129
      %1177 = vst.msk [vmem:[#allocation3 + $0x10] sm:$0xff] %vm1174, %v1131
      %1178 = vst.msk [vmem:[#allocation3 + $0x18] sm:$0xff] %vm1174, %v1133
      %1179 = vst.msk [vmem:[#allocation3 + $0x20] sm:$0xff] %vm1174, %v1135
      %1180 = vst.msk [vmem:[#allocation3 + $0x28] sm:$0xff] %vm1174, %v1137
      %1181 = vst.msk [vmem:[#allocation3 + $0x30] sm:$0xff] %vm1174, %v1139
      %1182 = vst.msk [vmem:[#allocation3 + $0x38] sm:$0xff] %vm1174, %v1141
      %1183 = vst.msk [vmem:[#allocation3 + $0x40] sm:$0xff] %vm1174, %v1143
      %1184 = vst.msk [vmem:[#allocation3 + $0x48] sm:$0xff] %vm1174, %v1145
      %1185 = vst.msk [vmem:[#allocation3 + $0x50] sm:$0xff] %vm1174, %v1147
      %1186 = vst.msk [vmem:[#allocation3 + $0x58] sm:$0xff] %vm1174, %v1149
      %1187 = vst.msk [vmem:[#allocation3 + $0x60] sm:$0xff] %vm1174, %v1151
      %1188 = vst.msk [vmem:[#allocation3 + $0x68] sm:$0xff] %vm1174, %v1153
      %1189 = vst.msk [vmem:[#allocation3 + $0x70] sm:$0xff] %vm1174, %v1155
      %1190 = vst.msk [vmem:[#allocation3 + $0x78] sm:$0xff] %vm1174, %v1157
      %v1191 = vld [vmem:[%s1093 + $0x1] sm:$0xff]
      %v1192 = vld [vmem:[%s1093 + $0x9] sm:$0xff]
      %v1193 = vld [vmem:[%s1093 + $0x19] sm:$0xff]
      %v1194 = vld [vmem:[%s1093 + $0x21] sm:$0xff]
      %v1195 = vld [vmem:[%s1093 + $0x31] sm:$0xff]
      %v1196 = vld [vmem:[%s1093 + $0x39] sm:$0xff]
      %v1197 = vld [vmem:[%s1093 + $0x49] sm:$0xff]
      %v1198 = vld [vmem:[%s1093 + $0x51] sm:$0xff]
      %v1199 = vld [vmem:[%s1093 + $0x61] sm:$0xff]
      %v1200 = vld [vmem:[%s1093 + $0x69] sm:$0xff]
      %v1201 = vld [vmem:[%s1093 + $0x79] sm:$0xff]
      %v1202 = vld [vmem:[%s1093 + $0x81] sm:$0xff]
      %v1203 = vld [vmem:[%s1093 + $0x91] sm:$0xff]
      %v1204 = vld [vmem:[%s1093 + $0x99] sm:$0xff]
      %v1205 = vld [vmem:[%s1093 + $0xa9] sm:$0xff]
      %v1206 = vld [vmem:[%s1093 + $0xb1] sm:$0xff]
      %1223 = vrot.lane.b32.xlu0 %v1191, 28
      %v1224 = vpop.permute.xlu0 %1223
      %1225 = vrot.lane.b32.xlu0 %v1192, 28
      %v1226 = vpop.permute.xlu0 %1225
      %1227 = vrot.lane.b32.xlu0 %v1193, 28
      %v1228 = vpop.permute.xlu0 %1227
      %1229 = vrot.lane.b32.xlu0 %v1194, 28
      %v1230 = vpop.permute.xlu0 %1229
      %1231 = vrot.lane.b32.xlu0 %v1195, 28
      %v1232 = vpop.permute.xlu0 %1231
      %1233 = vrot.lane.b32.xlu0 %v1196, 28
      %v1234 = vpop.permute.xlu0 %1233
      %1235 = vrot.lane.b32.xlu0 %v1197, 28
      %v1236 = vpop.permute.xlu0 %1235
      %1237 = vrot.lane.b32.xlu0 %v1198, 28
      %v1238 = vpop.permute.xlu0 %1237
      %1239 = vrot.lane.b32.xlu0 %v1199, 28
      %v1240 = vpop.permute.xlu0 %1239
      %1241 = vrot.lane.b32.xlu0 %v1200, 28
      %v1242 = vpop.permute.xlu0 %1241
      %1243 = vrot.lane.b32.xlu0 %v1201, 28
      %v1244 = vpop.permute.xlu0 %1243
      %1245 = vrot.lane.b32.xlu0 %v1202, 28
      %v1246 = vpop.permute.xlu0 %1245
      %1247 = vrot.lane.b32.xlu0 %v1203, 28
      %v1248 = vpop.permute.xlu0 %1247
      %1249 = vrot.lane.b32.xlu0 %v1204, 28
      %v1250 = vpop.permute.xlu0 %1249
      %1251 = vrot.lane.b32.xlu0 %v1205, 28
      %v1252 = vpop.permute.xlu0 %1251
      %1253 = vrot.lane.b32.xlu0 %v1206, 28
      %v1254 = vpop.permute.xlu0 %1253
      %vm1271 = vcmask 261344
      %1272 = vst.msk [vmem:[#allocation3] sm:$0xff] %vm1271, %v1224
      %1273 = vst.msk [vmem:[#allocation3 + $0x8] sm:$0xff] %vm1271, %v1226
      %1274 = vst.msk [vmem:[#allocation3 + $0x10] sm:$0xff] %vm1271, %v1228
      %1275 = vst.msk [vmem:[#allocation3 + $0x18] sm:$0xff] %vm1271, %v1230
      %1276 = vst.msk [vmem:[#allocation3 + $0x20] sm:$0xff] %vm1271, %v1232
      %1277 = vst.msk [vmem:[#allocation3 + $0x28] sm:$0xff] %vm1271, %v1234
      %1278 = vst.msk [vmem:[#allocation3 + $0x30] sm:$0xff] %vm1271, %v1236
      %1279 = vst.msk [vmem:[#allocation3 + $0x38] sm:$0xff] %vm1271, %v1238
      %1280 = vst.msk [vmem:[#allocation3 + $0x40] sm:$0xff] %vm1271, %v1240
      %1281 = vst.msk [vmem:[#allocation3 + $0x48] sm:$0xff] %vm1271, %v1242
      %1282 = vst.msk [vmem:[#allocation3 + $0x50] sm:$0xff] %vm1271, %v1244
      %1283 = vst.msk [vmem:[#allocation3 + $0x58] sm:$0xff] %vm1271, %v1246
      %1284 = vst.msk [vmem:[#allocation3 + $0x60] sm:$0xff] %vm1271, %v1248
      %1285 = vst.msk [vmem:[#allocation3 + $0x68] sm:$0xff] %vm1271, %v1250
      %1286 = vst.msk [vmem:[#allocation3 + $0x70] sm:$0xff] %vm1271, %v1252
      %1287 = vst.msk [vmem:[#allocation3 + $0x78] sm:$0xff] %vm1271, %v1254
      %v1288 = vld [vmem:[%s1093 + $0x2] sm:$0xff]
      %v1289 = vld [vmem:[%s1093 + $0xa] sm:$0xff]
      %v1290 = vld [vmem:[%s1093 + $0x1a] sm:$0xff]
      %v1291 = vld [vmem:[%s1093 + $0x22] sm:$0xff]
      %v1292 = vld [vmem:[%s1093 + $0x32] sm:$0xff]
      %v1293 = vld [vmem:[%s1093 + $0x3a] sm:$0xff]
      %v1294 = vld [vmem:[%s1093 + $0x4a] sm:$0xff]
      %v1295 = vld [vmem:[%s1093 + $0x52] sm:$0xff]
      %v1296 = vld [vmem:[%s1093 + $0x62] sm:$0xff]
      %v1297 = vld [vmem:[%s1093 + $0x6a] sm:$0xff]
      %v1298 = vld [vmem:[%s1093 + $0x7a] sm:$0xff]
      %v1299 = vld [vmem:[%s1093 + $0x82] sm:$0xff]
      %v1300 = vld [vmem:[%s1093 + $0x92] sm:$0xff]
      %v1301 = vld [vmem:[%s1093 + $0x9a] sm:$0xff]
      %v1302 = vld [vmem:[%s1093 + $0xaa] sm:$0xff]
      %v1303 = vld [vmem:[%s1093 + $0xb2] sm:$0xff]
      %1320 = vrot.lane.b32.xlu0 %v1288, 32
      %v1321 = vpop.permute.xlu0 %1320
      %1322 = vrot.lane.b32.xlu0 %v1289, 32
      %v1323 = vpop.permute.xlu0 %1322
      %1324 = vrot.lane.b32.xlu0 %v1290, 32
      %v1325 = vpop.permute.xlu0 %1324
      %1326 = vrot.lane.b32.xlu0 %v1291, 32
      %v1327 = vpop.permute.xlu0 %1326
      %1328 = vrot.lane.b32.xlu0 %v1292, 32
      %v1329 = vpop.permute.xlu0 %1328
      %1330 = vrot.lane.b32.xlu0 %v1293, 32
      %v1331 = vpop.permute.xlu0 %1330
      %1332 = vrot.lane.b32.xlu0 %v1294, 32
      %v1333 = vpop.permute.xlu0 %1332
      %1334 = vrot.lane.b32.xlu0 %v1295, 32
      %v1335 = vpop.permute.xlu0 %1334
      %1336 = vrot.lane.b32.xlu0 %v1296, 32
      %v1337 = vpop.permute.xlu0 %1336
      %1338 = vrot.lane.b32.xlu0 %v1297, 32
      %v1339 = vpop.permute.xlu0 %1338
      %1340 = vrot.lane.b32.xlu0 %v1298, 32
      %v1341 = vpop.permute.xlu0 %1340
      %1342 = vrot.lane.b32.xlu0 %v1299, 32
      %v1343 = vpop.permute.xlu0 %1342
      %1344 = vrot.lane.b32.xlu0 %v1300, 32
      %v1345 = vpop.permute.xlu0 %1344
      %1346 = vrot.lane.b32.xlu0 %v1301, 32
      %v1347 = vpop.permute.xlu0 %1346
      %1348 = vrot.lane.b32.xlu0 %v1302, 32
      %v1349 = vpop.permute.xlu0 %1348
      %1350 = vrot.lane.b32.xlu0 %v1303, 32
      %v1351 = vpop.permute.xlu0 %1350
      %vm1368 = vcmask 294144
      %1369 = vst.msk [vmem:[#allocation3] sm:$0xff] %vm1368, %v1321
      %1370 = vst.msk [vmem:[#allocation3 + $0x8] sm:$0xff] %vm1368, %v1323
      %1371 = vst.msk [vmem:[#allocation3 + $0x10] sm:$0xff] %vm1368, %v1325
      %1372 = vst.msk [vmem:[#allocation3 + $0x18] sm:$0xff] %vm1368, %v1327
      %1373 = vst.msk [vmem:[#allocation3 + $0x20] sm:$0xff] %vm1368, %v1329
      %1374 = vst.msk [vmem:[#allocation3 + $0x28] sm:$0xff] %vm1368, %v1331
      %1375 = vst.msk [vmem:[#allocation3 + $0x30] sm:$0xff] %vm1368, %v1333
      %1376 = vst.msk [vmem:[#allocation3 + $0x38] sm:$0xff] %vm1368, %v1335
      %1377 = vst.msk [vmem:[#allocation3 + $0x40] sm:$0xff] %vm1368, %v1337
      %1378 = vst.msk [vmem:[#allocation3 + $0x48] sm:$0xff] %vm1368, %v1339
      %1379 = vst.msk [vmem:[#allocation3 + $0x50] sm:$0xff] %vm1368, %v1341
      %1380 = vst.msk [vmem:[#allocation3 + $0x58] sm:$0xff] %vm1368, %v1343
      %1381 = vst.msk [vmem:[#allocation3 + $0x60] sm:$0xff] %vm1368, %v1345
      %1382 = vst.msk [vmem:[#allocation3 + $0x68] sm:$0xff] %vm1368, %v1347
      %1383 = vst.msk [vmem:[#allocation3 + $0x70] sm:$0xff] %vm1368, %v1349
      %1384 = vst.msk [vmem:[#allocation3 + $0x78] sm:$0xff] %vm1368, %v1351
      %v1385 = vld [vmem:[#allocation3] sm:$0xff]
      %v1386 = vld [vmem:[#allocation3 + $0x8] sm:$0xff]
      %v1387 = vld [vmem:[#allocation3 + $0x10] sm:$0xff]
      %v1388 = vld [vmem:[#allocation3 + $0x18] sm:$0xff]
      %v1389 = vld [vmem:[#allocation3 + $0x20] sm:$0xff]
      %v1390 = vld [vmem:[#allocation3 + $0x28] sm:$0xff]
      %v1391 = vld [vmem:[#allocation3 + $0x30] sm:$0xff]
      %v1392 = vld [vmem:[#allocation3 + $0x38] sm:$0xff]
      %v1393 = vld [vmem:[#allocation3 + $0x40] sm:$0xff]
      %v1394 = vld [vmem:[#allocation3 + $0x48] sm:$0xff]
      %v1395 = vld [vmem:[#allocation3 + $0x50] sm:$0xff]
      %v1396 = vld [vmem:[#allocation3 + $0x58] sm:$0xff]
      %v1397 = vld [vmem:[#allocation3 + $0x60] sm:$0xff]
      %v1398 = vld [vmem:[#allocation3 + $0x68] sm:$0xff]
      %v1399 = vld [vmem:[#allocation3 + $0x70] sm:$0xff]
      %v1400 = vld [vmem:[#allocation3 + $0x78] sm:$0xff]
      %v1401 = vld [vmem:[%s3] sm:$0xff]
      %v1402 = vld [vmem:[%s3 + $0x8] sm:$0xff]
      %v1403 = vld [vmem:[%s3 + $0x10] sm:$0xff]
      %v1404 = vld [vmem:[%s3 + $0x18] sm:$0xff]
      %v1405 = vld [vmem:[%s3 + $0x20] sm:$0xf]
      %v1406 = vld [vmem:[%s4] sm:$0x1]
      %v1408 = vlaneseq
      %v1409 = vshrl.u32 %v1408, 7
      %v1410 = vsub.s32 0, %v1409
      %v1411 = vrot.slane %v1406, %v1410
      %vm1413 = vcmask 293888
      %v1415 = vsel %vm1413, %v1385, 0
      %v1418 = vsel %vm1413, %v1386, 0
      %v1421 = vsel %vm1413, %v1387, 0
      %v1424 = vsel %vm1413, %v1388, 0
      %v1427 = vsel %vm1413, %v1389, 0
      %v1430 = vsel %vm1413, %v1390, 0
      %v1433 = vsel %vm1413, %v1391, 0
      %v1436 = vsel %vm1413, %v1392, 0
      %v1439 = vsel %vm1413, %v1393, 0
      %v1442 = vsel %vm1413, %v1394, 0
      %v1445 = vsel %vm1413, %v1395, 0
      %v1448 = vsel %vm1413, %v1396, 0
      %v1451 = vsel %vm1413, %v1397, 0
      %v1454 = vsel %vm1413, %v1398, 0
      %v1457 = vsel %vm1413, %v1399, 0
      %v1460 = vsel %vm1413, %v1400, 0
      %vm1462 = vcmask 1043456
      %v1464 = vsel %vm1462, %v1405, 0
      %1466 = vmatprep.subr.mxu0 0.0
      %1467 = vmatpush1.msra.mxu0 %v1401
      %1468 = vmatprep.subr.mxu0 0.0
      %1469 = vmatpush1.msra.mxu0 %v1402
      %1470 = vmatprep.subr.mxu0 0.0
      %1471 = vmatpush1.msra.mxu0 %v1403
      %1472 = vmatprep.subr.mxu0 0.0
      %1473 = vmatpush1.msra.mxu0 %v1404
      %1474 = vmatprep.subr.mxu0 0.0
      %1475 = vmatpush1.msra.mxu0 %v1464
      %1476 = vmatprep.subr.mxu0 0.0
      %1477 = vmatpush1.msra.mxu0 0.0
      %1478 = vmatprep.subr.mxu0 0.0
      %1479 = vmatpush1.msra.mxu0 0.0
      %1480 = vmatprep.subr.mxu0 0.0
      %1481 = vmatpush1.msra.mxu0 0.0
      %1482 = vmatprep.subr.mxu0 0.0
      %1483 = vmatpush1.msra.mxu0 0.0
      %1484 = vmatprep.subr.mxu0 0.0
      %1485 = vmatpush1.msra.mxu0 0.0
      %1486 = vmatprep.subr.mxu0 0.0
      %1487 = vmatpush1.msra.mxu0 0.0
      %1488 = vmatprep.subr.mxu0 0.0
      %1489 = vmatpush1.msra.mxu0 0.0
      %1490 = vmatprep.subr.mxu0 0.0
      %1491 = vmatpush1.msra.mxu0 0.0
      %1492 = vmatprep.subr.mxu0 0.0
      %1493 = vmatpush1.msra.mxu0 0.0
      %1494 = vmatprep.subr.mxu0 0.0
      %1495 = vmatpush1.msra.mxu0 0.0
      %1496 = vmatprep.subr.mxu0 0.0
      %1497 = vmatpush1.msra.mxu0 0.0
      %1498 = vmatprep.subr.mxu0 0.0
      %1499 = vmatpush1.msra.mxu0 0.0
      %1500 = vmatprep.subr.mxu0 0.0
      %1501 = vmatpush1.msra.mxu0 0.0
      %1502 = vmatprep.subr.mxu0 0.0
      %1503 = vmatpush1.msra.mxu0 0.0
      %1504 = vmatprep.subr.mxu0 0.0
      %1505 = vmatpush1.msra.mxu0 0.0
      %1506 = vmatprep.subr.mxu0 0.0
      %1507 = vmatpush1.msra.mxu0 0.0
      %1508 = vmatprep.subr.mxu0 0.0
      %1509 = vmatpush1.msra.mxu0 0.0
      %1510 = vmatprep.subr.mxu0 0.0
      %1511 = vmatpush1.msra.mxu0 0.0
      %1512 = vmatprep.subr.mxu0 0.0
      %1513 = vmatpush1.msra.mxu0 0.0
      %1514 = vmatprep.subr.mxu0 0.0
      %1515 = vmatpush1.msra.mxu0 0.0
      %1516 = vmatprep.subr.mxu0 0.0
      %1517 = vmatpush1.msra.mxu0 0.0
      %1518 = vmatprep.subr.mxu0 0.0
      %1519 = vmatpush1.msra.mxu0 0.0
      %1520 = vmatprep.subr.mxu0 0.0
      %1521 = vmatpush1.msra.mxu0 0.0
      %1522 = vmatprep.subr.mxu0 0.0
      %1523 = vmatpush1.msra.mxu0 0.0
      %1524 = vmatprep.subr.mxu0 0.0
      %1525 = vmatpush1.msra.mxu0 0.0
      %1526 = vmatprep.subr.mxu0 0.0
      %1527 = vmatpush1.msra.mxu0 0.0
      %1528 = vmatprep.subr.mxu0 0.0
      %1529 = vmatpush1.msra.mxu0 0.0
      %1530 = vmatprep.mubr.f32.mxu0 0.0
      %1531 = vmatmul.mubr.f32.gmra.mrb[0].mxu0 %v1415
      %v1532 = vpop.f32.mrb[0].mxu0
      %v1533 = vadd.f32 %v1411, %v1532
      %v1534 = vpop.f32.mrb[0].mxu0
      %1535 = vmatprep.mubr.f32.mxu0 0.0
      %1536 = vmatmul.mubr.f32.gmra.mrb[0].mxu0 %v1418
      %v1537 = vpop.f32.mrb[0].mxu0
      %v1538 = vadd.f32 %v1411, %v1537
      %v1539 = vpop.f32.mrb[0].mxu0
      %1540 = vmatprep.mubr.f32.mxu0 0.0
      %1541 = vmatmul.mubr.f32.gmra.mrb[0].mxu0 %v1421
      %v1542 = vpop.f32.mrb[0].mxu0
      %v1543 = vadd.f32 %v1411, %v1542
      %v1544 = vpop.f32.mrb[0].mxu0
      %1545 = vmatprep.mubr.f32.mxu0 0.0
      %1546 = vmatmul.mubr.f32.gmra.mrb[0].mxu0 %v1424
      %v1547 = vpop.f32.mrb[0].mxu0
      %v1548 = vadd.f32 %v1411, %v1547
      %v1549 = vpop.f32.mrb[0].mxu0
      %1550 = vmatprep.mubr.f32.mxu0 0.0
      %1551 = vmatmul.mubr.f32.gmra.mrb[0].mxu0 %v1427
      %v1552 = vpop.f32.mrb[0].mxu0
      %v1553 = vadd.f32 %v1411, %v1552
      %v1554 = vpop.f32.mrb[0].mxu0
      %1555 = vmatprep.mubr.f32.mxu0 0.0
      %1556 = vmatmul.mubr.f32.gmra.mrb[0].mxu0 %v1430
      %v1557 = vpop.f32.mrb[0].mxu0
      %v1558 = vadd.f32 %v1411, %v1557
      %v1559 = vpop.f32.mrb[0].mxu0
      %1560 = vmatprep.mubr.f32.mxu0 0.0
      %1561 = vmatmul.mubr.f32.gmra.mrb[0].mxu0 %v1433
      %v1562 = vpop.f32.mrb[0].mxu0
      %v1563 = vadd.f32 %v1411, %v1562
      %v1564 = vpop.f32.mrb[0].mxu0
      %1565 = vmatprep.mubr.f32.mxu0 0.0
      %1566 = vmatmul.mubr.f32.gmra.mrb[0].mxu0 %v1436
      %v1567 = vpop.f32.mrb[0].mxu0
      %v1568 = vadd.f32 %v1411, %v1567
      %v1569 = vpop.f32.mrb[0].mxu0
      %1570 = vmatprep.mubr.f32.mxu0 0.0
      %1571 = vmatmul.mubr.f32.gmra.mrb[0].mxu0 %v1439
      %v1572 = vpop.f32.mrb[0].mxu0
      %v1573 = vadd.f32 %v1411, %v1572
      %v1574 = vpop.f32.mrb[0].mxu0
      %1575 = vmatprep.mubr.f32.mxu0 0.0
      %1576 = vmatmul.mubr.f32.gmra.mrb[0].mxu0 %v1442
      %v1577 = vpop.f32.mrb[0].mxu0
      %v1578 = vadd.f32 %v1411, %v1577
      %v1579 = vpop.f32.mrb[0].mxu0
      %1580 = vmatprep.mubr.f32.mxu0 0.0
      %1581 = vmatmul.mubr.f32.gmra.mrb[0].mxu0 %v1445
      %v1582 = vpop.f32.mrb[0].mxu0
      %v1583 = vadd.f32 %v1411, %v1582
      %v1584 = vpop.f32.mrb[0].mxu0
      %1585 = vmatprep.mubr.f32.mxu0 0.0
      %1586 = vmatmul.mubr.f32.gmra.mrb[0].mxu0 %v1448
      %v1587 = vpop.f32.mrb[0].mxu0
      %v1588 = vadd.f32 %v1411, %v1587
      %v1589 = vpop.f32.mrb[0].mxu0
      %1590 = vmatprep.mubr.f32.mxu0 0.0
      %1591 = vmatmul.mubr.f32.gmra.mrb[0].mxu0 %v1451
      %v1592 = vpop.f32.mrb[0].mxu0
      %v1593 = vadd.f32 %v1411, %v1592
      %v1594 = vpop.f32.mrb[0].mxu0
      %1595 = vmatprep.mubr.f32.mxu0 0.0
      %1596 = vmatmul.mubr.f32.gmra.mrb[0].mxu0 %v1454
      %v1597 = vpop.f32.mrb[0].mxu0
      %v1598 = vadd.f32 %v1411, %v1597
      %v1599 = vpop.f32.mrb[0].mxu0
      %1600 = vmatprep.mubr.f32.mxu0 0.0
      %1601 = vmatmul.mubr.f32.gmra.mrb[0].mxu0 %v1457
      %v1602 = vpop.f32.mrb[0].mxu0
      %v1603 = vadd.f32 %v1411, %v1602
      %v1604 = vpop.f32.mrb[0].mxu0
      %1605 = vmatprep.mubr.f32.mxu0 0.0
      %1606 = vmatmul.mubr.f32.gmra.mrb[0].mxu0 %v1460
      %v1607 = vpop.f32.mrb[0].mxu0
      %v1608 = vadd.f32 %v1411, %v1607
      %v1609 = vpop.f32.mrb[0].mxu0
      %1610 = vdwg.mxu0
      // Predicated region
      $region45: #{conv_block.3} parent=43 // pred_check
        %p1611 = pneg %p510
      $region46: #{conv_block.3} parent=43 // pred_check_branch
        %1613 = sbr.rel (%p1611) target = $region48
      $region47: #{conv_block.3} parent=43 // pred_region
        %vm1614 = vcmask 57344
        %1615 = vst.msk [vmem:[%s486] sm:$0x1] %vm1614, 0.0
        %1616 = vst.msk [vmem:[%s489] sm:$0x1] %vm1614, 0.0
      $region48: #{conv_block.3} parent=43 // pred_fallthru
        _
      %v1617 = vld [vmem:[%s486] sm:$0x1]
      %vm1618 = vcmask 64512
      %v1619 = vsel %vm1618, %v1533, 0.0
      %v1620 = vsel %vm1618, %v1538, 0.0
      %v1621 = vadd.f32 %v1619, %v1620
      %v1622 = vsel %vm1618, %v1543, 0.0
      %v1623 = vadd.f32 %v1621, %v1622
      %v1624 = vsel %vm1618, %v1548, 0.0
      %v1625 = vadd.f32 %v1623, %v1624
      %v1626 = vsel %vm1618, %v1553, 0.0
      %v1627 = vadd.f32 %v1625, %v1626
      %v1628 = vsel %vm1618, %v1558, 0.0
      %v1629 = vadd.f32 %v1627, %v1628
      %v1630 = vsel %vm1618, %v1563, 0.0
      %v1631 = vadd.f32 %v1629, %v1630
      %v1632 = vsel %vm1618, %v1568, 0.0
      %v1633 = vadd.f32 %v1631, %v1632
      %v1634 = vsel %vm1618, %v1573, 0.0
      %v1635 = vadd.f32 %v1633, %v1634
      %v1636 = vsel %vm1618, %v1578, 0.0
      %v1637 = vadd.f32 %v1635, %v1636
      %v1638 = vsel %vm1618, %v1583, 0.0
      %v1639 = vadd.f32 %v1637, %v1638
      %v1640 = vsel %vm1618, %v1588, 0.0
      %v1641 = vadd.f32 %v1639, %v1640
      %v1642 = vsel %vm1618, %v1593, 0.0
      %v1643 = vadd.f32 %v1641, %v1642
      %v1644 = vsel %vm1618, %v1598, 0.0
      %v1645 = vadd.f32 %v1643, %v1644
      %v1646 = vsel %vm1618, %v1603, 0.0
      %v1647 = vadd.f32 %v1645, %v1646
      %v1648 = vsel %vm1618, %v1608, 0.0
      %v1649 = vadd.f32 %v1647, %v1648
      %v1650 = vrot.slane %v1649, 4
      %v1651 = vadd.f32 %v1649, %v1650
      %v1652 = vrot.slane %v1651, 2
      %v1653 = vadd.f32 %v1651, %v1652
      %v1654 = vrot.slane %v1653, 1
      %v1655 = vadd.f32 %v1653, %v1654
      %v1656 = vadd.f32 %v1617, %v1655
      %vm1657 = vcmask 57344
      %1658 = vst.msk [vmem:[%s486] sm:$0x1] %vm1657, %v1656
      %v1659 = vld [vmem:[%s489] sm:$0x1]
      %v1660 = vmul.f32 %v1533, %v1533
      %v1661 = vmul.f32 %v1538, %v1538
      %v1662 = vmul.f32 %v1543, %v1543
      %v1663 = vmul.f32 %v1548, %v1548
      %v1664 = vmul.f32 %v1553, %v1553
      %v1665 = vmul.f32 %v1558, %v1558
      %v1666 = vmul.f32 %v1563, %v1563
      %v1667 = vmul.f32 %v1568, %v1568
      %v1668 = vmul.f32 %v1573, %v1573
      %v1669 = vmul.f32 %v1578, %v1578
      %v1670 = vmul.f32 %v1583, %v1583
      %v1671 = vmul.f32 %v1588, %v1588
      %v1672 = vmul.f32 %v1593, %v1593
      %v1673 = vmul.f32 %v1598, %v1598
      %v1674 = vmul.f32 %v1603, %v1603
      %v1675 = vmul.f32 %v1608, %v1608
      %v1676 = vsel %vm1618, %v1660, 0.0
      %v1677 = vsel %vm1618, %v1661, 0.0
      %v1678 = vadd.f32 %v1676, %v1677
      %v1679 = vsel %vm1618, %v1662, 0.0
      %v1680 = vadd.f32 %v1678, %v1679
      %v1681 = vsel %vm1618, %v1663, 0.0
      %v1682 = vadd.f32 %v1680, %v1681
      %v1683 = vsel %vm1618, %v1664, 0.0
      %v1684 = vadd.f32 %v1682, %v1683
      %v1685 = vsel %vm1618, %v1665, 0.0
      %v1686 = vadd.f32 %v1684, %v1685
      %v1687 = vsel %vm1618, %v1666, 0.0
      %v1688 = vadd.f32 %v1686, %v1687
      %v1689 = vsel %vm1618, %v1667, 0.0
      %v1690 = vadd.f32 %v1688, %v1689
      %v1691 = vsel %vm1618, %v1668, 0.0
      %v1692 = vadd.f32 %v1690, %v1691
      %v1693 = vsel %vm1618, %v1669, 0.0
      %v1694 = vadd.f32 %v1692, %v1693
      %v1695 = vsel %vm1618, %v1670, 0.0
      %v1696 = vadd.f32 %v1694, %v1695
      %v1697 = vsel %vm1618, %v1671, 0.0
      %v1698 = vadd.f32 %v1696, %v1697
      %v1699 = vsel %vm1618, %v1672, 0.0
      %v1700 = vadd.f32 %v1698, %v1699
      %v1701 = vsel %vm1618, %v1673, 0.0
      %v1702 = vadd.f32 %v1700, %v1701
      %v1703 = vsel %vm1618, %v1674, 0.0
      %v1704 = vadd.f32 %v1702, %v1703
      %v1705 = vsel %vm1618, %v1675, 0.0
      %v1706 = vadd.f32 %v1704, %v1705
      %v1707 = vrot.slane %v1706, 4
      %v1708 = vadd.f32 %v1706, %v1707
      %v1709 = vrot.slane %v1708, 2
      %v1710 = vadd.f32 %v1708, %v1709
      %v1711 = vrot.slane %v1710, 1
      %v1712 = vadd.f32 %v1710, %v1711
      %v1713 = vadd.f32 %v1659, %v1712
      %1714 = vst.msk [vmem:[%s489] sm:$0x1] %vm1657, %v1713
      %1715 = vst.msk [vmem:[%s482] sm:$0xff] %vm1618, %v1533
      %1716 = vst.msk [vmem:[%s482 + $0x8] sm:$0xff] %vm1618, %v1538
      %1717 = vst.msk [vmem:[%s482 + $0x10] sm:$0xff] %vm1618, %v1543
      %1718 = vst.msk [vmem:[%s482 + $0x18] sm:$0xff] %vm1618, %v1548
      %1719 = vst.msk [vmem:[%s482 + $0x20] sm:$0xff] %vm1618, %v1553
      %1720 = vst.msk [vmem:[%s482 + $0x28] sm:$0xff] %vm1618, %v1558
      %1721 = vst.msk [vmem:[%s482 + $0x30] sm:$0xff] %vm1618, %v1563
      %1722 = vst.msk [vmem:[%s482 + $0x38] sm:$0xff] %vm1618, %v1568
      %1723 = vst.msk [vmem:[%s482 + $0x40] sm:$0xff] %vm1618, %v1573
      %1724 = vst.msk [vmem:[%s482 + $0x48] sm:$0xff] %vm1618, %v1578
      %1725 = vst.msk [vmem:[%s482 + $0x50] sm:$0xff] %vm1618, %v1583
      %1726 = vst.msk [vmem:[%s482 + $0x58] sm:$0xff] %vm1618, %v1588
      %1727 = vst.msk [vmem:[%s482 + $0x60] sm:$0xff] %vm1618, %v1593
      %1728 = vst.msk [vmem:[%s482 + $0x68] sm:$0xff] %vm1618, %v1598
      %1729 = vst.msk [vmem:[%s482 + $0x70] sm:$0xff] %vm1618, %v1603
      %1730 = vst.msk [vmem:[%s482 + $0x78] sm:$0xff] %vm1618, %v1608
      %s1731 = smul.u32 16, %s25
      %p1732 = scmp.lt.s32.totalorder %s24, 1
      %s1733 = scalar_select %p1732, %s24, 1
      %p1734 = scmp.lt.s32.totalorder %s1731, 31
      %s1735 = scalar_select %p1734, %s1731, 31
      %s1736 = smul.addr %s1733, 32
      %s1737 = sadd.s32 %s1735, %s1736
      %s1738 = smul.addr %s1737, 8
      %s1739 = scalar_lea.vmem %s6, %s1738
      %p1740 = scmp.lt.s32.totalorder %s24, 1
      %s1741 = scalar_select %p1740, %s24, 1
      %s1742 = scalar_lea.vmem %s7, %s1741
      %p1743 = scmp.lt.s32.totalorder %s24, 1
      %s1744 = scalar_select %p1743, %s24, 1
      %s1745 = scalar_lea.vmem %s8, %s1744
      // Predicated region
      $region49: #{conv_block.3} parent=43 // pred_check
        %p1746 = pneg %p215
      $region50: #{conv_block.3} parent=43 // pred_check_branch
        %1748 = sbr.rel (%p1746) target = $region52
      $region51: #{conv_block.3} parent=43 // pred_region
        %s1749 = smul.u32 16, %s25
      $region52: #{conv_block.3} parent=43 // pred_fallthru
        _
      // Predicated region
      $region53: #{conv_block.3} parent=43 // pred_check
        %p1750 = pneg %p241
      $region54: #{conv_block.3} parent=43 // pred_check_branch
        %1752 = sbr.rel (%p1750) target = $region56
      $region55: #{conv_block.3} parent=43 // pred_region
        _
      $region56: #{conv_block.3} parent=43 // pred_fallthru
        _
      // Predicated region
      $region57: #{conv_block.3} parent=43 // pred_check
        %p1753 = pneg %p267
      $region58: #{conv_block.3} parent=43 // pred_check_branch
        %1755 = sbr.rel (%p1753) target = $region60
      $region59: #{conv_block.3} parent=43 // pred_region
        _
      $region60: #{conv_block.3} parent=43 // pred_fallthru
        _
    $region44: #{conv_block.3} parent=5 // pred_fallthru
      _
    %p1756 = scmp.le.s32.totalorder 2, %s15
    // Predicated region
    $region61: #{conv_block.3} parent=5 // pred_check
      %p1757 = pneg %p1756
    $region62: #{conv_block.3} parent=5 // pred_check_branch
      %1759 = sbr.rel (%p1757) target = $region64
    $region63: #{conv_block.3} parent=5 // pred_region
      %s1760 = ssub.s32 %s15, 2
      // Predicated region
      $region65: #{conv_block.3} parent=63 // pred_check
        %p1761 = pneg %p221
      $region66: #{conv_block.3} parent=63 // pred_check_branch
        %1763 = sbr.rel (%p1761) target = $region68
      $region67: #{conv_block.3} parent=63 // pred_region
        %s1764 = smul.u32 16, %s27
        %p1765 = scmp.lt.s32.totalorder %s26, 1
        %s1766 = scalar_select %p1765, %s26, 1
        %p1767 = scmp.lt.s32.totalorder %s1764, 31
        %s1768 = scalar_select %p1767, %s1764, 31
        %s1769 = smul.addr %s1766, 32
        %s1770 = sadd.s32 %s1768, %s1769
        %s1771 = smul.addr %s1770, 8
        %s1772 = scalar_lea.vmem %s6, %s1771
      $region68: #{conv_block.3} parent=63 // pred_fallthru
        _
      // Predicated region
      $region69: #{conv_block.3} parent=63 // pred_check
        %p1773 = pneg %p247
      $region70: #{conv_block.3} parent=63 // pred_check_branch
        %1775 = sbr.rel (%p1773) target = $region72
      $region71: #{conv_block.3} parent=63 // pred_region
        %p1776 = scmp.lt.s32.totalorder %s26, 1
        %s1777 = scalar_select %p1776, %s26, 1
        %s1778 = scalar_lea.vmem %s7, %s1777
      $region72: #{conv_block.3} parent=63 // pred_fallthru
        _
      // Predicated region
      $region73: #{conv_block.3} parent=63 // pred_check
        %p1779 = pneg %p273
      $region74: #{conv_block.3} parent=63 // pred_check_branch
        %1781 = sbr.rel (%p1779) target = $region76
      $region75: #{conv_block.3} parent=63 // pred_region
        %p1782 = scmp.lt.s32.totalorder %s26, 1
        %s1783 = scalar_select %p1782, %s26, 1
        %s1784 = scalar_lea.vmem %s8, %s1783
      $region76: #{conv_block.3} parent=63 // pred_fallthru
        _
    $region64: #{conv_block.3} parent=5 // pred_fallthru
      _
  $region6: #{conv_block.3} parent=0 // loop_footer
    %s19 = sadd.s32 1, %s15
  $region7: #{conv_block.3} parent=0 // loop_footer_branch
    %14 = sbr.rel target = $region3
  $region8: #{conv_block.3} parent=0 // loop_exit
    _

// kernel: conv_block.4
$region0: #{conv_block.4}
  #allocation0 [shape = 'u32[]', space=smem, size = 0x4, offset = 0x4, fixed_abs, tag = 'smem constant byte address 0x4 - core index']
  #allocation1 [shape = 'u32[144,128]{1,0:T(1,128)}', space=vmem, size = 0x12000, scoped, tag = 'internal scratch']
  #allocation2 [shape = 'f32[10,18,8]{2,1,0:T(8,128)}', space=vmem, size = 0x1e000, scoped, tag = 'scratch operand']
  #allocation3 [shape = 'f32[128,72]{1,0:T(8,128)}', space=vmem, size = 0x10000, scoped, tag = 'scratch operand']
  %s0 = inlined_call_operand.vmem [shape: f32[2,256,8], index: 0, kind: input, shape index: {}, may-alias: {0,1,2}]
  %s1 = inlined_call_operand.vmem [shape: f32[2,256,8], index: 1, kind: input, shape index: {}, may-alias: {0,1,2}]
  %s2 = inlined_call_operand.vmem [shape: f32[2,256,8], index: 2, kind: input, shape index: {}, may-alias: {0,1,2}]
  %s3 = inlined_call_operand.vmem [shape: f32[72,8], index: 3, kind: input, shape index: {}]
  %s4 = inlined_call_operand.vmem [shape: f32[1,8], index: 4, kind: input, shape index: {}]
  %s5 = inlined_call_operand.vmem [shape: f32[2,8], index: 5, kind: input, shape index: {}]
  %s6 = inlined_call_operand.vmem [shape: f32[2,256,8], index: 6, kind: output, shape index: {0}]
  %s7 = inlined_call_operand.vmem [shape: f32[2,1,8], index: 7, kind: output, shape index: {1}]
  %s8 = inlined_call_operand.vmem [shape: f32[2,1,8], index: 8, kind: output, shape index: {2}]
  %9 = xla_tuple %s6, %s7, %s8
  %s10 = sld [smem:[#allocation0]]
  $region77: #{conv_block.4} parent=0
    _
  %s12 = ssub.s32 1, %s10
  %s13 = scalar_select 0, %s12, %s10
  loop: start=0, step=1, limit=6
  $region2: #{conv_block.4} parent=0 // loop_pre_header
    _
  $region3: #{conv_block.4} parent=0 // loop_header
    %s15 = sphi 0, %s19
    %p16 = scmp.ge.s32.totalorder %s15, 6
    %s22 = sphi 0, %s34
    %s23 = sphi 0, %s30
    %s24 = sphi 0, %s22
    %s25 = sphi 0, %s23
    %s26 = sphi 0, %s24
    %s27 = sphi 0, %s25
    %s39 = sphi 0, %s41
    %s42 = sphi 0, %s39
    %s43 = sphi 0, %s42
    %s59 = sphi 0, %s43
    %s75 = sphi 0, %s77
    %s78 = sphi 0, %s75
    %s79 = sphi 0, %s78
    %s95 = sphi 0, %s79
    %s111 = sphi 0, %s113
    %s114 = sphi 0, %s111
    %s115 = sphi 0, %s114
    %s131 = sphi 0, %s115
    %s135 = sphi 0, %s135
    %s137 = sphi 0, %s135
    %s138 = sphi 0, %s137
    %s152 = sphi 0, %s138
    %s156 = sphi 0, %s156
    %s158 = sphi 0, %s156
    %s159 = sphi 0, %s158
    %s173 = sphi 0, %s159
    %s177 = sphi 0, %s177
    %s179 = sphi 0, %s177
    %s180 = sphi 0, %s179
    %s194 = sphi 0, %s180
    %s202 = sphi 0, %s204
    %s205 = sphi 0, %s202
    %s206 = sphi 0, %s205
    %s222 = sphi 0, %s206
    %s228 = sphi 0, %s230
    %s231 = sphi 0, %s228
    %s232 = sphi 0, %s231
    %s248 = sphi 0, %s232
    %s254 = sphi 0, %s256
    %s257 = sphi 0, %s254
    %s258 = sphi 0, %s257
    %s274 = sphi 0, %s258
  $region4: #{conv_block.4} parent=0 // loop_header_branch
    %18 = sbr.rel (%p16) target = $region8
  $region5: #{conv_block.4} parent=0 // loop_body
    %s20 = ssub.s32 %s15, 1
    %s21 = ssub.s32 %s15, 2
    %s28 = sadd.s32 1, %s23
    %p29 = scmp.ge.s32.totalorder %s28, 2
    %s30 = scalar_select %p29, 0, %s28
    %s31 = sadd.s32 1, %s22
    %s32 = scalar_select %p29, %s31, %s22
    %p33 = scmp.ge.s32.totalorder %s32, 2
    %s34 = scalar_select %p33, 0, %s32
    %s35 = ssub.s32 %s22, %s34
    %s36 = ssub.s32 %s23, %s30
    %s37 = sor.u32 %s35, %s36
    %p38 = scmp.eq.s32.totalorder %s37, 0
    %s40 = sadd.s32 %s39, 1
    %s41 = scalar_select %p38, %s39, %s40
    %p44 = pneg %p38
    %p45 = scmp.eq.s32.totalorder %s15, 3
    %p46 = por %p44, %p45
    %p47 = scmp.ne.s32.totalorder %s39, %s42
    %p48 = scmp.eq.s32.totalorder %s15, 0
    %p49 = por %p47, %p48
    %p50 = scmp.ne.s32.totalorder %s39, %s42
    %p51 = scmp.eq.s32.totalorder %s20, 3
    %p52 = por %p50, %p51
    %p53 = scmp.ne.s32.totalorder %s42, %s43
    %p54 = scmp.eq.s32.totalorder %s20, 0
    %p55 = por %p53, %p54
    %p56 = scmp.ne.s32.totalorder %s42, %s43
    %p57 = scmp.eq.s32.totalorder %s21, 3
    %p58 = por %p56, %p57
    %p60 = scmp.ne.s32.totalorder %s43, %s59
    %p61 = scmp.eq.s32.totalorder %s21, 0
    %p62 = por %p60, %p61
    %s63 = smul.u32 %s23, 8
    %s64 = ssub.s32 %s63, 1
    %p65 = scmp.gt.s32.totalorder %s64, 0
    %s66 = scalar_select %p65, %s64, 0
    %s67 = smul.u32 %s30, 8
    %s68 = ssub.s32 %s67, 1
    %p69 = scmp.gt.s32.totalorder %s68, 0
    %s70 = scalar_select %p69, %s68, 0
    %s71 = ssub.s32 %s22, %s34
    %s72 = ssub.s32 %s66, %s70
    %s73 = sor.u32 %s71, %s72
    %p74 = scmp.eq.s32.totalorder %s73, 0
    %s76 = sadd.s32 %s75, 1
    %s77 = scalar_select %p74, %s75, %s76
    %p80 = pneg %p74
    %p81 = scmp.eq.s32.totalorder %s15, 3
    %p82 = por %p80, %p81
    %p83 = scmp.ne.s32.totalorder %s75, %s78
    %p84 = scmp.eq.s32.totalorder %s15, 0
    %p85 = por %p83, %p84
    %p86 = scmp.ne.s32.totalorder %s75, %s78
    %p87 = scmp.eq.s32.totalorder %s20, 3
    %p88 = por %p86, %p87
    %p89 = scmp.ne.s32.totalorder %s78, %s79
    %p90 = scmp.eq.s32.totalorder %s20, 0
    %p91 = por %p89, %p90
    %p92 = scmp.ne.s32.totalorder %s78, %s79
    %p93 = scmp.eq.s32.totalorder %s21, 3
    %p94 = por %p92, %p93
    %p96 = scmp.ne.s32.totalorder %s79, %s95
    %p97 = scmp.eq.s32.totalorder %s21, 0
    %p98 = por %p96, %p97
    %s99 = smul.u32 %s23, 8
    %s100 = sadd.s32 %s99, 8
    %p101 = scmp.lt.s32.totalorder %s100, 15
    %s102 = scalar_select %p101, %s100, 15
    %s103 = smul.u32 %s30, 8
    %s104 = sadd.s32 %s103, 8
    %p105 = scmp.lt.s32.totalorder %s104, 15
    %s106 = scalar_select %p105, %s104, 15
    %s107 = ssub.s32 %s22, %s34
    %s108 = ssub.s32 %s102, %s106
    %s109 = sor.u32 %s107, %s108
    %p110 = scmp.eq.s32.totalorder %s109, 0
    %s112 = sadd.s32 %s111, 1
    %s113 = scalar_select %p110, %s111, %s112
    %p116 = pneg %p110
    %p117 = scmp.eq.s32.totalorder %s15, 3
    %p118 = por %p116, %p117
    %p119 = scmp.ne.s32.totalorder %s111, %s114
    %p120 = scmp.eq.s32.totalorder %s15, 0
    %p121 = por %p119, %p120
    %p122 = scmp.ne.s32.totalorder %s111, %s114
    %p123 = scmp.eq.s32.totalorder %s20, 3
    %p124 = por %p122, %p123
    %p125 = scmp.ne.s32.totalorder %s114, %s115
    %p126 = scmp.eq.s32.totalorder %s20, 0
    %p127 = por %p125, %p126
    %p128 = scmp.ne.s32.totalorder %s114, %s115
    %p129 = scmp.eq.s32.totalorder %s21, 3
    %p130 = por %p128, %p129
    %p132 = scmp.ne.s32.totalorder %s115, %s131
    %p133 = scmp.eq.s32.totalorder %s21, 0
    %p134 = por %p132, %p133
    %s136 = sadd.s32 %s135, 1
    %p139 = scmp.eq.s32.totalorder %s15, 3
    %p140 = scmp.ne.s32.totalorder %s135, %s137
    %p141 = scmp.eq.s32.totalorder %s15, 0
    %p142 = por %p140, %p141
    %p143 = scmp.ne.s32.totalorder %s135, %s137
    %p144 = scmp.eq.s32.totalorder %s20, 3
    %p145 = por %p143, %p144
    %p146 = scmp.ne.s32.totalorder %s137, %s138
    %p147 = scmp.eq.s32.totalorder %s20, 0
    %p148 = por %p146, %p147
    %p149 = scmp.ne.s32.totalorder %s137, %s138
    %p150 = scmp.eq.s32.totalorder %s21, 3
    %p151 = por %p149, %p150
    %p153 = scmp.ne.s32.totalorder %s138, %s152
    %p154 = scmp.eq.s32.totalorder %s21, 0
    %p155 = por %p153, %p154
    %s157 = sadd.s32 %s156, 1
    %p160 = scmp.eq.s32.totalorder %s15, 3
    %p161 = scmp.ne.s32.totalorder %s156, %s158
    %p162 = scmp.eq.s32.totalorder %s15, 0
    %p163 = por %p161, %p162
    %p164 = scmp.ne.s32.totalorder %s156, %s158
    %p165 = scmp.eq.s32.totalorder %s20, 3
    %p166 = por %p164, %p165
    %p167 = scmp.ne.s32.totalorder %s158, %s159
    %p168 = scmp.eq.s32.totalorder %s20, 0
    %p169 = por %p167, %p168
    %p170 = scmp.ne.s32.totalorder %s158, %s159
    %p171 = scmp.eq.s32.totalorder %s21, 3
    %p172 = por %p170, %p171
    %p174 = scmp.ne.s32.totalorder %s159, %s173
    %p175 = scmp.eq.s32.totalorder %s21, 0
    %p176 = por %p174, %p175
    %s178 = sadd.s32 %s177, 1
    %p181 = scmp.eq.s32.totalorder %s15, 3
    %p182 = scmp.ne.s32.totalorder %s177, %s179
    %p183 = scmp.eq.s32.totalorder %s15, 0
    %p184 = por %p182, %p183
    %p185 = scmp.ne.s32.totalorder %s177, %s179
    %p186 = scmp.eq.s32.totalorder %s20, 3
    %p187 = por %p185, %p186
    %p188 = scmp.ne.s32.totalorder %s179, %s180
    %p189 = scmp.eq.s32.totalorder %s20, 0
    %p190 = por %p188, %p189
    %p191 = scmp.ne.s32.totalorder %s179, %s180
    %p192 = scmp.eq.s32.totalorder %s21, 3
    %p193 = por %p191, %p192
    %p195 = scmp.ne.s32.totalorder %s180, %s194
    %p196 = scmp.eq.s32.totalorder %s21, 0
    %p197 = por %p195, %p196
    %s198 = ssub.s32 %s22, %s34
    %s199 = ssub.s32 %s23, %s30
    %s200 = sor.u32 %s198, %s199
    %p201 = scmp.eq.s32.totalorder %s200, 0
    %s203 = sadd.s32 %s202, 1
    %s204 = scalar_select %p201, %s202, %s203
    %p207 = pneg %p201
    %p208 = scmp.eq.s32.totalorder %s15, 3
    %p209 = por %p207, %p208
    %p210 = scmp.ne.s32.totalorder %s202, %s205
    %p211 = scmp.eq.s32.totalorder %s15, 0
    %p212 = por %p210, %p211
    %p213 = scmp.ne.s32.totalorder %s202, %s205
    %p214 = scmp.eq.s32.totalorder %s20, 3
    %p215 = por %p213, %p214
    %p216 = scmp.ne.s32.totalorder %s205, %s206
    %p217 = scmp.eq.s32.totalorder %s20, 0
    %p218 = por %p216, %p217
    %p219 = scmp.ne.s32.totalorder %s205, %s206
    %p220 = scmp.eq.s32.totalorder %s21, 3
    %p221 = por %p219, %p220
    %p223 = scmp.ne.s32.totalorder %s206, %s222
    %p224 = scmp.eq.s32.totalorder %s21, 0
    %p225 = por %p223, %p224
    %s226 = ssub.s32 %s22, %s34
    %p227 = scmp.eq.s32.totalorder %s226, 0
    %s229 = sadd.s32 %s228, 1
    %s230 = scalar_select %p227, %s228, %s229
    %p233 = pneg %p227
    %p234 = scmp.eq.s32.totalorder %s15, 3
    %p235 = por %p233, %p234
    %p236 = scmp.ne.s32.totalorder %s228, %s231
    %p237 = scmp.eq.s32.totalorder %s15, 0
    %p238 = por %p236, %p237
    %p239 = scmp.ne.s32.totalorder %s228, %s231
    %p240 = scmp.eq.s32.totalorder %s20, 3
    %p241 = por %p239, %p240
    %p242 = scmp.ne.s32.totalorder %s231, %s232
    %p243 = scmp.eq.s32.totalorder %s20, 0
    %p244 = por %p242, %p243
    %p245 = scmp.ne.s32.totalorder %s231, %s232
    %p246 = scmp.eq.s32.totalorder %s21, 3
    %p247 = por %p245, %p246
    %p249 = scmp.ne.s32.totalorder %s232, %s248
    %p250 = scmp.eq.s32.totalorder %s21, 0
    %p251 = por %p249, %p250
    %s252 = ssub.s32 %s22, %s34
    %p253 = scmp.eq.s32.totalorder %s252, 0
    %s255 = sadd.s32 %s254, 1
    %s256 = scalar_select %p253, %s254, %s255
    %p259 = pneg %p253
    %p260 = scmp.eq.s32.totalorder %s15, 3
    %p261 = por %p259, %p260
    %p262 = scmp.ne.s32.totalorder %s254, %s257
    %p263 = scmp.eq.s32.totalorder %s15, 0
    %p264 = por %p262, %p263
    %p265 = scmp.ne.s32.totalorder %s254, %s257
    %p266 = scmp.eq.s32.totalorder %s20, 3
    %p267 = por %p265, %p266
    %p268 = scmp.ne.s32.totalorder %s257, %s258
    %p269 = scmp.eq.s32.totalorder %s20, 0
    %p270 = por %p268, %p269
    %p271 = scmp.ne.s32.totalorder %s257, %s258
    %p272 = scmp.eq.s32.totalorder %s21, 3
    %p273 = por %p271, %p272
    %p275 = scmp.ne.s32.totalorder %s258, %s274
    %p276 = scmp.eq.s32.totalorder %s21, 0
    %p277 = por %p275, %p276
    %p278 = scmp.le.s32.totalorder 1, %s15
    %p279 = scmp.lt.s32.totalorder %s15, 5
    %p280 = pnand %p278, %p279
    %p281 = pneg %p280
    // Predicated region
    $region9: #{conv_block.4} parent=5 // pred_check
      _
    $region10: #{conv_block.4} parent=5 // pred_check_branch
      %283 = sbr.rel (%p280) target = $region12
    $region11: #{conv_block.4} parent=5 // pred_region
      %s284 = ssub.s32 %s15, 1
      // Predicated region
      $region13: #{conv_block.4} parent=11 // pred_check
        %p285 = pneg %p148
      $region14: #{conv_block.4} parent=11 // pred_check_branch
        %287 = sbr.rel (%p285) target = $region16
      $region15: #{conv_block.4} parent=11 // pred_region
        _
      $region16: #{conv_block.4} parent=11 // pred_fallthru
        _
      // Predicated region
      $region17: #{conv_block.4} parent=11 // pred_check
        %p288 = pneg %p169
      $region18: #{conv_block.4} parent=11 // pred_check_branch
        %290 = sbr.rel (%p288) target = $region20
      $region19: #{conv_block.4} parent=11 // pred_region
        _
      $region20: #{conv_block.4} parent=11 // pred_fallthru
        _
      // Predicated region
      $region21: #{conv_block.4} parent=11 // pred_check
        %p291 = pneg %p190
      $region22: #{conv_block.4} parent=11 // pred_check_branch
        %293 = sbr.rel (%p291) target = $region24
      $region23: #{conv_block.4} parent=11 // pred_region
        _
      $region24: #{conv_block.4} parent=11 // pred_fallthru
        _
    $region12: #{conv_block.4} parent=5 // pred_fallthru
      _
    %p294 = scmp.lt.s32.totalorder %s15, 4
    // Predicated region
    $region25: #{conv_block.4} parent=5 // pred_check
      %p295 = pneg %p294
    $region26: #{conv_block.4} parent=5 // pred_check_branch
      %297 = sbr.rel (%p295) target = $region28
    $region27: #{conv_block.4} parent=5 // pred_region
      // Predicated region
      $region29: #{conv_block.4} parent=27 // pred_check
        %p298 = pneg %p49
      $region30: #{conv_block.4} parent=27 // pred_check_branch
        %300 = sbr.rel (%p298) target = $region32
      $region31: #{conv_block.4} parent=27 // pred_region
        %s301 = smul.u32 16, %s23
        %p302 = scmp.lt.s32.totalorder %s22, 1
        %s303 = scalar_select %p302, %s22, 1
        %p304 = scmp.lt.s32.totalorder %s301, 31
        %s305 = scalar_select %p304, %s301, 31
        %s306 = smul.addr %s303, 32
        %s307 = sadd.s32 %s305, %s306
        %s308 = smul.addr %s307, 8
        %s309 = scalar_lea.vmem %s0, %s308
        %s310 = smul.u32 16, %s23
      $region32: #{conv_block.4} parent=27 // pred_fallthru
        _
      // Predicated region
      $region33: #{conv_block.4} parent=27 // pred_check
        %p311 = pneg %p85
      $region34: #{conv_block.4} parent=27 // pred_check_branch
        %313 = sbr.rel (%p311) target = $region36
      $region35: #{conv_block.4} parent=27 // pred_region
        %s314 = smul.u32 %s23, 8
        %s315 = ssub.s32 %s314, 1
        %p316 = scmp.gt.s32.totalorder %s315, 0
        %s317 = scalar_select %p316, %s315, 0
        %s318 = smul.u32 2, %s317
        %p319 = scmp.lt.s32.totalorder %s22, 1
        %s320 = scalar_select %p319, %s22, 1
        %p321 = scmp.lt.s32.totalorder %s318, 31
        %s322 = scalar_select %p321, %s318, 31
        %s323 = smul.addr %s320, 32
        %s324 = sadd.s32 %s322, %s323
        %s325 = smul.addr %s324, 8
        %s326 = scalar_lea.vmem %s1, %s325
        %s327 = smul.u32 %s23, 8
        %s328 = ssub.s32 %s327, 1
        %p329 = scmp.gt.s32.totalorder %s328, 0
        %s330 = scalar_select %p329, %s328, 0
        %s331 = smul.u32 2, %s330
      $region36: #{conv_block.4} parent=27 // pred_fallthru
        _
      // Predicated region
      $region37: #{conv_block.4} parent=27 // pred_check
        %p332 = pneg %p121
      $region38: #{conv_block.4} parent=27 // pred_check_branch
        %334 = sbr.rel (%p332) target = $region40
      $region39: #{conv_block.4} parent=27 // pred_region
        %s335 = smul.u32 %s23, 8
        %s336 = sadd.s32 %s335, 8
        %p337 = scmp.lt.s32.totalorder %s336, 15
        %s338 = scalar_select %p337, %s336, 15
        %s339 = smul.u32 2, %s338
        %p340 = scmp.lt.s32.totalorder %s22, 1
        %s341 = scalar_select %p340, %s22, 1
        %p342 = scmp.lt.s32.totalorder %s339, 31
        %s343 = scalar_select %p342, %s339, 31
        %s344 = smul.addr %s341, 32
        %s345 = sadd.s32 %s343, %s344
        %s346 = smul.addr %s345, 8
        %s347 = scalar_lea.vmem %s2, %s346
        %s348 = smul.u32 %s23, 8
        %s349 = sadd.s32 %s348, 8
        %p350 = scmp.lt.s32.totalorder %s349, 15
        %s351 = scalar_select %p350, %s349, 15
        %s352 = smul.u32 2, %s351
      $region40: #{conv_block.4} parent=27 // pred_fallthru
        _
    $region28: #{conv_block.4} parent=5 // pred_fallthru
      _
    %p353 = scmp.le.s32.totalorder 1, %s15
    %p354 = scmp.lt.s32.totalorder %s15, 5
    %p355 = pnand %p353, %p354
    %p356 = pneg %p355
    // Predicated region
    $region41: #{conv_block.4} parent=5 // pred_check
      _
    $region42: #{conv_block.4} parent=5 // pred_check_branch
      %358 = sbr.rel (%p355) target = $region44
    $region43: #{conv_block.4} parent=5 // pred_region
      %s359 = ssub.s32 %s15, 1
      %s360 = smul.u32 16, %s25
      %p361 = scmp.lt.s32.totalorder %s24, 1
      %s362 = scalar_select %p361, %s24, 1
      %p363 = scmp.lt.s32.totalorder %s360, 31
      %s364 = scalar_select %p363, %s360, 31
      %s365 = smul.addr %s362, 32
      %s366 = sadd.s32 %s364, %s365
      %s367 = smul.addr %s366, 8
      %s368 = scalar_lea.vmem %s0, %s367
      %p369 = pneg %p55
      %p370 = pneg %p52
      %s371 = smul.u32 %s25, 8
      %s372 = ssub.s32 %s371, 1
      %p373 = scmp.gt.s32.totalorder %s372, 0
      %s374 = scalar_select %p373, %s372, 0
      %s375 = smul.u32 2, %s374
      %p376 = scmp.lt.s32.totalorder %s24, 1
      %s377 = scalar_select %p376, %s24, 1
      %p378 = scmp.lt.s32.totalorder %s375, 31
      %s379 = scalar_select %p378, %s375, 31
      %s380 = smul.addr %s377, 32
      %s381 = sadd.s32 %s379, %s380
      %s382 = smul.addr %s381, 8
      %s383 = scalar_lea.vmem %s1, %s382
      %p384 = pneg %p91
      %p385 = pneg %p88
      %s386 = smul.u32 %s25, 8
      %s387 = sadd.s32 %s386, 8
      %p388 = scmp.lt.s32.totalorder %s387, 15
      %s389 = scalar_select %p388, %s387, 15
      %s390 = smul.u32 2, %s389
      %p391 = scmp.lt.s32.totalorder %s24, 1
      %s392 = scalar_select %p391, %s24, 1
      %p393 = scmp.lt.s32.totalorder %s390, 31
      %s394 = scalar_select %p393, %s390, 31
      %s395 = smul.addr %s392, 32
      %s396 = sadd.s32 %s394, %s395
      %s397 = smul.addr %s396, 8
      %s398 = scalar_lea.vmem %s2, %s397
      %p399 = pneg %p127
      %p400 = pneg %p124
      %p401 = pneg %p148
      %p402 = pneg %p145
      %p403 = pneg %p169
      %p404 = pneg %p166
      %p405 = pneg %p190
      %p406 = pneg %p187
      %p407 = pneg %p218
      %p408 = pneg %p215
      %s409 = smul.u32 16, %s25
      %p410 = scmp.lt.s32.totalorder %s24, 1
      %s411 = scalar_select %p410, %s24, 1
      %p412 = scmp.lt.s32.totalorder %s409, 31
      %s413 = scalar_select %p412, %s409, 31
      %s414 = smul.addr %s411, 32
      %s415 = sadd.s32 %s413, %s414
      %s416 = smul.addr %s415, 8
      %s417 = scalar_lea.vmem %s6, %s416
      %p418 = pneg %p244
      %p419 = pneg %p241
      %p420 = scmp.lt.s32.totalorder %s24, 1
      %s421 = scalar_select %p420, %s24, 1
      %s422 = scalar_lea.vmem %s7, %s421
      %p423 = pneg %p270
      %p424 = pneg %p267
      %p425 = scmp.lt.s32.totalorder %s24, 1
      %s426 = scalar_select %p425, %s24, 1
      %s427 = scalar_lea.vmem %s8, %s426
      %s428 = smul.u32 16, %s25
      %p429 = scmp.lt.s32.totalorder %s24, 1
      %s430 = scalar_select %p429, %s24, 1
      %p431 = scmp.lt.s32.totalorder %s428, 31
      %s432 = scalar_select %p431, %s428, 31
      %s433 = smul.addr %s430, 32
      %s434 = sadd.s32 %s432, %s433
      %s435 = smul.addr %s434, 8
      %s436 = scalar_lea.vmem %s0, %s435
      %s437 = smul.u32 16, %s25
      %s438 = smul.u32 %s25, 8
      %s439 = ssub.s32 %s438, 1
      %p440 = scmp.gt.s32.totalorder %s439, 0
      %s441 = scalar_select %p440, %s439, 0
      %s442 = smul.u32 2, %s441
      %p443 = scmp.lt.s32.totalorder %s24, 1
      %s444 = scalar_select %p443, %s24, 1
      %p445 = scmp.lt.s32.totalorder %s442, 31
      %s446 = scalar_select %p445, %s442, 31
      %s447 = smul.addr %s444, 32
      %s448 = sadd.s32 %s446, %s447
      %s449 = smul.addr %s448, 8
      %s450 = scalar_lea.vmem %s1, %s449
      %s451 = smul.u32 %s25, 8
      %s452 = ssub.s32 %s451, 1
      %p453 = scmp.gt.s32.totalorder %s452, 0
      %s454 = scalar_select %p453, %s452, 0
      %s455 = smul.u32 2, %s454
      %s456 = smul.u32 %s25, 8
      %s457 = sadd.s32 %s456, 8
      %p458 = scmp.lt.s32.totalorder %s457, 15
      %s459 = scalar_select %p458, %s457, 15
      %s460 = smul.u32 2, %s459
      %p461 = scmp.lt.s32.totalorder %s24, 1
      %s462 = scalar_select %p461, %s24, 1
      %p463 = scmp.lt.s32.totalorder %s460, 31
      %s464 = scalar_select %p463, %s460, 31
      %s465 = smul.addr %s462, 32
      %s466 = sadd.s32 %s464, %s465
      %s467 = smul.addr %s466, 8
      %s468 = scalar_lea.vmem %s2, %s467
      %s469 = smul.u32 %s25, 8
      %s470 = sadd.s32 %s469, 8
      %p471 = scmp.lt.s32.totalorder %s470, 15
      %s472 = scalar_select %p471, %s470, 15
      %s473 = smul.u32 2, %s472
      %s474 = smul.u32 16, %s25
      %p475 = scmp.lt.s32.totalorder %s24, 1
      %s476 = scalar_select %p475, %s24, 1
      %p477 = scmp.lt.s32.totalorder %s474, 31
      %s478 = scalar_select %p477, %s474, 31
      %s479 = smul.addr %s476, 32
      %s480 = sadd.s32 %s478, %s479
      %s481 = smul.addr %s480, 8
      %s482 = scalar_lea.vmem %s6, %s481
      %s483 = smul.u32 16, %s25
      %p484 = scmp.lt.s32.totalorder %s24, 1
      %s485 = scalar_select %p484, %s24, 1
      %s486 = scalar_lea.vmem %s7, %s485
      %p487 = scmp.lt.s32.totalorder %s24, 1
      %s488 = scalar_select %p487, %s24, 1
      %s489 = scalar_lea.vmem %s8, %s488
      %v490 = vld [vmem:[%s436] sm:$0xff]
      %v491 = vld [vmem:[%s436 + $0x8] sm:$0xff]
      %v492 = vld [vmem:[%s436 + $0x10] sm:$0xff]
      %v493 = vld [vmem:[%s436 + $0x18] sm:$0xff]
      %v494 = vld [vmem:[%s436 + $0x20] sm:$0xff]
      %v495 = vld [vmem:[%s436 + $0x28] sm:$0xff]
      %v496 = vld [vmem:[%s436 + $0x30] sm:$0xff]
      %v497 = vld [vmem:[%s436 + $0x38] sm:$0xff]
      %v498 = vld [vmem:[%s436 + $0x40] sm:$0xff]
      %v499 = vld [vmem:[%s436 + $0x48] sm:$0xff]
      %v500 = vld [vmem:[%s436 + $0x50] sm:$0xff]
      %v501 = vld [vmem:[%s436 + $0x58] sm:$0xff]
      %v502 = vld [vmem:[%s436 + $0x60] sm:$0xff]
      %v503 = vld [vmem:[%s436 + $0x68] sm:$0xff]
      %v504 = vld [vmem:[%s436 + $0x70] sm:$0xff]
      %v505 = vld [vmem:[%s436 + $0x78] sm:$0xff]
      %v506 = vld [vmem:[%s450] sm:$0xff]
      %v507 = vld [vmem:[%s450 + $0x8] sm:$0xff]
      %v508 = vld [vmem:[%s468] sm:$0xff]
      %v509 = vld [vmem:[%s468 + $0x8] sm:$0xff]
      %v510 = vld [vmem:[%s5] sm:$0x1]
      %v511 = vld [vmem:[%s5 + $0x1] sm:$0x1]
      %v512 = vlaneseq
      %v513 = vshrl.u32 %v512, 7
      %v514 = vsub.s32 0, %v513
      %v515 = vrot.slane %v510, %v514
      %v516 = vmul.f32 %v490, %v515
      %v517 = vmul.f32 %v491, %v515
      %v518 = vmul.f32 %v492, %v515
      %v519 = vmul.f32 %v493, %v515
      %v520 = vmul.f32 %v494, %v515
      %v521 = vmul.f32 %v495, %v515
      %v522 = vmul.f32 %v496, %v515
      %v523 = vmul.f32 %v497, %v515
      %v524 = vmul.f32 %v498, %v515
      %v525 = vmul.f32 %v499, %v515
      %v526 = vmul.f32 %v500, %v515
      %v527 = vmul.f32 %v501, %v515
      %v528 = vmul.f32 %v502, %v515
      %v529 = vmul.f32 %v503, %v515
      %v530 = vmul.f32 %v504, %v515
      %v531 = vmul.f32 %v505, %v515
      %v532 = vlaneseq
      %v533 = vshrl.u32 %v532, 7
      %v534 = vsub.s32 0, %v533
      %v535 = vrot.slane %v511, %v534
      %v536 = vadd.f32 %v516, %v535
      %v537 = vadd.f32 %v517, %v535
      %v538 = vadd.f32 %v518, %v535
      %v539 = vadd.f32 %v519, %v535
      %v540 = vadd.f32 %v520, %v535
      %v541 = vadd.f32 %v521, %v535
      %v542 = vadd.f32 %v522, %v535
      %v543 = vadd.f32 %v523, %v535
      %v544 = vadd.f32 %v524, %v535
      %v545 = vadd.f32 %v525, %v535
      %v546 = vadd.f32 %v526, %v535
      %v547 = vadd.f32 %v527, %v535
      %v548 = vadd.f32 %v528, %v535
      %v549 = vadd.f32 %v529, %v535
      %v550 = vadd.f32 %v530, %v535
      %v551 = vadd.f32 %v531, %v535
      %v552 = vmax.f32 %v536, 0.0
      %v553 = vmax.f32 %v537, 0.0
      %v554 = vmax.f32 %v538, 0.0
      %v555 = vmax.f32 %v539, 0.0
      %v556 = vmax.f32 %v540, 0.0
      %v557 = vmax.f32 %v541, 0.0
      %v558 = vmax.f32 %v542, 0.0
      %v559 = vmax.f32 %v543, 0.0
      %v560 = vmax.f32 %v544, 0.0
      %v561 = vmax.f32 %v545, 0.0
      %v562 = vmax.f32 %v546, 0.0
      %v563 = vmax.f32 %v547, 0.0
      %v564 = vmax.f32 %v548, 0.0
      %v565 = vmax.f32 %v549, 0.0
      %v566 = vmax.f32 %v550, 0.0
      %v567 = vmax.f32 %v551, 0.0
      %v568 = vmul.f32 %v506, %v515
      %v569 = vmul.f32 %v507, %v515
      %v570 = vadd.f32 %v568, %v535
      %v571 = vadd.f32 %v569, %v535
      %v572 = vmax.f32 %v570, 0.0
      %v573 = vmax.f32 %v571, 0.0
      %v574 = vmul.f32 %v508, %v515
      %v575 = vmul.f32 %v509, %v515
      %v576 = vadd.f32 %v574, %v535
      %v577 = vadd.f32 %v575, %v535
      %v578 = vmax.f32 %v576, 0.0
      %v579 = vmax.f32 %v577, 0.0
      %p580 = scmp.eq.s32.totalorder %s25, 0
      %s581 = scalar_select %p580, 1, 0
      %v582 = vstv %s581
      %vm583 = vcmp.eq.s32.totalorder %v582, 1
      %v584 = vsel %vm583, 0.0, %v572
      %v585 = vsel %vm583, 0.0, %v573
      %p586 = scmp.eq.s32.totalorder %s25, 1
      %s587 = scalar_select %p586, 1, 0
      %v588 = vstv %s587
      %vm589 = vcmp.eq.s32.totalorder %v588, 1
      %v590 = vsel %vm589, 0.0, %v578
      %v591 = vsel %vm589, 0.0, %v579
      %vm592 = vcmask 64512
      %593 = vst.msk [vmem:[#allocation2] sm:$0xff] %vm592, 0.0
      %594 = vst.msk [vmem:[#allocation2 + $0x8] sm:$0xff] %vm592, 0.0
      %vm595 = vcmask 58368
      %596 = vst.msk [vmem:[#allocation2 + $0x10] sm:$0x3] %vm595, 0.0
      %597 = vst.msk [vmem:[#allocation2 + $0x18] sm:$0xff] %vm592, 0.0
      %598 = vst.msk [vmem:[#allocation2 + $0x20] sm:$0xff] %vm592, 0.0
      %599 = vst.msk [vmem:[#allocation2 + $0x28] sm:$0x3] %vm595, 0.0
      %600 = vst.msk [vmem:[#allocation2 + $0x30] sm:$0xff] %vm592, 0.0
      %601 = vst.msk [vmem:[#allocation2 + $0x38] sm:$0xff] %vm592, 0.0
      %602 = vst.msk [vmem:[#allocation2 + $0x40] sm:$0x3] %vm595, 0.0
      %603 = vst.msk [vmem:[#allocation2 + $0x48] sm:$0xff] %vm592, 0.0
      %604 = vst.msk [vmem:[#allocation2 + $0x50] sm:$0xff] %vm592, 0.0
      %605 = vst.msk [vmem:[#allocation2 + $0x58] sm:$0x3] %vm595, 0.0
      %606 = vst.msk [vmem:[#allocation2 + $0x60] sm:$0xff] %vm592, 0.0
      %607 = vst.msk [vmem:[#allocation2 + $0x68] sm:$0xff] %vm592, 0.0
      %608 = vst.msk [vmem:[#allocation2 + $0x70] sm:$0x3] %vm595, 0.0
      %609 = vst.msk [vmem:[#allocation2 + $0x78] sm:$0xff] %vm592, 0.0
      %610 = vst.msk [vmem:[#allocation2 + $0x80] sm:$0xff] %vm592, 0.0
      %611 = vst.msk [vmem:[#allocation2 + $0x88] sm:$0x3] %vm595, 0.0
      %612 = vst.msk [vmem:[#allocation2 + $0x90] sm:$0xff] %vm592, 0.0
      %613 = vst.msk [vmem:[#allocation2 + $0x98] sm:$0xff] %vm592, 0.0
      %614 = vst.msk [vmem:[#allocation2 + $0xa0] sm:$0x3] %vm595, 0.0
      %615 = vst.msk [vmem:[#allocation2 + $0xa8] sm:$0xff] %vm592, 0.0
      %616 = vst.msk [vmem:[#allocation2 + $0xb0] sm:$0xff] %vm592, 0.0
      %617 = vst.msk [vmem:[#allocation2 + $0xb8] sm:$0x3] %vm595, 0.0
      %618 = vst.msk [vmem:[#allocation2 + $0xc0] sm:$0xff] %vm592, 0.0
      %619 = vst.msk [vmem:[#allocation2 + $0xc8] sm:$0xff] %vm592, 0.0
      %620 = vst.msk [vmem:[#allocation2 + $0xd0] sm:$0x3] %vm595, 0.0
      %621 = vst.msk [vmem:[#allocation2 + $0xd8] sm:$0xff] %vm592, 0.0
      %622 = vst.msk [vmem:[#allocation2 + $0xe0] sm:$0xff] %vm592, 0.0
      %623 = vst.msk [vmem:[#allocation2 + $0xe8] sm:$0x3] %vm595, 0.0
      %s624 = scalar_lea.vmem [#allocation2], 24
      %625 = vst.msk [vmem:[%s624 + $0x1] sm:$0xff] %vm592, %v552
      %626 = vst.msk [vmem:[%s624 + $0x9] sm:$0xff] %vm592, %v553
      %627 = vst.msk [vmem:[%s624 + $0x19] sm:$0xff] %vm592, %v554
      %628 = vst.msk [vmem:[%s624 + $0x21] sm:$0xff] %vm592, %v555
      %629 = vst.msk [vmem:[%s624 + $0x31] sm:$0xff] %vm592, %v556
      %630 = vst.msk [vmem:[%s624 + $0x39] sm:$0xff] %vm592, %v557
      %631 = vst.msk [vmem:[%s624 + $0x49] sm:$0xff] %vm592, %v558
      %632 = vst.msk [vmem:[%s624 + $0x51] sm:$0xff] %vm592, %v559
      %633 = vst.msk [vmem:[%s624 + $0x61] sm:$0xff] %vm592, %v560
      %634 = vst.msk [vmem:[%s624 + $0x69] sm:$0xff] %vm592, %v561
      %635 = vst.msk [vmem:[%s624 + $0x79] sm:$0xff] %vm592, %v562
      %636 = vst.msk [vmem:[%s624 + $0x81] sm:$0xff] %vm592, %v563
      %637 = vst.msk [vmem:[%s624 + $0x91] sm:$0xff] %vm592, %v564
      %638 = vst.msk [vmem:[%s624 + $0x99] sm:$0xff] %vm592, %v565
      %639 = vst.msk [vmem:[%s624 + $0xa9] sm:$0xff] %vm592, %v566
      %640 = vst.msk [vmem:[%s624 + $0xb1] sm:$0xff] %vm592, %v567
      %641 = vst.msk [vmem:[#allocation2 + $0x1] sm:$0xff] %vm592, %v584
      %642 = vst.msk [vmem:[#allocation2 + $0x9] sm:$0xff] %vm592, %v585
      %s643 = scalar_lea.vmem [#allocation2], 216
      %644 = vst.msk [vmem:[%s643 + $0x1] sm:$0xff] %vm592, %v590
      %645 = vst.msk [vmem:[%s643 + $0x9] sm:$0xff] %vm592, %v591
      %v646 = vld [vmem:[#allocation2] sm:$0xff]
      %v647 = vld [vmem:[#allocation2 + $0x8] sm:$0xff]
      %v648 = vld [vmem:[#allocation2 + $0x18] sm:$0xff]
      %v649 = vld [vmem:[#allocation2 + $0x20] sm:$0xff]
      %v650 = vld [vmem:[#allocation2 + $0x30] sm:$0xff]
      %v651 = vld [vmem:[#allocation2 + $0x38] sm:$0xff]
      %v652 = vld [vmem:[#allocation2 + $0x48] sm:$0xff]
      %v653 = vld [vmem:[#allocation2 + $0x50] sm:$0xff]
      %v654 = vld [vmem:[#allocation2 + $0x60] sm:$0xff]
      %v655 = vld [vmem:[#allocation2 + $0x68] sm:$0xff]
      %v656 = vld [vmem:[#allocation2 + $0x78] sm:$0xff]
      %v657 = vld [vmem:[#allocation2 + $0x80] sm:$0xff]
      %v658 = vld [vmem:[#allocation2 + $0x90] sm:$0xff]
      %v659 = vld [vmem:[#allocation2 + $0x98] sm:$0xff]
      %v660 = vld [vmem:[#allocation2 + $0xa8] sm:$0xff]
      %v661 = vld [vmem:[#allocation2 + $0xb0] sm:$0xff]
      %662 = vst.msk [vmem:[#allocation3] sm:$0xff] %vm592, %v646
      %663 = vst.msk [vmem:[#allocation3 + $0x8] sm:$0xff] %vm592, %v647
      %664 = vst.msk [vmem:[#allocation3 + $0x10] sm:$0xff] %vm592, %v648
      %665 = vst.msk [vmem:[#allocation3 + $0x18] sm:$0xff] %vm592, %v649
      %666 = vst.msk [vmem:[#allocation3 + $0x20] sm:$0xff] %vm592, %v650
      %667 = vst.msk [vmem:[#allocation3 + $0x28] sm:$0xff] %vm592, %v651
      %668 = vst.msk [vmem:[#allocation3 + $0x30] sm:$0xff] %vm592, %v652
      %669 = vst.msk [vmem:[#allocation3 + $0x38] sm:$0xff] %vm592, %v653
      %670 = vst.msk [vmem:[#allocation3 + $0x40] sm:$0xff] %vm592, %v654
      %671 = vst.msk [vmem:[#allocation3 + $0x48] sm:$0xff] %vm592, %v655
      %672 = vst.msk [vmem:[#allocation3 + $0x50] sm:$0xff] %vm592, %v656
      %673 = vst.msk [vmem:[#allocation3 + $0x58] sm:$0xff] %vm592, %v657
      %674 = vst.msk [vmem:[#allocation3 + $0x60] sm:$0xff] %vm592, %v658
      %675 = vst.msk [vmem:[#allocation3 + $0x68] sm:$0xff] %vm592, %v659
      %676 = vst.msk [vmem:[#allocation3 + $0x70] sm:$0xff] %vm592, %v660
      %677 = vst.msk [vmem:[#allocation3 + $0x78] sm:$0xff] %vm592, %v661
      %v678 = vld [vmem:[#allocation2 + $0x1] sm:$0xff]
      %v679 = vld [vmem:[#allocation2 + $0x9] sm:$0xff]
      %v680 = vld [vmem:[#allocation2 + $0x19] sm:$0xff]
      %v681 = vld [vmem:[#allocation2 + $0x21] sm:$0xff]
      %v682 = vld [vmem:[#allocation2 + $0x31] sm:$0xff]
      %v683 = vld [vmem:[#allocation2 + $0x39] sm:$0xff]
      %v684 = vld [vmem:[#allocation2 + $0x49] sm:$0xff]
      %v685 = vld [vmem:[#allocation2 + $0x51] sm:$0xff]
      %v686 = vld [vmem:[#allocation2 + $0x61] sm:$0xff]
      %v687 = vld [vmem:[#allocation2 + $0x69] sm:$0xff]
      %v688 = vld [vmem:[#allocation2 + $0x79] sm:$0xff]
      %v689 = vld [vmem:[#allocation2 + $0x81] sm:$0xff]
      %v690 = vld [vmem:[#allocation2 + $0x91] sm:$0xff]
      %v691 = vld [vmem:[#allocation2 + $0x99] sm:$0xff]
      %v692 = vld [vmem:[#allocation2 + $0xa9] sm:$0xff]
      %v693 = vld [vmem:[#allocation2 + $0xb1] sm:$0xff]
      %710 = vrot.lane.b32.xlu0 %v678, 8
      %v711 = vpop.permute.xlu0 %710
      %712 = vrot.lane.b32.xlu0 %v679, 8
      %v713 = vpop.permute.xlu0 %712
      %714 = vrot.lane.b32.xlu0 %v680, 8
      %v715 = vpop.permute.xlu0 %714
      %716 = vrot.lane.b32.xlu0 %v681, 8
      %v717 = vpop.permute.xlu0 %716
      %718 = vrot.lane.b32.xlu0 %v682, 8
      %v719 = vpop.permute.xlu0 %718
      %720 = vrot.lane.b32.xlu0 %v683, 8
      %v721 = vpop.permute.xlu0 %720
      %722 = vrot.lane.b32.xlu0 %v684, 8
      %v723 = vpop.permute.xlu0 %722
      %724 = vrot.lane.b32.xlu0 %v685, 8
      %v725 = vpop.permute.xlu0 %724
      %726 = vrot.lane.b32.xlu0 %v686, 8
      %v727 = vpop.permute.xlu0 %726
      %728 = vrot.lane.b32.xlu0 %v687, 8
      %v729 = vpop.permute.xlu0 %728
      %730 = vrot.lane.b32.xlu0 %v688, 8
      %v731 = vpop.permute.xlu0 %730
      %732 = vrot.lane.b32.xlu0 %v689, 8
      %v733 = vpop.permute.xlu0 %732
      %734 = vrot.lane.b32.xlu0 %v690, 8
      %v735 = vpop.permute.xlu0 %734
      %736 = vrot.lane.b32.xlu0 %v691, 8
      %v737 = vpop.permute.xlu0 %736
      %738 = vrot.lane.b32.xlu0 %v692, 8
      %v739 = vpop.permute.xlu0 %738
      %740 = vrot.lane.b32.xlu0 %v693, 8
      %v741 = vpop.permute.xlu0 %740
      %vm758 = vcmask 130112
      %759 = vst.msk [vmem:[#allocation3] sm:$0xff] %vm758, %v711
      %760 = vst.msk [vmem:[#allocation3 + $0x8] sm:$0xff] %vm758, %v713
      %761 = vst.msk [vmem:[#allocation3 + $0x10] sm:$0xff] %vm758, %v715
      %762 = vst.msk [vmem:[#allocation3 + $0x18] sm:$0xff] %vm758, %v717
      %763 = vst.msk [vmem:[#allocation3 + $0x20] sm:$0xff] %vm758, %v719
      %764 = vst.msk [vmem:[#allocation3 + $0x28] sm:$0xff] %vm758, %v721
      %765 = vst.msk [vmem:[#allocation3 + $0x30] sm:$0xff] %vm758, %v723
      %766 = vst.msk [vmem:[#allocation3 + $0x38] sm:$0xff] %vm758, %v725
      %767 = vst.msk [vmem:[#allocation3 + $0x40] sm:$0xff] %vm758, %v727
      %768 = vst.msk [vmem:[#allocation3 + $0x48] sm:$0xff] %vm758, %v729
      %769 = vst.msk [vmem:[#allocation3 + $0x50] sm:$0xff] %vm758, %v731
      %770 = vst.msk [vmem:[#allocation3 + $0x58] sm:$0xff] %vm758, %v733
      %771 = vst.msk [vmem:[#allocation3 + $0x60] sm:$0xff] %vm758, %v735
      %772 = vst.msk [vmem:[#allocation3 + $0x68] sm:$0xff] %vm758, %v737
      %773 = vst.msk [vmem:[#allocation3 + $0x70] sm:$0xff] %vm758, %v739
      %774 = vst.msk [vmem:[#allocation3 + $0x78] sm:$0xff] %vm758, %v741
      %v775 = vld [vmem:[#allocation2 + $0x2] sm:$0xff]
      %v776 = vld [vmem:[#allocation2 + $0xa] sm:$0xff]
      %v777 = vld [vmem:[#allocation2 + $0x1a] sm:$0xff]
      %v778 = vld [vmem:[#allocation2 + $0x22] sm:$0xff]
      %v779 = vld [vmem:[#allocation2 + $0x32] sm:$0xff]
      %v780 = vld [vmem:[#allocation2 + $0x3a] sm:$0xff]
      %v781 = vld [vmem:[#allocation2 + $0x4a] sm:$0xff]
      %v782 = vld [vmem:[#allocation2 + $0x52] sm:$0xff]
      %v783 = vld [vmem:[#allocation2 + $0x62] sm:$0xff]
      %v784 = vld [vmem:[#allocation2 + $0x6a] sm:$0xff]
      %v785 = vld [vmem:[#allocation2 + $0x7a] sm:$0xff]
      %v786 = vld [vmem:[#allocation2 + $0x82] sm:$0xff]
      %v787 = vld [vmem:[#allocation2 + $0x92] sm:$0xff]
      %v788 = vld [vmem:[#allocation2 + $0x9a] sm:$0xff]
      %v789 = vld [vmem:[#allocation2 + $0xaa] sm:$0xff]
      %v790 = vld [vmem:[#allocation2 + $0xb2] sm:$0xff]
      %807 = vrot.lane.b32.xlu0 %v775, 16
      %v808 = vpop.permute.xlu0 %807
      %809 = vrot.lane.b32.xlu0 %v776, 16
      %v810 = vpop.permute.xlu0 %809
      %811 = vrot.lane.b32.xlu0 %v777, 16
      %v812 = vpop.permute.xlu0 %811
      %813 = vrot.lane.b32.xlu0 %v778, 16
      %v814 = vpop.permute.xlu0 %813
      %815 = vrot.lane.b32.xlu0 %v779, 16
      %v816 = vpop.permute.xlu0 %815
      %817 = vrot.lane.b32.xlu0 %v780, 16
      %v818 = vpop.permute.xlu0 %817
      %819 = vrot.lane.b32.xlu0 %v781, 16
      %v820 = vpop.permute.xlu0 %819
      %821 = vrot.lane.b32.xlu0 %v782, 16
      %v822 = vpop.permute.xlu0 %821
      %823 = vrot.lane.b32.xlu0 %v783, 16
      %v824 = vpop.permute.xlu0 %823
      %825 = vrot.lane.b32.xlu0 %v784, 16
      %v826 = vpop.permute.xlu0 %825
      %827 = vrot.lane.b32.xlu0 %v785, 16
      %v828 = vpop.permute.xlu0 %827
      %829 = vrot.lane.b32.xlu0 %v786, 16
      %v830 = vpop.permute.xlu0 %829
      %831 = vrot.lane.b32.xlu0 %v787, 16
      %v832 = vpop.permute.xlu0 %831
      %833 = vrot.lane.b32.xlu0 %v788, 16
      %v834 = vpop.permute.xlu0 %833
      %835 = vrot.lane.b32.xlu0 %v789, 16
      %v836 = vpop.permute.xlu0 %835
      %837 = vrot.lane.b32.xlu0 %v790, 16
      %v838 = vpop.permute.xlu0 %837
      %vm855 = vcmask 195712
      %856 = vst.msk [vmem:[#allocation3] sm:$0xff] %vm855, %v808
      %857 = vst.msk [vmem:[#allocation3 + $0x8] sm:$0xff] %vm855, %v810
      %858 = vst.msk [vmem:[#allocation3 + $0x10] sm:$0xff] %vm855, %v812
      %859 = vst.msk [vmem:[#allocation3 + $0x18] sm:$0xff] %vm855, %v814
      %860 = vst.msk [vmem:[#allocation3 + $0x20] sm:$0xff] %vm855, %v816
      %861 = vst.msk [vmem:[#allocation3 + $0x28] sm:$0xff] %vm855, %v818
      %862 = vst.msk [vmem:[#allocation3 + $0x30] sm:$0xff] %vm855, %v820
      %863 = vst.msk [vmem:[#allocation3 + $0x38] sm:$0xff] %vm855, %v822
      %864 = vst.msk [vmem:[#allocation3 + $0x40] sm:$0xff] %vm855, %v824
      %865 = vst.msk [vmem:[#allocation3 + $0x48] sm:$0xff] %vm855, %v826
      %866 = vst.msk [vmem:[#allocation3 + $0x50] sm:$0xff] %vm855, %v828
      %867 = vst.msk [vmem:[#allocation3 + $0x58] sm:$0xff] %vm855, %v830
      %868 = vst.msk [vmem:[#allocation3 + $0x60] sm:$0xff] %vm855, %v832
      %869 = vst.msk [vmem:[#allocation3 + $0x68] sm:$0xff] %vm855, %v834
      %870 = vst.msk [vmem:[#allocation3 + $0x70] sm:$0xff] %vm855, %v836
      %871 = vst.msk [vmem:[#allocation3 + $0x78] sm:$0xff] %vm855, %v838
      %v872 = vld [vmem:[%s624] sm:$0xff]
      %v873 = vld [vmem:[%s624 + $0x8] sm:$0xff]
      %v874 = vld [vmem:[%s624 + $0x18] sm:$0xff]
      %v875 = vld [vmem:[%s624 + $0x20] sm:$0xff]
      %v876 = vld [vmem:[%s624 + $0x30] sm:$0xff]
      %v877 = vld [vmem:[%s624 + $0x38] sm:$0xff]
      %v878 = vld [vmem:[%s624 + $0x48] sm:$0xff]
      %v879 = vld [vmem:[%s624 + $0x50] sm:$0xff]
      %v880 = vld [vmem:[%s624 + $0x60] sm:$0xff]
      %v881 = vld [vmem:[%s624 + $0x68] sm:$0xff]
      %v882 = vld [vmem:[%s624 + $0x78] sm:$0xff]
      %v883 = vld [vmem:[%s624 + $0x80] sm:$0xff]
      %v884 = vld [vmem:[%s624 + $0x90] sm:$0xff]
      %v885 = vld [vmem:[%s624 + $0x98] sm:$0xff]
      %v886 = vld [vmem:[%s624 + $0xa8] sm:$0xff]
      %v887 = vld [vmem:[%s624 + $0xb0] sm:$0xff]
      %904 = vrot.lane.b32.xlu0 %v872, 24
      %v905 = vpop.permute.xlu0 %904
      %906 = vrot.lane.b32.xlu0 %v873, 24
      %v907 = vpop.permute.xlu0 %906
      %908 = vrot.lane.b32.xlu0 %v874, 24
      %v909 = vpop.permute.xlu0 %908
      %910 = vrot.lane.b32.xlu0 %v875, 24
      %v911 = vpop.permute.xlu0 %910
      %912 = vrot.lane.b32.xlu0 %v876, 24
      %v913 = vpop.permute.xlu0 %912
      %914 = vrot.lane.b32.xlu0 %v877, 24
      %v915 = vpop.permute.xlu0 %914
      %916 = vrot.lane.b32.xlu0 %v878, 24
      %v917 = vpop.permute.xlu0 %916
      %918 = vrot.lane.b32.xlu0 %v879, 24
      %v919 = vpop.permute.xlu0 %918
      %920 = vrot.lane.b32.xlu0 %v880, 24
      %v921 = vpop.permute.xlu0 %920
      %922 = vrot.lane.b32.xlu0 %v881, 24
      %v923 = vpop.permute.xlu0 %922
      %924 = vrot.lane.b32.xlu0 %v882, 24
      %v925 = vpop.permute.xlu0 %924
      %926 = vrot.lane.b32.xlu0 %v883, 24
      %v927 = vpop.permute.xlu0 %926
      %928 = vrot.lane.b32.xlu0 %v884, 24
      %v929 = vpop.permute.xlu0 %928
      %930 = vrot.lane.b32.xlu0 %v885, 24
      %v931 = vpop.permute.xlu0 %930
      %932 = vrot.lane.b32.xlu0 %v886, 24
      %v933 = vpop.permute.xlu0 %932
      %934 = vrot.lane.b32.xlu0 %v887, 24
      %v935 = vpop.permute.xlu0 %934
      %vm952 = vcmask 261312
      %953 = vst.msk [vmem:[#allocation3] sm:$0xff] %vm952, %v905
      %954 = vst.msk [vmem:[#allocation3 + $0x8] sm:$0xff] %vm952, %v907
      %955 = vst.msk [vmem:[#allocation3 + $0x10] sm:$0xff] %vm952, %v909
      %956 = vst.msk [vmem:[#allocation3 + $0x18] sm:$0xff] %vm952, %v911
      %957 = vst.msk [vmem:[#allocation3 + $0x20] sm:$0xff] %vm952, %v913
      %958 = vst.msk [vmem:[#allocation3 + $0x28] sm:$0xff] %vm952, %v915
      %959 = vst.msk [vmem:[#allocation3 + $0x30] sm:$0xff] %vm952, %v917
      %960 = vst.msk [vmem:[#allocation3 + $0x38] sm:$0xff] %vm952, %v919
      %961 = vst.msk [vmem:[#allocation3 + $0x40] sm:$0xff] %vm952, %v921
      %962 = vst.msk [vmem:[#allocation3 + $0x48] sm:$0xff] %vm952, %v923
      %963 = vst.msk [vmem:[#allocation3 + $0x50] sm:$0xff] %vm952, %v925
      %964 = vst.msk [vmem:[#allocation3 + $0x58] sm:$0xff] %vm952, %v927
      %965 = vst.msk [vmem:[#allocation3 + $0x60] sm:$0xff] %vm952, %v929
      %966 = vst.msk [vmem:[#allocation3 + $0x68] sm:$0xff] %vm952, %v931
      %967 = vst.msk [vmem:[#allocation3 + $0x70] sm:$0xff] %vm952, %v933
      %968 = vst.msk [vmem:[#allocation3 + $0x78] sm:$0xff] %vm952, %v935
      %v969 = vld [vmem:[%s624 + $0x1] sm:$0xff]
      %v970 = vld [vmem:[%s624 + $0x9] sm:$0xff]
      %v971 = vld [vmem:[%s624 + $0x19] sm:$0xff]
      %v972 = vld [vmem:[%s624 + $0x21] sm:$0xff]
      %v973 = vld [vmem:[%s624 + $0x31] sm:$0xff]
      %v974 = vld [vmem:[%s624 + $0x39] sm:$0xff]
      %v975 = vld [vmem:[%s624 + $0x49] sm:$0xff]
      %v976 = vld [vmem:[%s624 + $0x51] sm:$0xff]
      %v977 = vld [vmem:[%s624 + $0x61] sm:$0xff]
      %v978 = vld [vmem:[%s624 + $0x69] sm:$0xff]
      %v979 = vld [vmem:[%s624 + $0x79] sm:$0xff]
      %v980 = vld [vmem:[%s624 + $0x81] sm:$0xff]
      %v981 = vld [vmem:[%s624 + $0x91] sm:$0xff]
      %v982 = vld [vmem:[%s624 + $0x99] sm:$0xff]
      %v983 = vld [vmem:[%s624 + $0xa9] sm:$0xff]
      %v984 = vld [vmem:[%s624 + $0xb1] sm:$0xff]
      %1001 = vrot.lane.b32.xlu0 %v969, 32
      %v1002 = vpop.permute.xlu0 %1001
      %1003 = vrot.lane.b32.xlu0 %v970, 32
      %v1004 = vpop.permute.xlu0 %1003
      %1005 = vrot.lane.b32.xlu0 %v971, 32
      %v1006 = vpop.permute.xlu0 %1005
      %1007 = vrot.lane.b32.xlu0 %v972, 32
      %v1008 = vpop.permute.xlu0 %1007
      %1009 = vrot.lane.b32.xlu0 %v973, 32
      %v1010 = vpop.permute.xlu0 %1009
      %1011 = vrot.lane.b32.xlu0 %v974, 32
      %v1012 = vpop.permute.xlu0 %1011
      %1013 = vrot.lane.b32.xlu0 %v975, 32
      %v1014 = vpop.permute.xlu0 %1013
      %1015 = vrot.lane.b32.xlu0 %v976, 32
      %v1016 = vpop.permute.xlu0 %1015
      %1017 = vrot.lane.b32.xlu0 %v977, 32
      %v1018 = vpop.permute.xlu0 %1017
      %1019 = vrot.lane.b32.xlu0 %v978, 32
      %v1020 = vpop.permute.xlu0 %1019
      %1021 = vrot.lane.b32.xlu0 %v979, 32
      %v1022 = vpop.permute.xlu0 %1021
      %1023 = vrot.lane.b32.xlu0 %v980, 32
      %v1024 = vpop.permute.xlu0 %1023
      %1025 = vrot.lane.b32.xlu0 %v981, 32
      %v1026 = vpop.permute.xlu0 %1025
      %1027 = vrot.lane.b32.xlu0 %v982, 32
      %v1028 = vpop.permute.xlu0 %1027
      %1029 = vrot.lane.b32.xlu0 %v983, 32
      %v1030 = vpop.permute.xlu0 %1029
      %1031 = vrot.lane.b32.xlu0 %v984, 32
      %v1032 = vpop.permute.xlu0 %1031
      %vm1049 = vcmask 326912
      %1050 = vst.msk [vmem:[#allocation3] sm:$0xff] %vm1049, %v1002
      %1051 = vst.msk [vmem:[#allocation3 + $0x8] sm:$0xff] %vm1049, %v1004
      %1052 = vst.msk [vmem:[#allocation3 + $0x10] sm:$0xff] %vm1049, %v1006
      %1053 = vst.msk [vmem:[#allocation3 + $0x18] sm:$0xff] %vm1049, %v1008
      %1054 = vst.msk [vmem:[#allocation3 + $0x20] sm:$0xff] %vm1049, %v1010
      %1055 = vst.msk [vmem:[#allocation3 + $0x28] sm:$0xff] %vm1049, %v1012
      %1056 = vst.msk [vmem:[#allocation3 + $0x30] sm:$0xff] %vm1049, %v1014
      %1057 = vst.msk [vmem:[#allocation3 + $0x38] sm:$0xff] %vm1049, %v1016
      %1058 = vst.msk [vmem:[#allocation3 + $0x40] sm:$0xff] %vm1049, %v1018
      %1059 = vst.msk [vmem:[#allocation3 + $0x48] sm:$0xff] %vm1049, %v1020
      %1060 = vst.msk [vmem:[#allocation3 + $0x50] sm:$0xff] %vm1049, %v1022
      %1061 = vst.msk [vmem:[#allocation3 + $0x58] sm:$0xff] %vm1049, %v1024
      %1062 = vst.msk [vmem:[#allocation3 + $0x60] sm:$0xff] %vm1049, %v1026
      %1063 = vst.msk [vmem:[#allocation3 + $0x68] sm:$0xff] %vm1049, %v1028
      %1064 = vst.msk [vmem:[#allocation3 + $0x70] sm:$0xff] %vm1049, %v1030
      %1065 = vst.msk [vmem:[#allocation3 + $0x78] sm:$0xff] %vm1049, %v1032
      %v1066 = vld [vmem:[%s624 + $0x2] sm:$0xff]
      %v1067 = vld [vmem:[%s624 + $0xa] sm:$0xff]
      %v1068 = vld [vmem:[%s624 + $0x1a] sm:$0xff]
      %v1069 = vld [vmem:[%s624 + $0x22] sm:$0xff]
      %v1070 = vld [vmem:[%s624 + $0x32] sm:$0xff]
      %v1071 = vld [vmem:[%s624 + $0x3a] sm:$0xff]
      %v1072 = vld [vmem:[%s624 + $0x4a] sm:$0xff]
      %v1073 = vld [vmem:[%s624 + $0x52] sm:$0xff]
      %v1074 = vld [vmem:[%s624 + $0x62] sm:$0xff]
      %v1075 = vld [vmem:[%s624 + $0x6a] sm:$0xff]
      %v1076 = vld [vmem:[%s624 + $0x7a] sm:$0xff]
      %v1077 = vld [vmem:[%s624 + $0x82] sm:$0xff]
      %v1078 = vld [vmem:[%s624 + $0x92] sm:$0xff]
      %v1079 = vld [vmem:[%s624 + $0x9a] sm:$0xff]
      %v1080 = vld [vmem:[%s624 + $0xaa] sm:$0xff]
      %v1081 = vld [vmem:[%s624 + $0xb2] sm:$0xff]
      %1098 = vrot.lane.b32.xlu0 %v1066, 40
      %v1099 = vpop.permute.xlu0 %1098
      %1100 = vrot.lane.b32.xlu0 %v1067, 40
      %v1101 = vpop.permute.xlu0 %1100
      %1102 = vrot.lane.b32.xlu0 %v1068, 40
      %v1103 = vpop.permute.xlu0 %1102
      %1104 = vrot.lane.b32.xlu0 %v1069, 40
      %v1105 = vpop.permute.xlu0 %1104
      %1106 = vrot.lane.b32.xlu0 %v1070, 40
      %v1107 = vpop.permute.xlu0 %1106
      %1108 = vrot.lane.b32.xlu0 %v1071, 40
      %v1109 = vpop.permute.xlu0 %1108
      %1110 = vrot.lane.b32.xlu0 %v1072, 40
      %v1111 = vpop.permute.xlu0 %1110
      %1112 = vrot.lane.b32.xlu0 %v1073, 40
      %v1113 = vpop.permute.xlu0 %1112
      %1114 = vrot.lane.b32.xlu0 %v1074, 40
      %v1115 = vpop.permute.xlu0 %1114
      %1116 = vrot.lane.b32.xlu0 %v1075, 40
      %v1117 = vpop.permute.xlu0 %1116
      %1118 = vrot.lane.b32.xlu0 %v1076, 40
      %v1119 = vpop.permute.xlu0 %1118
      %1120 = vrot.lane.b32.xlu0 %v1077, 40
      %v1121 = vpop.permute.xlu0 %1120
      %1122 = vrot.lane.b32.xlu0 %v1078, 40
      %v1123 = vpop.permute.xlu0 %1122
      %1124 = vrot.lane.b32.xlu0 %v1079, 40
      %v1125 = vpop.permute.xlu0 %1124
      %1126 = vrot.lane.b32.xlu0 %v1080, 40
      %v1127 = vpop.permute.xlu0 %1126
      %1128 = vrot.lane.b32.xlu0 %v1081, 40
      %v1129 = vpop.permute.xlu0 %1128
      %vm1146 = vcmask 392512
      %1147 = vst.msk [vmem:[#allocation3] sm:$0xff] %vm1146, %v1099
      %1148 = vst.msk [vmem:[#allocation3 + $0x8] sm:$0xff] %vm1146, %v1101
      %1149 = vst.msk [vmem:[#allocation3 + $0x10] sm:$0xff] %vm1146, %v1103
      %1150 = vst.msk [vmem:[#allocation3 + $0x18] sm:$0xff] %vm1146, %v1105
      %1151 = vst.msk [vmem:[#allocation3 + $0x20] sm:$0xff] %vm1146, %v1107
      %1152 = vst.msk [vmem:[#allocation3 + $0x28] sm:$0xff] %vm1146, %v1109
      %1153 = vst.msk [vmem:[#allocation3 + $0x30] sm:$0xff] %vm1146, %v1111
      %1154 = vst.msk [vmem:[#allocation3 + $0x38] sm:$0xff] %vm1146, %v1113
      %1155 = vst.msk [vmem:[#allocation3 + $0x40] sm:$0xff] %vm1146, %v1115
      %1156 = vst.msk [vmem:[#allocation3 + $0x48] sm:$0xff] %vm1146, %v1117
      %1157 = vst.msk [vmem:[#allocation3 + $0x50] sm:$0xff] %vm1146, %v1119
      %1158 = vst.msk [vmem:[#allocation3 + $0x58] sm:$0xff] %vm1146, %v1121
      %1159 = vst.msk [vmem:[#allocation3 + $0x60] sm:$0xff] %vm1146, %v1123
      %1160 = vst.msk [vmem:[#allocation3 + $0x68] sm:$0xff] %vm1146, %v1125
      %1161 = vst.msk [vmem:[#allocation3 + $0x70] sm:$0xff] %vm1146, %v1127
      %1162 = vst.msk [vmem:[#allocation3 + $0x78] sm:$0xff] %vm1146, %v1129
      %s1163 = scalar_lea.vmem [#allocation2], 48
      %v1164 = vld [vmem:[%s1163] sm:$0xff]
      %v1165 = vld [vmem:[%s1163 + $0x8] sm:$0xff]
      %v1166 = vld [vmem:[%s1163 + $0x18] sm:$0xff]
      %v1167 = vld [vmem:[%s1163 + $0x20] sm:$0xff]
      %v1168 = vld [vmem:[%s1163 + $0x30] sm:$0xff]
      %v1169 = vld [vmem:[%s1163 + $0x38] sm:$0xff]
      %v1170 = vld [vmem:[%s1163 + $0x48] sm:$0xff]
      %v1171 = vld [vmem:[%s1163 + $0x50] sm:$0xff]
      %v1172 = vld [vmem:[%s1163 + $0x60] sm:$0xff]
      %v1173 = vld [vmem:[%s1163 + $0x68] sm:$0xff]
      %v1174 = vld [vmem:[%s1163 + $0x78] sm:$0xff]
      %v1175 = vld [vmem:[%s1163 + $0x80] sm:$0xff]
      %v1176 = vld [vmem:[%s1163 + $0x90] sm:$0xff]
      %v1177 = vld [vmem:[%s1163 + $0x98] sm:$0xff]
      %v1178 = vld [vmem:[%s1163 + $0xa8] sm:$0xff]
      %v1179 = vld [vmem:[%s1163 + $0xb0] sm:$0xff]
      %1196 = vrot.lane.b32.xlu0 %v1164, 48
      %v1197 = vpop.permute.xlu0 %1196
      %1198 = vrot.lane.b32.xlu0 %v1165, 48
      %v1199 = vpop.permute.xlu0 %1198
      %1200 = vrot.lane.b32.xlu0 %v1166, 48
      %v1201 = vpop.permute.xlu0 %1200
      %1202 = vrot.lane.b32.xlu0 %v1167, 48
      %v1203 = vpop.permute.xlu0 %1202
      %1204 = vrot.lane.b32.xlu0 %v1168, 48
      %v1205 = vpop.permute.xlu0 %1204
      %1206 = vrot.lane.b32.xlu0 %v1169, 48
      %v1207 = vpop.permute.xlu0 %1206
      %1208 = vrot.lane.b32.xlu0 %v1170, 48
      %v1209 = vpop.permute.xlu0 %1208
      %1210 = vrot.lane.b32.xlu0 %v1171, 48
      %v1211 = vpop.permute.xlu0 %1210
      %1212 = vrot.lane.b32.xlu0 %v1172, 48
      %v1213 = vpop.permute.xlu0 %1212
      %1214 = vrot.lane.b32.xlu0 %v1173, 48
      %v1215 = vpop.permute.xlu0 %1214
      %1216 = vrot.lane.b32.xlu0 %v1174, 48
      %v1217 = vpop.permute.xlu0 %1216
      %1218 = vrot.lane.b32.xlu0 %v1175, 48
      %v1219 = vpop.permute.xlu0 %1218
      %1220 = vrot.lane.b32.xlu0 %v1176, 48
      %v1221 = vpop.permute.xlu0 %1220
      %1222 = vrot.lane.b32.xlu0 %v1177, 48
      %v1223 = vpop.permute.xlu0 %1222
      %1224 = vrot.lane.b32.xlu0 %v1178, 48
      %v1225 = vpop.permute.xlu0 %1224
      %1226 = vrot.lane.b32.xlu0 %v1179, 48
      %v1227 = vpop.permute.xlu0 %1226
      %vm1244 = vcmask 458112
      %1245 = vst.msk [vmem:[#allocation3] sm:$0xff] %vm1244, %v1197
      %1246 = vst.msk [vmem:[#allocation3 + $0x8] sm:$0xff] %vm1244, %v1199
      %1247 = vst.msk [vmem:[#allocation3 + $0x10] sm:$0xff] %vm1244, %v1201
      %1248 = vst.msk [vmem:[#allocation3 + $0x18] sm:$0xff] %vm1244, %v1203
      %1249 = vst.msk [vmem:[#allocation3 + $0x20] sm:$0xff] %vm1244, %v1205
      %1250 = vst.msk [vmem:[#allocation3 + $0x28] sm:$0xff] %vm1244, %v1207
      %1251 = vst.msk [vmem:[#allocation3 + $0x30] sm:$0xff] %vm1244, %v1209
      %1252 = vst.msk [vmem:[#allocation3 + $0x38] sm:$0xff] %vm1244, %v1211
      %1253 = vst.msk [vmem:[#allocation3 + $0x40] sm:$0xff] %vm1244, %v1213
      %1254 = vst.msk [vmem:[#allocation3 + $0x48] sm:$0xff] %vm1244, %v1215
      %1255 = vst.msk [vmem:[#allocation3 + $0x50] sm:$0xff] %vm1244, %v1217
      %1256 = vst.msk [vmem:[#allocation3 + $0x58] sm:$0xff] %vm1244, %v1219
      %1257 = vst.msk [vmem:[#allocation3 + $0x60] sm:$0xff] %vm1244, %v1221
      %1258 = vst.msk [vmem:[#allocation3 + $0x68] sm:$0xff] %vm1244, %v1223
      %1259 = vst.msk [vmem:[#allocation3 + $0x70] sm:$0xff] %vm1244, %v1225
      %1260 = vst.msk [vmem:[#allocation3 + $0x78] sm:$0xff] %vm1244, %v1227
      %v1261 = vld [vmem:[%s1163 + $0x1] sm:$0xff]
      %v1262 = vld [vmem:[%s1163 + $0x9] sm:$0xff]
      %v1263 = vld [vmem:[%s1163 + $0x19] sm:$0xff]
      %v1264 = vld [vmem:[%s1163 + $0x21] sm:$0xff]
      %v1265 = vld [vmem:[%s1163 + $0x31] sm:$0xff]
      %v1266 = vld [vmem:[%s1163 + $0x39] sm:$0xff]
      %v1267 = vld [vmem:[%s1163 + $0x49] sm:$0xff]
      %v1268 = vld [vmem:[%s1163 + $0x51] sm:$0xff]
      %v1269 = vld [vmem:[%s1163 + $0x61] sm:$0xff]
      %v1270 = vld [vmem:[%s1163 + $0x69] sm:$0xff]
      %v1271 = vld [vmem:[%s1163 + $0x79] sm:$0xff]
      %v1272 = vld [vmem:[%s1163 + $0x81] sm:$0xff]
      %v1273 = vld [vmem:[%s1163 + $0x91] sm:$0xff]
      %v1274 = vld [vmem:[%s1163 + $0x99] sm:$0xff]
      %v1275 = vld [vmem:[%s1163 + $0xa9] sm:$0xff]
      %v1276 = vld [vmem:[%s1163 + $0xb1] sm:$0xff]
      %1293 = vrot.lane.b32.xlu0 %v1261, 56
      %v1294 = vpop.permute.xlu0 %1293
      %1295 = vrot.lane.b32.xlu0 %v1262, 56
      %v1296 = vpop.permute.xlu0 %1295
      %1297 = vrot.lane.b32.xlu0 %v1263, 56
      %v1298 = vpop.permute.xlu0 %1297
      %1299 = vrot.lane.b32.xlu0 %v1264, 56
      %v1300 = vpop.permute.xlu0 %1299
      %1301 = vrot.lane.b32.xlu0 %v1265, 56
      %v1302 = vpop.permute.xlu0 %1301
      %1303 = vrot.lane.b32.xlu0 %v1266, 56
      %v1304 = vpop.permute.xlu0 %1303
      %1305 = vrot.lane.b32.xlu0 %v1267, 56
      %v1306 = vpop.permute.xlu0 %1305
      %1307 = vrot.lane.b32.xlu0 %v1268, 56
      %v1308 = vpop.permute.xlu0 %1307
      %1309 = vrot.lane.b32.xlu0 %v1269, 56
      %v1310 = vpop.permute.xlu0 %1309
      %1311 = vrot.lane.b32.xlu0 %v1270, 56
      %v1312 = vpop.permute.xlu0 %1311
      %1313 = vrot.lane.b32.xlu0 %v1271, 56
      %v1314 = vpop.permute.xlu0 %1313
      %1315 = vrot.lane.b32.xlu0 %v1272, 56
      %v1316 = vpop.permute.xlu0 %1315
      %1317 = vrot.lane.b32.xlu0 %v1273, 56
      %v1318 = vpop.permute.xlu0 %1317
      %1319 = vrot.lane.b32.xlu0 %v1274, 56
      %v1320 = vpop.permute.xlu0 %1319
      %1321 = vrot.lane.b32.xlu0 %v1275, 56
      %v1322 = vpop.permute.xlu0 %1321
      %1323 = vrot.lane.b32.xlu0 %v1276, 56
      %v1324 = vpop.permute.xlu0 %1323
      %vm1341 = vcmask 523712
      %1342 = vst.msk [vmem:[#allocation3] sm:$0xff] %vm1341, %v1294
      %1343 = vst.msk [vmem:[#allocation3 + $0x8] sm:$0xff] %vm1341, %v1296
      %1344 = vst.msk [vmem:[#allocation3 + $0x10] sm:$0xff] %vm1341, %v1298
      %1345 = vst.msk [vmem:[#allocation3 + $0x18] sm:$0xff] %vm1341, %v1300
      %1346 = vst.msk [vmem:[#allocation3 + $0x20] sm:$0xff] %vm1341, %v1302
      %1347 = vst.msk [vmem:[#allocation3 + $0x28] sm:$0xff] %vm1341, %v1304
      %1348 = vst.msk [vmem:[#allocation3 + $0x30] sm:$0xff] %vm1341, %v1306
      %1349 = vst.msk [vmem:[#allocation3 + $0x38] sm:$0xff] %vm1341, %v1308
      %1350 = vst.msk [vmem:[#allocation3 + $0x40] sm:$0xff] %vm1341, %v1310
      %1351 = vst.msk [vmem:[#allocation3 + $0x48] sm:$0xff] %vm1341, %v1312
      %1352 = vst.msk [vmem:[#allocation3 + $0x50] sm:$0xff] %vm1341, %v1314
      %1353 = vst.msk [vmem:[#allocation3 + $0x58] sm:$0xff] %vm1341, %v1316
      %1354 = vst.msk [vmem:[#allocation3 + $0x60] sm:$0xff] %vm1341, %v1318
      %1355 = vst.msk [vmem:[#allocation3 + $0x68] sm:$0xff] %vm1341, %v1320
      %1356 = vst.msk [vmem:[#allocation3 + $0x70] sm:$0xff] %vm1341, %v1322
      %1357 = vst.msk [vmem:[#allocation3 + $0x78] sm:$0xff] %vm1341, %v1324
      %v1358 = vld [vmem:[%s1163 + $0x2] sm:$0xff]
      %v1359 = vld [vmem:[%s1163 + $0xa] sm:$0xff]
      %v1360 = vld [vmem:[%s1163 + $0x1a] sm:$0xff]
      %v1361 = vld [vmem:[%s1163 + $0x22] sm:$0xff]
      %v1362 = vld [vmem:[%s1163 + $0x32] sm:$0xff]
      %v1363 = vld [vmem:[%s1163 + $0x3a] sm:$0xff]
      %v1364 = vld [vmem:[%s1163 + $0x4a] sm:$0xff]
      %v1365 = vld [vmem:[%s1163 + $0x52] sm:$0xff]
      %v1366 = vld [vmem:[%s1163 + $0x62] sm:$0xff]
      %v1367 = vld [vmem:[%s1163 + $0x6a] sm:$0xff]
      %v1368 = vld [vmem:[%s1163 + $0x7a] sm:$0xff]
      %v1369 = vld [vmem:[%s1163 + $0x82] sm:$0xff]
      %v1370 = vld [vmem:[%s1163 + $0x92] sm:$0xff]
      %v1371 = vld [vmem:[%s1163 + $0x9a] sm:$0xff]
      %v1372 = vld [vmem:[%s1163 + $0xaa] sm:$0xff]
      %v1373 = vld [vmem:[%s1163 + $0xb2] sm:$0xff]
      %1390 = vrot.lane.b32.xlu0 %v1358, 64
      %v1391 = vpop.permute.xlu0 %1390
      %1392 = vrot.lane.b32.xlu0 %v1359, 64
      %v1393 = vpop.permute.xlu0 %1392
      %1394 = vrot.lane.b32.xlu0 %v1360, 64
      %v1395 = vpop.permute.xlu0 %1394
      %1396 = vrot.lane.b32.xlu0 %v1361, 64
      %v1397 = vpop.permute.xlu0 %1396
      %1398 = vrot.lane.b32.xlu0 %v1362, 64
      %v1399 = vpop.permute.xlu0 %1398
      %1400 = vrot.lane.b32.xlu0 %v1363, 64
      %v1401 = vpop.permute.xlu0 %1400
      %1402 = vrot.lane.b32.xlu0 %v1364, 64
      %v1403 = vpop.permute.xlu0 %1402
      %1404 = vrot.lane.b32.xlu0 %v1365, 64
      %v1405 = vpop.permute.xlu0 %1404
      %1406 = vrot.lane.b32.xlu0 %v1366, 64
      %v1407 = vpop.permute.xlu0 %1406
      %1408 = vrot.lane.b32.xlu0 %v1367, 64
      %v1409 = vpop.permute.xlu0 %1408
      %1410 = vrot.lane.b32.xlu0 %v1368, 64
      %v1411 = vpop.permute.xlu0 %1410
      %1412 = vrot.lane.b32.xlu0 %v1369, 64
      %v1413 = vpop.permute.xlu0 %1412
      %1414 = vrot.lane.b32.xlu0 %v1370, 64
      %v1415 = vpop.permute.xlu0 %1414
      %1416 = vrot.lane.b32.xlu0 %v1371, 64
      %v1417 = vpop.permute.xlu0 %1416
      %1418 = vrot.lane.b32.xlu0 %v1372, 64
      %v1419 = vpop.permute.xlu0 %1418
      %1420 = vrot.lane.b32.xlu0 %v1373, 64
      %v1421 = vpop.permute.xlu0 %1420
      %vm1438 = vcmask 589312
      %1439 = vst.msk [vmem:[#allocation3] sm:$0xff] %vm1438, %v1391
      %1440 = vst.msk [vmem:[#allocation3 + $0x8] sm:$0xff] %vm1438, %v1393
      %1441 = vst.msk [vmem:[#allocation3 + $0x10] sm:$0xff] %vm1438, %v1395
      %1442 = vst.msk [vmem:[#allocation3 + $0x18] sm:$0xff] %vm1438, %v1397
      %1443 = vst.msk [vmem:[#allocation3 + $0x20] sm:$0xff] %vm1438, %v1399
      %1444 = vst.msk [vmem:[#allocation3 + $0x28] sm:$0xff] %vm1438, %v1401
      %1445 = vst.msk [vmem:[#allocation3 + $0x30] sm:$0xff] %vm1438, %v1403
      %1446 = vst.msk [vmem:[#allocation3 + $0x38] sm:$0xff] %vm1438, %v1405
      %1447 = vst.msk [vmem:[#allocation3 + $0x40] sm:$0xff] %vm1438, %v1407
      %1448 = vst.msk [vmem:[#allocation3 + $0x48] sm:$0xff] %vm1438, %v1409
      %1449 = vst.msk [vmem:[#allocation3 + $0x50] sm:$0xff] %vm1438, %v1411
      %1450 = vst.msk [vmem:[#allocation3 + $0x58] sm:$0xff] %vm1438, %v1413
      %1451 = vst.msk [vmem:[#allocation3 + $0x60] sm:$0xff] %vm1438, %v1415
      %1452 = vst.msk [vmem:[#allocation3 + $0x68] sm:$0xff] %vm1438, %v1417
      %1453 = vst.msk [vmem:[#allocation3 + $0x70] sm:$0xff] %vm1438, %v1419
      %1454 = vst.msk [vmem:[#allocation3 + $0x78] sm:$0xff] %vm1438, %v1421
      %v1455 = vld [vmem:[#allocation3] sm:$0xff]
      %v1456 = vld [vmem:[#allocation3 + $0x8] sm:$0xff]
      %v1457 = vld [vmem:[#allocation3 + $0x10] sm:$0xff]
      %v1458 = vld [vmem:[#allocation3 + $0x18] sm:$0xff]
      %v1459 = vld [vmem:[#allocation3 + $0x20] sm:$0xff]
      %v1460 = vld [vmem:[#allocation3 + $0x28] sm:$0xff]
      %v1461 = vld [vmem:[#allocation3 + $0x30] sm:$0xff]
      %v1462 = vld [vmem:[#allocation3 + $0x38] sm:$0xff]
      %v1463 = vld [vmem:[#allocation3 + $0x40] sm:$0xff]
      %v1464 = vld [vmem:[#allocation3 + $0x48] sm:$0xff]
      %v1465 = vld [vmem:[#allocation3 + $0x50] sm:$0xff]
      %v1466 = vld [vmem:[#allocation3 + $0x58] sm:$0xff]
      %v1467 = vld [vmem:[#allocation3 + $0x60] sm:$0xff]
      %v1468 = vld [vmem:[#allocation3 + $0x68] sm:$0xff]
      %v1469 = vld [vmem:[#allocation3 + $0x70] sm:$0xff]
      %v1470 = vld [vmem:[#allocation3 + $0x78] sm:$0xff]
      %v1471 = vld [vmem:[%s3] sm:$0xff]
      %v1472 = vld [vmem:[%s3 + $0x8] sm:$0xff]
      %v1473 = vld [vmem:[%s3 + $0x10] sm:$0xff]
      %v1474 = vld [vmem:[%s3 + $0x18] sm:$0xff]
      %v1475 = vld [vmem:[%s3 + $0x20] sm:$0xff]
      %v1476 = vld [vmem:[%s3 + $0x28] sm:$0xff]
      %v1477 = vld [vmem:[%s3 + $0x30] sm:$0xff]
      %v1478 = vld [vmem:[%s3 + $0x38] sm:$0xff]
      %v1479 = vld [vmem:[%s3 + $0x40] sm:$0xff]
      %v1480 = vld [vmem:[%s4] sm:$0x1]
      %v1482 = vlaneseq
      %v1483 = vshrl.u32 %v1482, 7
      %v1484 = vsub.s32 0, %v1483
      %v1485 = vrot.slane %v1480, %v1484
      %vm1487 = vcmask 588800
      %v1489 = vsel %vm1487, %v1455, 0
      %v1492 = vsel %vm1487, %v1456, 0
      %v1495 = vsel %vm1487, %v1457, 0
      %v1498 = vsel %vm1487, %v1458, 0
      %v1501 = vsel %vm1487, %v1459, 0
      %v1504 = vsel %vm1487, %v1460, 0
      %v1507 = vsel %vm1487, %v1461, 0
      %v1510 = vsel %vm1487, %v1462, 0
      %v1513 = vsel %vm1487, %v1463, 0
      %v1516 = vsel %vm1487, %v1464, 0
      %v1519 = vsel %vm1487, %v1465, 0
      %v1522 = vsel %vm1487, %v1466, 0
      %v1525 = vsel %vm1487, %v1467, 0
      %v1528 = vsel %vm1487, %v1468, 0
      %v1531 = vsel %vm1487, %v1469, 0
      %v1534 = vsel %vm1487, %v1470, 0
      %1536 = vmatprep.subr.mxu0 0.0
      %1537 = vmatpush1.msra.mxu0 %v1471
      %1538 = vmatprep.subr.mxu0 0.0
      %1539 = vmatpush1.msra.mxu0 %v1472
      %1540 = vmatprep.subr.mxu0 0.0
      %1541 = vmatpush1.msra.mxu0 %v1473
      %1542 = vmatprep.subr.mxu0 0.0
      %1543 = vmatpush1.msra.mxu0 %v1474
      %1544 = vmatprep.subr.mxu0 0.0
      %1545 = vmatpush1.msra.mxu0 %v1475
      %1546 = vmatprep.subr.mxu0 0.0
      %1547 = vmatpush1.msra.mxu0 %v1476
      %1548 = vmatprep.subr.mxu0 0.0
      %1549 = vmatpush1.msra.mxu0 %v1477
      %1550 = vmatprep.subr.mxu0 0.0
      %1551 = vmatpush1.msra.mxu0 %v1478
      %1552 = vmatprep.subr.mxu0 0.0
      %1553 = vmatpush1.msra.mxu0 %v1479
      %1554 = vmatprep.subr.mxu0 0.0
      %1555 = vmatpush1.msra.mxu0 0.0
      %1556 = vmatprep.subr.mxu0 0.0
      %1557 = vmatpush1.msra.mxu0 0.0
      %1558 = vmatprep.subr.mxu0 0.0
      %1559 = vmatpush1.msra.mxu0 0.0
      %1560 = vmatprep.subr.mxu0 0.0
      %1561 = vmatpush1.msra.mxu0 0.0
      %1562 = vmatprep.subr.mxu0 0.0
      %1563 = vmatpush1.msra.mxu0 0.0
      %1564 = vmatprep.subr.mxu0 0.0
      %1565 = vmatpush1.msra.mxu0 0.0
      %1566 = vmatprep.subr.mxu0 0.0
      %1567 = vmatpush1.msra.mxu0 0.0
      %1568 = vmatprep.subr.mxu0 0.0
      %1569 = vmatpush1.msra.mxu0 0.0
      %1570 = vmatprep.subr.mxu0 0.0
      %1571 = vmatpush1.msra.mxu0 0.0
      %1572 = vmatprep.subr.mxu0 0.0
      %1573 = vmatpush1.msra.mxu0 0.0
      %1574 = vmatprep.subr.mxu0 0.0
      %1575 = vmatpush1.msra.mxu0 0.0
      %1576 = vmatprep.subr.mxu0 0.0
      %1577 = vmatpush1.msra.mxu0 0.0
      %1578 = vmatprep.subr.mxu0 0.0
      %1579 = vmatpush1.msra.mxu0 0.0
      %1580 = vmatprep.subr.mxu0 0.0
      %1581 = vmatpush1.msra.mxu0 0.0
      %1582 = vmatprep.subr.mxu0 0.0
      %1583 = vmatpush1.msra.mxu0 0.0
      %1584 = vmatprep.subr.mxu0 0.0
      %1585 = vmatpush1.msra.mxu0 0.0
      %1586 = vmatprep.subr.mxu0 0.0
      %1587 = vmatpush1.msra.mxu0 0.0
      %1588 = vmatprep.subr.mxu0 0.0
      %1589 = vmatpush1.msra.mxu0 0.0
      %1590 = vmatprep.subr.mxu0 0.0
      %1591 = vmatpush1.msra.mxu0 0.0
      %1592 = vmatprep.subr.mxu0 0.0
      %1593 = vmatpush1.msra.mxu0 0.0
      %1594 = vmatprep.subr.mxu0 0.0
      %1595 = vmatpush1.msra.mxu0 0.0
      %1596 = vmatprep.subr.mxu0 0.0
      %1597 = vmatpush1.msra.mxu0 0.0
      %1598 = vmatprep.subr.mxu0 0.0
      %1599 = vmatpush1.msra.mxu0 0.0
      %1600 = vmatprep.mubr.f32.mxu0 0.0
      %1601 = vmatmul.mubr.f32.gmra.mrb[0].mxu0 %v1489
      %v1602 = vpop.f32.mrb[0].mxu0
      %v1603 = vadd.f32 %v1485, %v1602
      %v1604 = vpop.f32.mrb[0].mxu0
      %1605 = vmatprep.mubr.f32.mxu0 0.0
      %1606 = vmatmul.mubr.f32.gmra.mrb[0].mxu0 %v1492
      %v1607 = vpop.f32.mrb[0].mxu0
      %v1608 = vadd.f32 %v1485, %v1607
      %v1609 = vpop.f32.mrb[0].mxu0
      %1610 = vmatprep.mubr.f32.mxu0 0.0
      %1611 = vmatmul.mubr.f32.gmra.mrb[0].mxu0 %v1495
      %v1612 = vpop.f32.mrb[0].mxu0
      %v1613 = vadd.f32 %v1485, %v1612
      %v1614 = vpop.f32.mrb[0].mxu0
      %1615 = vmatprep.mubr.f32.mxu0 0.0
      %1616 = vmatmul.mubr.f32.gmra.mrb[0].mxu0 %v1498
      %v1617 = vpop.f32.mrb[0].mxu0
      %v1618 = vadd.f32 %v1485, %v1617
      %v1619 = vpop.f32.mrb[0].mxu0
      %1620 = vmatprep.mubr.f32.mxu0 0.0
      %1621 = vmatmul.mubr.f32.gmra.mrb[0].mxu0 %v1501
      %v1622 = vpop.f32.mrb[0].mxu0
      %v1623 = vadd.f32 %v1485, %v1622
      %v1624 = vpop.f32.mrb[0].mxu0
      %1625 = vmatprep.mubr.f32.mxu0 0.0
      %1626 = vmatmul.mubr.f32.gmra.mrb[0].mxu0 %v1504
      %v1627 = vpop.f32.mrb[0].mxu0
      %v1628 = vadd.f32 %v1485, %v1627
      %v1629 = vpop.f32.mrb[0].mxu0
      %1630 = vmatprep.mubr.f32.mxu0 0.0
      %1631 = vmatmul.mubr.f32.gmra.mrb[0].mxu0 %v1507
      %v1632 = vpop.f32.mrb[0].mxu0
      %v1633 = vadd.f32 %v1485, %v1632
      %v1634 = vpop.f32.mrb[0].mxu0
      %1635 = vmatprep.mubr.f32.mxu0 0.0
      %1636 = vmatmul.mubr.f32.gmra.mrb[0].mxu0 %v1510
      %v1637 = vpop.f32.mrb[0].mxu0
      %v1638 = vadd.f32 %v1485, %v1637
      %v1639 = vpop.f32.mrb[0].mxu0
      %1640 = vmatprep.mubr.f32.mxu0 0.0
      %1641 = vmatmul.mubr.f32.gmra.mrb[0].mxu0 %v1513
      %v1642 = vpop.f32.mrb[0].mxu0
      %v1643 = vadd.f32 %v1485, %v1642
      %v1644 = vpop.f32.mrb[0].mxu0
      %1645 = vmatprep.mubr.f32.mxu0 0.0
      %1646 = vmatmul.mubr.f32.gmra.mrb[0].mxu0 %v1516
      %v1647 = vpop.f32.mrb[0].mxu0
      %v1648 = vadd.f32 %v1485, %v1647
      %v1649 = vpop.f32.mrb[0].mxu0
      %1650 = vmatprep.mubr.f32.mxu0 0.0
      %1651 = vmatmul.mubr.f32.gmra.mrb[0].mxu0 %v1519
      %v1652 = vpop.f32.mrb[0].mxu0
      %v1653 = vadd.f32 %v1485, %v1652
      %v1654 = vpop.f32.mrb[0].mxu0
      %1655 = vmatprep.mubr.f32.mxu0 0.0
      %1656 = vmatmul.mubr.f32.gmra.mrb[0].mxu0 %v1522
      %v1657 = vpop.f32.mrb[0].mxu0
      %v1658 = vadd.f32 %v1485, %v1657
      %v1659 = vpop.f32.mrb[0].mxu0
      %1660 = vmatprep.mubr.f32.mxu0 0.0
      %1661 = vmatmul.mubr.f32.gmra.mrb[0].mxu0 %v1525
      %v1662 = vpop.f32.mrb[0].mxu0
      %v1663 = vadd.f32 %v1485, %v1662
      %v1664 = vpop.f32.mrb[0].mxu0
      %1665 = vmatprep.mubr.f32.mxu0 0.0
      %1666 = vmatmul.mubr.f32.gmra.mrb[0].mxu0 %v1528
      %v1667 = vpop.f32.mrb[0].mxu0
      %v1668 = vadd.f32 %v1485, %v1667
      %v1669 = vpop.f32.mrb[0].mxu0
      %1670 = vmatprep.mubr.f32.mxu0 0.0
      %1671 = vmatmul.mubr.f32.gmra.mrb[0].mxu0 %v1531
      %v1672 = vpop.f32.mrb[0].mxu0
      %v1673 = vadd.f32 %v1485, %v1672
      %v1674 = vpop.f32.mrb[0].mxu0
      %1675 = vmatprep.mubr.f32.mxu0 0.0
      %1676 = vmatmul.mubr.f32.gmra.mrb[0].mxu0 %v1534
      %v1677 = vpop.f32.mrb[0].mxu0
      %v1678 = vadd.f32 %v1485, %v1677
      %v1679 = vpop.f32.mrb[0].mxu0
      %1680 = vdwg.mxu0
      // Predicated region
      $region45: #{conv_block.4} parent=43 // pred_check
        %p1681 = pneg %p580
      $region46: #{conv_block.4} parent=43 // pred_check_branch
        %1683 = sbr.rel (%p1681) target = $region48
      $region47: #{conv_block.4} parent=43 // pred_region
        %vm1684 = vcmask 57344
        %1685 = vst.msk [vmem:[%s486] sm:$0x1] %vm1684, 0.0
        %1686 = vst.msk [vmem:[%s489] sm:$0x1] %vm1684, 0.0
      $region48: #{conv_block.4} parent=43 // pred_fallthru
        _
      %v1687 = vld [vmem:[%s486] sm:$0x1]
      %v1688 = vsel %vm592, %v1603, 0.0
      %v1689 = vsel %vm592, %v1608, 0.0
      %v1690 = vadd.f32 %v1688, %v1689
      %v1691 = vsel %vm592, %v1613, 0.0
      %v1692 = vadd.f32 %v1690, %v1691
      %v1693 = vsel %vm592, %v1618, 0.0
      %v1694 = vadd.f32 %v1692, %v1693
      %v1695 = vsel %vm592, %v1623, 0.0
      %v1696 = vadd.f32 %v1694, %v1695
      %v1697 = vsel %vm592, %v1628, 0.0
      %v1698 = vadd.f32 %v1696, %v1697
      %v1699 = vsel %vm592, %v1633, 0.0
      %v1700 = vadd.f32 %v1698, %v1699
      %v1701 = vsel %vm592, %v1638, 0.0
      %v1702 = vadd.f32 %v1700, %v1701
      %v1703 = vsel %vm592, %v1643, 0.0
      %v1704 = vadd.f32 %v1702, %v1703
      %v1705 = vsel %vm592, %v1648, 0.0
      %v1706 = vadd.f32 %v1704, %v1705
      %v1707 = vsel %vm592, %v1653, 0.0
      %v1708 = vadd.f32 %v1706, %v1707
      %v1709 = vsel %vm592, %v1658, 0.0
      %v1710 = vadd.f32 %v1708, %v1709
      %v1711 = vsel %vm592, %v1663, 0.0
      %v1712 = vadd.f32 %v1710, %v1711
      %v1713 = vsel %vm592, %v1668, 0.0
      %v1714 = vadd.f32 %v1712, %v1713
      %v1715 = vsel %vm592, %v1673, 0.0
      %v1716 = vadd.f32 %v1714, %v1715
      %v1717 = vsel %vm592, %v1678, 0.0
      %v1718 = vadd.f32 %v1716, %v1717
      %v1719 = vrot.slane %v1718, 4
      %v1720 = vadd.f32 %v1718, %v1719
      %v1721 = vrot.slane %v1720, 2
      %v1722 = vadd.f32 %v1720, %v1721
      %v1723 = vrot.slane %v1722, 1
      %v1724 = vadd.f32 %v1722, %v1723
      %v1725 = vadd.f32 %v1687, %v1724
      %vm1726 = vcmask 57344
      %1727 = vst.msk [vmem:[%s486] sm:$0x1] %vm1726, %v1725
      %v1728 = vld [vmem:[%s489] sm:$0x1]
      %v1729 = vmul.f32 %v1603, %v1603
      %v1730 = vmul.f32 %v1608, %v1608
      %v1731 = vmul.f32 %v1613, %v1613
      %v1732 = vmul.f32 %v1618, %v1618
      %v1733 = vmul.f32 %v1623, %v1623
      %v1734 = vmul.f32 %v1628, %v1628
      %v1735 = vmul.f32 %v1633, %v1633
      %v1736 = vmul.f32 %v1638, %v1638
      %v1737 = vmul.f32 %v1643, %v1643
      %v1738 = vmul.f32 %v1648, %v1648
      %v1739 = vmul.f32 %v1653, %v1653
      %v1740 = vmul.f32 %v1658, %v1658
      %v1741 = vmul.f32 %v1663, %v1663
      %v1742 = vmul.f32 %v1668, %v1668
      %v1743 = vmul.f32 %v1673, %v1673
      %v1744 = vmul.f32 %v1678, %v1678
      %v1745 = vsel %vm592, %v1729, 0.0
      %v1746 = vsel %vm592, %v1730, 0.0
      %v1747 = vadd.f32 %v1745, %v1746
      %v1748 = vsel %vm592, %v1731, 0.0
      %v1749 = vadd.f32 %v1747, %v1748
      %v1750 = vsel %vm592, %v1732, 0.0
      %v1751 = vadd.f32 %v1749, %v1750
      %v1752 = vsel %vm592, %v1733, 0.0
      %v1753 = vadd.f32 %v1751, %v1752
      %v1754 = vsel %vm592, %v1734, 0.0
      %v1755 = vadd.f32 %v1753, %v1754
      %v1756 = vsel %vm592, %v1735, 0.0
      %v1757 = vadd.f32 %v1755, %v1756
      %v1758 = vsel %vm592, %v1736, 0.0
      %v1759 = vadd.f32 %v1757, %v1758
      %v1760 = vsel %vm592, %v1737, 0.0
      %v1761 = vadd.f32 %v1759, %v1760
      %v1762 = vsel %vm592, %v1738, 0.0
      %v1763 = vadd.f32 %v1761, %v1762
      %v1764 = vsel %vm592, %v1739, 0.0
      %v1765 = vadd.f32 %v1763, %v1764
      %v1766 = vsel %vm592, %v1740, 0.0
      %v1767 = vadd.f32 %v1765, %v1766
      %v1768 = vsel %vm592, %v1741, 0.0
      %v1769 = vadd.f32 %v1767, %v1768
      %v1770 = vsel %vm592, %v1742, 0.0
      %v1771 = vadd.f32 %v1769, %v1770
      %v1772 = vsel %vm592, %v1743, 0.0
      %v1773 = vadd.f32 %v1771, %v1772
      %v1774 = vsel %vm592, %v1744, 0.0
      %v1775 = vadd.f32 %v1773, %v1774
      %v1776 = vrot.slane %v1775, 4
      %v1777 = vadd.f32 %v1775, %v1776
      %v1778 = vrot.slane %v1777, 2
      %v1779 = vadd.f32 %v1777, %v1778
      %v1780 = vrot.slane %v1779, 1
      %v1781 = vadd.f32 %v1779, %v1780
      %v1782 = vadd.f32 %v1728, %v1781
      %1783 = vst.msk [vmem:[%s489] sm:$0x1] %vm1726, %v1782
      %1784 = vst.msk [vmem:[%s482] sm:$0xff] %vm592, %v1603
      %1785 = vst.msk [vmem:[%s482 + $0x8] sm:$0xff] %vm592, %v1608
      %1786 = vst.msk [vmem:[%s482 + $0x10] sm:$0xff] %vm592, %v1613
      %1787 = vst.msk [vmem:[%s482 + $0x18] sm:$0xff] %vm592, %v1618
      %1788 = vst.msk [vmem:[%s482 + $0x20] sm:$0xff] %vm592, %v1623
      %1789 = vst.msk [vmem:[%s482 + $0x28] sm:$0xff] %vm592, %v1628
      %1790 = vst.msk [vmem:[%s482 + $0x30] sm:$0xff] %vm592, %v1633
      %1791 = vst.msk [vmem:[%s482 + $0x38] sm:$0xff] %vm592, %v1638
      %1792 = vst.msk [vmem:[%s482 + $0x40] sm:$0xff] %vm592, %v1643
      %1793 = vst.msk [vmem:[%s482 + $0x48] sm:$0xff] %vm592, %v1648
      %1794 = vst.msk [vmem:[%s482 + $0x50] sm:$0xff] %vm592, %v1653
      %1795 = vst.msk [vmem:[%s482 + $0x58] sm:$0xff] %vm592, %v1658
      %1796 = vst.msk [vmem:[%s482 + $0x60] sm:$0xff] %vm592, %v1663
      %1797 = vst.msk [vmem:[%s482 + $0x68] sm:$0xff] %vm592, %v1668
      %1798 = vst.msk [vmem:[%s482 + $0x70] sm:$0xff] %vm592, %v1673
      %1799 = vst.msk [vmem:[%s482 + $0x78] sm:$0xff] %vm592, %v1678
      %s1800 = smul.u32 16, %s25
      %p1801 = scmp.lt.s32.totalorder %s24, 1
      %s1802 = scalar_select %p1801, %s24, 1
      %p1803 = scmp.lt.s32.totalorder %s1800, 31
      %s1804 = scalar_select %p1803, %s1800, 31
      %s1805 = smul.addr %s1802, 32
      %s1806 = sadd.s32 %s1804, %s1805
      %s1807 = smul.addr %s1806, 8
      %s1808 = scalar_lea.vmem %s6, %s1807
      %p1809 = scmp.lt.s32.totalorder %s24, 1
      %s1810 = scalar_select %p1809, %s24, 1
      %s1811 = scalar_lea.vmem %s7, %s1810
      %p1812 = scmp.lt.s32.totalorder %s24, 1
      %s1813 = scalar_select %p1812, %s24, 1
      %s1814 = scalar_lea.vmem %s8, %s1813
      // Predicated region
      $region49: #{conv_block.4} parent=43 // pred_check
        %p1815 = pneg %p215
      $region50: #{conv_block.4} parent=43 // pred_check_branch
        %1817 = sbr.rel (%p1815) target = $region52
      $region51: #{conv_block.4} parent=43 // pred_region
        %s1818 = smul.u32 16, %s25
      $region52: #{conv_block.4} parent=43 // pred_fallthru
        _
      // Predicated region
      $region53: #{conv_block.4} parent=43 // pred_check
        %p1819 = pneg %p241
      $region54: #{conv_block.4} parent=43 // pred_check_branch
        %1821 = sbr.rel (%p1819) target = $region56
      $region55: #{conv_block.4} parent=43 // pred_region
        _
      $region56: #{conv_block.4} parent=43 // pred_fallthru
        _
      // Predicated region
      $region57: #{conv_block.4} parent=43 // pred_check
        %p1822 = pneg %p267
      $region58: #{conv_block.4} parent=43 // pred_check_branch
        %1824 = sbr.rel (%p1822) target = $region60
      $region59: #{conv_block.4} parent=43 // pred_region
        _
      $region60: #{conv_block.4} parent=43 // pred_fallthru
        _
    $region44: #{conv_block.4} parent=5 // pred_fallthru
      _
    %p1825 = scmp.le.s32.totalorder 2, %s15
    // Predicated region
    $region61: #{conv_block.4} parent=5 // pred_check
      %p1826 = pneg %p1825
    $region62: #{conv_block.4} parent=5 // pred_check_branch
      %1828 = sbr.rel (%p1826) target = $region64
    $region63: #{conv_block.4} parent=5 // pred_region
      %s1829 = ssub.s32 %s15, 2
      // Predicated region
      $region65: #{conv_block.4} parent=63 // pred_check
        %p1830 = pneg %p221
      $region66: #{conv_block.4} parent=63 // pred_check_branch
        %1832 = sbr.rel (%p1830) target = $region68
      $region67: #{conv_block.4} parent=63 // pred_region
        %s1833 = smul.u32 16, %s27
        %p1834 = scmp.lt.s32.totalorder %s26, 1
        %s1835 = scalar_select %p1834, %s26, 1
        %p1836 = scmp.lt.s32.totalorder %s1833, 31
        %s1837 = scalar_select %p1836, %s1833, 31
        %s1838 = smul.addr %s1835, 32
        %s1839 = sadd.s32 %s1837, %s1838
        %s1840 = smul.addr %s1839, 8
        %s1841 = scalar_lea.vmem %s6, %s1840
      $region68: #{conv_block.4} parent=63 // pred_fallthru
        _
      // Predicated region
      $region69: #{conv_block.4} parent=63 // pred_check
        %p1842 = pneg %p247
      $region70: #{conv_block.4} parent=63 // pred_check_branch
        %1844 = sbr.rel (%p1842) target = $region72
      $region71: #{conv_block.4} parent=63 // pred_region
        %p1845 = scmp.lt.s32.totalorder %s26, 1
        %s1846 = scalar_select %p1845, %s26, 1
        %s1847 = scalar_lea.vmem %s7, %s1846
      $region72: #{conv_block.4} parent=63 // pred_fallthru
        _
      // Predicated region
      $region73: #{conv_block.4} parent=63 // pred_check
        %p1848 = pneg %p273
      $region74: #{conv_block.4} parent=63 // pred_check_branch
        %1850 = sbr.rel (%p1848) target = $region76
      $region75: #{conv_block.4} parent=63 // pred_region
        %p1851 = scmp.lt.s32.totalorder %s26, 1
        %s1852 = scalar_select %p1851, %s26, 1
        %s1853 = scalar_lea.vmem %s8, %s1852
      $region76: #{conv_block.4} parent=63 // pred_fallthru
        _
    $region64: #{conv_block.4} parent=5 // pred_fallthru
      _
  $region6: #{conv_block.4} parent=0 // loop_footer
    %s19 = sadd.s32 1, %s15
  $region7: #{conv_block.4} parent=0 // loop_footer_branch
    %14 = sbr.rel target = $region3
  $region8: #{conv_block.4} parent=0 // loop_exit
    _

</llo_original>
